<compile_context>
chip_gen: v7x
topology: tpu7x:2x2x1
jax: 0.10.0
libtpu: 0.0.40
codegen_flags: <defaults>
</compile_context>

<pallas_src>
import jax
import jax.numpy as jnp
from jax.experimental import pallas as pl
from jax.experimental.pallas import tpu as pltpu


# --------------------------------------------------------------------------
# Banded "conv over width" weight construction (wrapper-side, runs under XLA)
# --------------------------------------------------------------------------
def _banded_rhs(wt, W, pad_out):
    """Block-banded RHS for one 3x3 conv, one band per kernel row dy.

    wt: (3, 3, Ci, Co) HWIO weights.
    Returns (3, (W+2)*Ci, Wcols*Co) where Wcols = W+2 (with zero border output
    columns baked in) if pad_out else W.  Column layout is width-major /
    channel-minor (lane-dense), so a padded input ROW maps directly to an
    output ROW:  out_row = sum_dy  in_row_shifted_by_dy @ rhs[dy].
    """
    _, _, Ci, Co = wt.shape
    Wp = W + 2
    Wcols = Wp if pad_out else W
    off = 1 if pad_out else 0
    w_idx = jnp.arange(W)
    bands = []
    for dy in range(3):
        rhs = jnp.zeros((Wp * Ci, Wcols * Co), wt.dtype)
        for dx in range(3):
            P = jnp.zeros((Wp, Wcols), wt.dtype).at[w_idx + dx, w_idx + off].set(1.0)
            rhs = rhs + jnp.kron(P, wt[dy, dx])
        bands.append(rhs)
    return jnp.stack(bands)


# --------------------------------------------------------------------------
# Kernel
# --------------------------------------------------------------------------
def _make_kernel(H, W, Cout):
    Hp, Wp = H + 2, W + 2
    WCo = W * Cout
    WpCo = Wp * Cout
    f32 = jnp.float32

    def kernel(x_ref, wp_ref, bp_ref, wrc_ref, brc_ref, wr2_ref, br2_ref,
               o_ref, ypad_ref):
        # x_ref    : (Nb, Hp, Wp*Cin)            bf16 pre-padded, lane-dense input
        # wp_ref   : (3, Wp*Cin, Wp*Cout)        bf16 banded 'process' weights (padded output cols)
        # wrc_ref  : (3, Wp*Cout, W*Cout+Wp*Cout) bf16 banded [CDC | Res1-padded] weights
        # wr2_ref  : (3, Wp*Cout, W*Cout)        bf16 banded Res2 weights
        # b*_ref   : (1, cols) f32 biases, pre-tiled over width (zero borders)
        # o_ref    : (Nb, H, W*Cout) f32 lane-dense output block (also the accumulator)
        # ypad_ref : (Nb, Hp, Wp*Cout) bf16 padded intermediate scratch
        Nb = x_ref.shape[0]
        M = Nb * H

        def banded_mm(src_ref, w_ref):
            Kw = src_ref.shape[-1]
            acc = None
            for dy in range(3):                                   # static unroll
                lhs = src_ref[:, dy:dy + H, :].reshape(M, Kw)     # full-width row slab
                t = jnp.dot(lhs, w_ref[dy], preferred_element_type=f32)
                acc = t if acc is None else acc + t
            return acc

        # ---- process: conv3x3 + bias; output already in padded-width layout
        # (zero border columns baked into the RHS and the bias).
        y1 = banded_mm(x_ref, wp_ref) + bp_ref[...]               # (M, Wp*Cout) f32

        # Zero only the top/bottom halo rows (re-done every step -> safe under
        # "parallel" batch sharding); border columns come from the RHS zeros.
        ypad_ref[:, 0:1, :] = jnp.zeros((Nb, 1, WpCo), ypad_ref.dtype)
        ypad_ref[:, Hp - 1:Hp, :] = jnp.zeros((Nb, 1, WpCo), ypad_ref.dtype)
        ypad_ref[:, 1:H + 1, :] = y1.reshape(Nb, H, WpCo).astype(ypad_ref.dtype)

        # ---- merged [CDC | Res-conv1] matmul on the process output.
        # Column order [cdc (W*Cout) | res1-padded (Wp*Cout)]: both slices
        # start on a 128-lane boundary (W*Cout is a multiple of 128 here).
        rc = banded_mm(ypad_ref, wrc_ref) + brc_ref[...]          # (M, W*Cout + Wp*Cout) f32
        cdc = rc[:, :WCo]
        r1 = jnp.maximum(rc[:, WCo:], 0.0)                        # ReLU(0)=0 keeps borders zero

        # Spill the CDC branch into the f32 output block (it is the accumulator).
        o_ref[...] = cdc.reshape(Nb, H, WCo)

        # ---- Res-conv1 back into the padded scratch, then Res-conv2 + accumulate.
        ypad_ref[:, 1:H + 1, :] = r1.reshape(Nb, H, WpCo).astype(ypad_ref.dtype)
        r2 = banded_mm(ypad_ref, wr2_ref) + br2_ref[...]          # (M, W*Cout) f32
        o_ref[...] = o_ref[...] + r2.reshape(Nb, H, WCo)

    return kernel


# --------------------------------------------------------------------------
# Wrapper
# --------------------------------------------------------------------------
def _pick_nb(N, per_img_bytes, budget_bytes=16 << 20, min_grid=4):
    """Largest divisor Nb of N such that the per-step footprint fits the VMEM
    budget AND the grid keeps >= min(N, min_grid) steps (2 TCs on v7x + DMA
    pipelining)."""
    nb = 1
    for cand in range(1, N + 1):
        if N % cand:
            continue
        if cand * per_img_bytes > budget_bytes:
            break
        if (N // cand) < min(N, min_grid):
            break
        nb = cand
    return nb


def edge_block_pallas(x_nchw, params):
    """x_nchw: (N, Cin, H, W) float32.  Returns (N, Cout, H, W) float32."""
    wp, bp, wr1, br1, wr2, br2, wcdc_eff = params
    N, Cin, H, W = x_nchw.shape
    Cout = wp.shape[-1]
    Hp, Wp = H + 2, W + 2
    bf = jnp.bfloat16
    f32 = jnp.float32

    # NCHW -> NHWC, zero-pad H and W by 1 px, flatten lane-dense, bf16 operands.
    x = jnp.transpose(x_nchw, (0, 2, 3, 1))
    x = jnp.pad(x, ((0, 0), (1, 1), (1, 1), (0, 0)))
    x = x.reshape(N, Hp, Wp * Cin).astype(bf)

    # Banded weights (dx shift + channel mixing + zero output borders live here).
    wp_b = _banded_rhs(wp, W, pad_out=True).astype(bf)             # (3, Wp*Cin,  Wp*Cout)
    wr1_b = _banded_rhs(wr1, W, pad_out=True)                      # (3, Wp*Cout, Wp*Cout)
    wcdc_b = _banded_rhs(wcdc_eff, W, pad_out=False)               # (3, Wp*Cout, W*Cout)
    wrc_b = jnp.concatenate([wcdc_b, wr1_b], axis=-1).astype(bf)   # (3, Wp*Cout, W*Cout+Wp*Cout)
    wr2_b = _banded_rhs(wr2, W, pad_out=False).astype(bf)          # (3, Wp*Cout, W*Cout)

    zc = jnp.zeros((Cout,), f32)
    bp_t = jnp.concatenate([zc, jnp.tile(bp.astype(f32), W), zc]).reshape(1, Wp * Cout)
    brc_t = jnp.concatenate([jnp.zeros((W * Cout,), f32),
                             zc, jnp.tile(br1.astype(f32), W), zc]
                            ).reshape(1, W * Cout + Wp * Cout)
    br2_t = jnp.tile(br2.astype(f32), W).reshape(1, W * Cout)

    # Per-image VMEM footprint: double-buffered x and out blocks + ypad scratch,
    # with a 2x margin for Mosaic (8,128) tile padding of the 18-row arrays.
    per_img = 2 * (2 * Hp * Wp * Cin * 2 + 2 * H * W * Cout * 4 + Hp * Wp * Cout * 2)
    Nb = _pick_nb(N, per_img)

    w_bytes = 2 * 2 * (wp_b.size + wrc_b.size + wr2_b.size) \
        + 2 * 4 * (bp_t.size + brc_t.size + br2_t.size)
    vmem_limit = int(min(64 << 20, max(32 << 20, 2 * (Nb * per_img + w_bytes))))

    m_rows = N * H
    flops = 2 * m_rows * 3 * ((Wp * Cin) * (Wp * Cout)
                              + (Wp * Cout) * (W * Cout + Wp * Cout)
                              + (Wp * Cout) * (W * Cout))
    bytes_accessed = int(x.size * 2
                         + (wp_b.size + wrc_b.size + wr2_b.size) * 2
                         + (bp_t.size + brc_t.size + br2_t.size) * 4
                         + N * H * W * Cout * 4)

    kernel = _make_kernel(H, W, Cout)

    out = pl.pallas_call(
        kernel,
        out_shape=jax.ShapeDtypeStruct((N, H, W * Cout), f32),
        grid_spec=pltpu.PrefetchScalarGridSpec(
            num_scalar_prefetch=0,
            grid=(N // Nb,),
            in_specs=[
                pl.BlockSpec((Nb, Hp, Wp * Cin), lambda n: (n, 0, 0)),
                pl.BlockSpec((3, Wp * Cin, Wp * Cout), lambda n: (0, 0, 0)),
                pl.BlockSpec((1, Wp * Cout), lambda n: (0, 0)),
                pl.BlockSpec((3, Wp * Cout, W * Cout + Wp * Cout), lambda n: (0, 0, 0)),
                pl.BlockSpec((1, W * Cout + Wp * Cout), lambda n: (0, 0)),
                pl.BlockSpec((3, Wp * Cout, W * Cout), lambda n: (0, 0, 0)),
                pl.BlockSpec((1, W * Cout), lambda n: (0, 0)),
            ],
            out_specs=pl.BlockSpec((Nb, H, W * Cout), lambda n: (n, 0, 0)),
            scratch_shapes=[pltpu.VMEM((Nb, Hp, Wp * Cout), bf)],
        ),
        compiler_params=pltpu.CompilerParams(
            dimension_semantics=("parallel",),
            vmem_limit_bytes=vmem_limit),
        cost_estimate=pl.CostEstimate(flops=flops, transcendentals=0,
                                      bytes_accessed=bytes_accessed),
    )(x, wp_b, bp_t, wrc_b, brc_t, wr2_b, br2_t)

    out = out.reshape(N, H, W, Cout)
    return jnp.transpose(out, (0, 3, 1, 2))  # back to NCHW


# --------------------------------------------------------------------------
# Pure-JAX reference (lax.conv), mirroring the kernel's bf16-operand /
# f32-accumulation dtype choreography.
# --------------------------------------------------------------------------
def edge_block_reference(x_nchw, params):
    wp, bp, wr1, br1, wr2, br2, wcdc_eff = params
    bf = jnp.bfloat16
    x = jnp.transpose(x_nchw, (0, 2, 3, 1)).astype(bf)  # NHWC
    dn = ("NHWC", "HWIO", "NHWC")

    def conv(v, w, b=None):
        y = jax.lax.conv_general_dilated(
            v.astype(bf), w.astype(bf), (1, 1), "SAME",
            dimension_numbers=dn, preferred_element_type=jnp.float32)
        if b is not None:
            y = y + b.reshape(1, 1, 1, -1).astype(jnp.float32)
        return y

    y1 = conv(x, wp, bp)                                     # f32
    r1 = jnp.maximum(conv(y1.astype(bf), wr1, br1), 0.0)     # f32
    r2 = conv(r1.astype(bf), wr2, br2)                       # f32
    c = conv(y1.astype(bf), wcdc_eff)                        # f32 (CDC, bias-free)
    return jnp.transpose(r2 + c, (0, 3, 1, 2))


def make_params(key, cin, cout, theta=0.8):
    ks = jax.random.split(key, 7)
    s = 0.1
    wp = s * jax.random.normal(ks[0], (3, 3, cin, cout), jnp.float32)
    bp = s * jax.random.normal(ks[1], (cout,), jnp.float32)
    wr1 = s * jax.random.normal(ks[2], (3, 3, cout, cout), jnp.float32)
    br1 = s * jax.random.normal(ks[3], (cout,), jnp.float32)
    wr2 = s * jax.random.normal(ks[4], (3, 3, cout, cout), jnp.float32)
    br2 = s * jax.random.normal(ks[5], (cout,), jnp.float32)
    # CDC weight (applied to the 'process' output, so its input channels = cout),
    # folded into an equivalent plain 3x3 conv: center tap -= theta * sum over taps.
    wcdc = s * jax.random.normal(ks[6], (3, 3, cout, cout), jnp.float32)
    wcdc_eff = wcdc.at[1, 1].add(-theta * wcdc.sum(axis=(0, 1)))
    return (wp, bp, wr1, br1, wr2, br2, wcdc_eff)


if __name__ == "__main__":
    key = jax.random.PRNGKey(0)
    kx, kp = jax.random.split(key)

    N, Cin, Cout, H, W = 2, 16, 16, 16, 16
    x = jax.random.normal(kx, (N, Cin, H, W), jnp.float32)
    params = make_params(kp, Cin, Cout)

    out = jax.block_until_ready(edge_block_pallas(x, params))
    ref = jax.block_until_ready(edge_block_reference(x, params))

    assert out.shape == (N, Cout, H, W)
    err = float(jnp.max(jnp.abs(out - ref)))
    assert jnp.allclose(out, ref, atol=2e-2, rtol=2e-2), err
    print("KERNEL_OK")
</pallas_src>

<mosaic_0001>
module attributes {stable_mosaic.version = 11 : i64} {
  func.func @kernel(%arg0: i32, %arg1: memref<1x18x288xbf16, #tpu.memory_space<vmem>>, %arg2: memref<3x288x288xbf16, #tpu.memory_space<vmem>>, %arg3: memref<1x288xf32, #tpu.memory_space<vmem>>, %arg4: memref<3x288x544xbf16, #tpu.memory_space<vmem>>, %arg5: memref<1x544xf32, #tpu.memory_space<vmem>>, %arg6: memref<3x288x256xbf16, #tpu.memory_space<vmem>>, %arg7: memref<1x256xf32, #tpu.memory_space<vmem>>, %arg8: memref<1x16x256xf32, #tpu.memory_space<vmem>>, %arg9: memref<1x18x288xbf16, #tpu.memory_space<vmem>>) attributes {dimension_semantics = [#tpu.dimension_semantics<parallel>], iteration_bounds = array<i64: 2>, scalar_prefetch = 0 : i64, scratch_operands = 1 : i64, tpu.core_type = #tpu.core_type<tc>, window_params = [{transform_indices = @transform_0, window_bounds = array<i64: 1, 18, 288>}, {pipeline_mode = #tpu.pipeline_mode<synchronous>, transform_indices = @transform_1, window_bounds = array<i64: 3, 288, 288>}, {pipeline_mode = #tpu.pipeline_mode<synchronous>, transform_indices = @transform_2, window_bounds = array<i64: 1, 288>}, {pipeline_mode = #tpu.pipeline_mode<synchronous>, transform_indices = @transform_3, window_bounds = array<i64: 3, 288, 544>}, {pipeline_mode = #tpu.pipeline_mode<synchronous>, transform_indices = @transform_4, window_bounds = array<i64: 1, 544>}, {pipeline_mode = #tpu.pipeline_mode<synchronous>, transform_indices = @transform_5, window_bounds = array<i64: 3, 288, 256>}, {pipeline_mode = #tpu.pipeline_mode<synchronous>, transform_indices = @transform_6, window_bounds = array<i64: 1, 256>}, {transform_indices = @transform_7, window_bounds = array<i64: 1, 16, 256>}]} {
    %c0 = arith.constant 0 : index
    %c0_0 = arith.constant 0 : index
    %c0_1 = arith.constant 0 : index
    %0 = vector.load %arg1[%c0, %c0_0, %c0_1] : memref<1x18x288xbf16, #tpu.memory_space<vmem>>, vector<1x16x288xbf16>
    %1 = vector.shape_cast %0 : vector<1x16x288xbf16> to vector<16x288xbf16>
    %c0_2 = arith.constant 0 : index
    %c0_3 = arith.constant 0 : index
    %c0_4 = arith.constant 0 : index
    %2 = vector.load %arg2[%c0_2, %c0_3, %c0_4] : memref<3x288x288xbf16, #tpu.memory_space<vmem>>, vector<1x288x288xbf16>
    %3 = vector.shape_cast %2 : vector<1x288x288xbf16> to vector<288x288xbf16>
    %cst = arith.constant dense<0.000000e+00> : vector<16x288xf32>
    %4 = tpu.matmul %1, %3, %cst {dimension_numbers = #tpu.dot_dimension_numbers<[1], [0], [0], [1], [0, 0, 1, 1], [], []>} : vector<16x288xbf16>, vector<288x288xbf16>, vector<16x288xf32> -> vector<16x288xf32>
    %c0_5 = arith.constant 0 : index
    %c1 = arith.constant 1 : index
    %c0_6 = arith.constant 0 : index
    %5 = vector.load %arg1[%c0_5, %c1, %c0_6] : memref<1x18x288xbf16, #tpu.memory_space<vmem>>, vector<1x16x288xbf16>
    %6 = vector.shape_cast %5 : vector<1x16x288xbf16> to vector<16x288xbf16>
    %c1_7 = arith.constant 1 : index
    %c0_8 = arith.constant 0 : index
    %c0_9 = arith.constant 0 : index
    %7 = vector.load %arg2[%c1_7, %c0_8, %c0_9] : memref<3x288x288xbf16, #tpu.memory_space<vmem>>, vector<1x288x288xbf16>
    %8 = vector.shape_cast %7 : vector<1x288x288xbf16> to vector<288x288xbf16>
    %cst_10 = arith.constant dense<0.000000e+00> : vector<16x288xf32>
    %9 = tpu.matmul %6, %8, %cst_10 {dimension_numbers = #tpu.dot_dimension_numbers<[1], [0], [0], [1], [0, 0, 1, 1], [], []>} : vector<16x288xbf16>, vector<288x288xbf16>, vector<16x288xf32> -> vector<16x288xf32>
    %10 = arith.addf %4, %9 : vector<16x288xf32>
    %c0_11 = arith.constant 0 : index
    %c2 = arith.constant 2 : index
    %c0_12 = arith.constant 0 : index
    %11 = vector.load %arg1[%c0_11, %c2, %c0_12] : memref<1x18x288xbf16, #tpu.memory_space<vmem>>, vector<1x16x288xbf16>
    %12 = vector.shape_cast %11 : vector<1x16x288xbf16> to vector<16x288xbf16>
    %c2_13 = arith.constant 2 : index
    %c0_14 = arith.constant 0 : index
    %c0_15 = arith.constant 0 : index
    %13 = vector.load %arg2[%c2_13, %c0_14, %c0_15] : memref<3x288x288xbf16, #tpu.memory_space<vmem>>, vector<1x288x288xbf16>
    %14 = vector.shape_cast %13 : vector<1x288x288xbf16> to vector<288x288xbf16>
    %cst_16 = arith.constant dense<0.000000e+00> : vector<16x288xf32>
    %15 = tpu.matmul %12, %14, %cst_16 {dimension_numbers = #tpu.dot_dimension_numbers<[1], [0], [0], [1], [0, 0, 1, 1], [], []>} : vector<16x288xbf16>, vector<288x288xbf16>, vector<16x288xf32> -> vector<16x288xf32>
    %16 = arith.addf %10, %15 : vector<16x288xf32>
    %c0_17 = arith.constant 0 : index
    %c0_18 = arith.constant 0 : index
    %17 = vector.load %arg3[%c0_17, %c0_18] : memref<1x288xf32, #tpu.memory_space<vmem>>, vector<1x288xf32>
    %18 = vector.broadcast %17 : vector<1x288xf32> to vector<16x288xf32>
    %19 = arith.addf %16, %18 : vector<16x288xf32>
    %cst_19 = arith.constant 0.000000e+00 : bf16
    %20 = vector.broadcast %cst_19 : bf16 to vector<1x1x288xbf16>
    %c0_20 = arith.constant 0 : index
    %c0_21 = arith.constant 0 : index
    %c0_22 = arith.constant 0 : index
    %21 = vector.load %arg9[%c0_20, %c0_21, %c0_22] : memref<1x18x288xbf16, #tpu.memory_space<vmem>>, vector<1x1x288xbf16>
    tpu.vector_store %arg9[%c0_20, %c0_21, %c0_22], %20 {strides = array<i32>} : memref<1x18x288xbf16, #tpu.memory_space<vmem>>, vector<1x1x288xbf16>,
    %cst_23 = arith.constant 0.000000e+00 : bf16
    %22 = vector.broadcast %cst_23 : bf16 to vector<1x1x288xbf16>
    %c0_24 = arith.constant 0 : index
    %c17 = arith.constant 17 : index
    %c0_25 = arith.constant 0 : index
    %23 = vector.load %arg9[%c0_24, %c17, %c0_25] : memref<1x18x288xbf16, #tpu.memory_space<vmem>>, vector<1x1x288xbf16>
    tpu.vector_store %arg9[%c0_24, %c17, %c0_25], %22 {strides = array<i32>} : memref<1x18x288xbf16, #tpu.memory_space<vmem>>, vector<1x1x288xbf16>,
    %24 = vector.shape_cast %19 : vector<16x288xf32> to vector<1x16x288xf32>
    %25 = arith.truncf %24 : vector<1x16x288xf32> to vector<1x16x288xbf16>
    %c0_26 = arith.constant 0 : index
    %c1_27 = arith.constant 1 : index
    %c0_28 = arith.constant 0 : index
    %26 = vector.load %arg9[%c0_26, %c1_27, %c0_28] : memref<1x18x288xbf16, #tpu.memory_space<vmem>>, vector<1x16x288xbf16>
    tpu.vector_store %arg9[%c0_26, %c1_27, %c0_28], %25 {strides = array<i32>} : memref<1x18x288xbf16, #tpu.memory_space<vmem>>, vector<1x16x288xbf16>,
    %c0_29 = arith.constant 0 : index
    %c0_30 = arith.constant 0 : index
    %c0_31 = arith.constant 0 : index
    %27 = vector.load %arg9[%c0_29, %c0_30, %c0_31] : memref<1x18x288xbf16, #tpu.memory_space<vmem>>, vector<1x16x288xbf16>
    %28 = vector.shape_cast %27 : vector<1x16x288xbf16> to vector<16x288xbf16>
    %c0_32 = arith.constant 0 : index
    %c0_33 = arith.constant 0 : index
    %c0_34 = arith.constant 0 : index
    %29 = vector.load %arg4[%c0_32, %c0_33, %c0_34] : memref<3x288x544xbf16, #tpu.memory_space<vmem>>, vector<1x288x544xbf16>
    %30 = vector.shape_cast %29 : vector<1x288x544xbf16> to vector<288x544xbf16>
    %cst_35 = arith.constant dense<0.000000e+00> : vector<16x544xf32>
    %31 = tpu.matmul %28, %30, %cst_35 {dimension_numbers = #tpu.dot_dimension_numbers<[1], [0], [0], [1], [0, 0, 1, 1], [], []>} : vector<16x288xbf16>, vector<288x544xbf16>, vector<16x544xf32> -> vector<16x544xf32>
    %c0_36 = arith.constant 0 : index
    %c1_37 = arith.constant 1 : index
    %c0_38 = arith.constant 0 : index
    %32 = vector.load %arg9[%c0_36, %c1_37, %c0_38] : memref<1x18x288xbf16, #tpu.memory_space<vmem>>, vector<1x16x288xbf16>
    %33 = vector.shape_cast %32 : vector<1x16x288xbf16> to vector<16x288xbf16>
    %c1_39 = arith.constant 1 : index
    %c0_40 = arith.constant 0 : index
    %c0_41 = arith.constant 0 : index
    %34 = vector.load %arg4[%c1_39, %c0_40, %c0_41] : memref<3x288x544xbf16, #tpu.memory_space<vmem>>, vector<1x288x544xbf16>
    %35 = vector.shape_cast %34 : vector<1x288x544xbf16> to vector<288x544xbf16>
    %cst_42 = arith.constant dense<0.000000e+00> : vector<16x544xf32>
    %36 = tpu.matmul %33, %35, %cst_42 {dimension_numbers = #tpu.dot_dimension_numbers<[1], [0], [0], [1], [0, 0, 1, 1], [], []>} : vector<16x288xbf16>, vector<288x544xbf16>, vector<16x544xf32> -> vector<16x544xf32>
    %37 = arith.addf %31, %36 : vector<16x544xf32>
    %c0_43 = arith.constant 0 : index
    %c2_44 = arith.constant 2 : index
    %c0_45 = arith.constant 0 : index
    %38 = vector.load %arg9[%c0_43, %c2_44, %c0_45] : memref<1x18x288xbf16, #tpu.memory_space<vmem>>, vector<1x16x288xbf16>
    %39 = vector.shape_cast %38 : vector<1x16x288xbf16> to vector<16x288xbf16>
    %c2_46 = arith.constant 2 : index
    %c0_47 = arith.constant 0 : index
    %c0_48 = arith.constant 0 : index
    %40 = vector.load %arg4[%c2_46, %c0_47, %c0_48] : memref<3x288x544xbf16, #tpu.memory_space<vmem>>, vector<1x288x544xbf16>
    %41 = vector.shape_cast %40 : vector<1x288x544xbf16> to vector<288x544xbf16>
    %cst_49 = arith.constant dense<0.000000e+00> : vector<16x544xf32>
    %42 = tpu.matmul %39, %41, %cst_49 {dimension_numbers = #tpu.dot_dimension_numbers<[1], [0], [0], [1], [0, 0, 1, 1], [], []>} : vector<16x288xbf16>, vector<288x544xbf16>, vector<16x544xf32> -> vector<16x544xf32>
    %43 = arith.addf %37, %42 : vector<16x544xf32>
    %c0_50 = arith.constant 0 : index
    %c0_51 = arith.constant 0 : index
    %44 = vector.load %arg5[%c0_50, %c0_51] : memref<1x544xf32, #tpu.memory_space<vmem>>, vector<1x544xf32>
    %45 = vector.broadcast %44 : vector<1x544xf32> to vector<16x544xf32>
    %46 = arith.addf %43, %45 : vector<16x544xf32>
    %47 = vector.extract_strided_slice %46 {offsets = [0, 0], sizes = [16, 256], strides = [1, 1]} : vector<16x544xf32> to vector<16x256xf32>
    %48 = vector.extract_strided_slice %46 {offsets = [0, 256], sizes = [16, 288], strides = [1, 1]} : vector<16x544xf32> to vector<16x288xf32>
    %cst_52 = arith.constant 0.000000e+00 : f32
    %49 = vector.broadcast %cst_52 : f32 to vector<16x288xf32>
    %50 = arith.maximumf %48, %49 : vector<16x288xf32>
    %51 = vector.shape_cast %47 : vector<16x256xf32> to vector<1x16x256xf32>
    %c0_53 = arith.constant 0 : index
    %c0_54 = arith.constant 0 : index
    %c0_55 = arith.constant 0 : index
    %52 = vector.load %arg8[%c0_53, %c0_54, %c0_55] : memref<1x16x256xf32, #tpu.memory_space<vmem>>, vector<1x16x256xf32>
    tpu.vector_store %arg8[%c0_53, %c0_54, %c0_55], %51 {strides = array<i32>} : memref<1x16x256xf32, #tpu.memory_space<vmem>>, vector<1x16x256xf32>,
    %53 = vector.shape_cast %50 : vector<16x288xf32> to vector<1x16x288xf32>
    %54 = arith.truncf %53 : vector<1x16x288xf32> to vector<1x16x288xbf16>
    %c0_56 = arith.constant 0 : index
    %c1_57 = arith.constant 1 : index
    %c0_58 = arith.constant 0 : index
    %55 = vector.load %arg9[%c0_56, %c1_57, %c0_58] : memref<1x18x288xbf16, #tpu.memory_space<vmem>>, vector<1x16x288xbf16>
    tpu.vector_store %arg9[%c0_56, %c1_57, %c0_58], %54 {strides = array<i32>} : memref<1x18x288xbf16, #tpu.memory_space<vmem>>, vector<1x16x288xbf16>,
    %c0_59 = arith.constant 0 : index
    %c0_60 = arith.constant 0 : index
    %c0_61 = arith.constant 0 : index
    %56 = vector.load %arg9[%c0_59, %c0_60, %c0_61] : memref<1x18x288xbf16, #tpu.memory_space<vmem>>, vector<1x16x288xbf16>
    %57 = vector.shape_cast %56 : vector<1x16x288xbf16> to vector<16x288xbf16>
    %c0_62 = arith.constant 0 : index
    %c0_63 = arith.constant 0 : index
    %c0_64 = arith.constant 0 : index
    %58 = vector.load %arg6[%c0_62, %c0_63, %c0_64] : memref<3x288x256xbf16, #tpu.memory_space<vmem>>, vector<1x288x256xbf16>
    %59 = vector.shape_cast %58 : vector<1x288x256xbf16> to vector<288x256xbf16>
    %cst_65 = arith.constant dense<0.000000e+00> : vector<16x256xf32>
    %60 = tpu.matmul %57, %59, %cst_65 {dimension_numbers = #tpu.dot_dimension_numbers<[1], [0], [0], [1], [0, 0, 1, 1], [], []>} : vector<16x288xbf16>, vector<288x256xbf16>, vector<16x256xf32> -> vector<16x256xf32>
    %c0_66 = arith.constant 0 : index
    %c1_67 = arith.constant 1 : index
    %c0_68 = arith.constant 0 : index
    %61 = vector.load %arg9[%c0_66, %c1_67, %c0_68] : memref<1x18x288xbf16, #tpu.memory_space<vmem>>, vector<1x16x288xbf16>
    %62 = vector.shape_cast %61 : vector<1x16x288xbf16> to vector<16x288xbf16>
    %c1_69 = arith.constant 1 : index
    %c0_70 = arith.constant 0 : index
    %c0_71 = arith.constant 0 : index
    %63 = vector.load %arg6[%c1_69, %c0_70, %c0_71] : memref<3x288x256xbf16, #tpu.memory_space<vmem>>, vector<1x288x256xbf16>
    %64 = vector.shape_cast %63 : vector<1x288x256xbf16> to vector<288x256xbf16>
    %cst_72 = arith.constant dense<0.000000e+00> : vector<16x256xf32>
    %65 = tpu.matmul %62, %64, %cst_72 {dimension_numbers = #tpu.dot_dimension_numbers<[1], [0], [0], [1], [0, 0, 1, 1], [], []>} : vector<16x288xbf16>, vector<288x256xbf16>, vector<16x256xf32> -> vector<16x256xf32>
    %66 = arith.addf %60, %65 : vector<16x256xf32>
    %c0_73 = arith.constant 0 : index
    %c2_74 = arith.constant 2 : index
    %c0_75 = arith.constant 0 : index
    %67 = vector.load %arg9[%c0_73, %c2_74, %c0_75] : memref<1x18x288xbf16, #tpu.memory_space<vmem>>, vector<1x16x288xbf16>
    %68 = vector.shape_cast %67 : vector<1x16x288xbf16> to vector<16x288xbf16>
    %c2_76 = arith.constant 2 : index
    %c0_77 = arith.constant 0 : index
    %c0_78 = arith.constant 0 : index
    %69 = vector.load %arg6[%c2_76, %c0_77, %c0_78] : memref<3x288x256xbf16, #tpu.memory_space<vmem>>, vector<1x288x256xbf16>
    %70 = vector.shape_cast %69 : vector<1x288x256xbf16> to vector<288x256xbf16>
    %cst_79 = arith.constant dense<0.000000e+00> : vector<16x256xf32>
    %71 = tpu.matmul %68, %70, %cst_79 {dimension_numbers = #tpu.dot_dimension_numbers<[1], [0], [0], [1], [0, 0, 1, 1], [], []>} : vector<16x288xbf16>, vector<288x256xbf16>, vector<16x256xf32> -> vector<16x256xf32>
    %72 = arith.addf %66, %71 : vector<16x256xf32>
    %c0_80 = arith.constant 0 : index
    %c0_81 = arith.constant 0 : index
    %73 = vector.load %arg7[%c0_80, %c0_81] : memref<1x256xf32, #tpu.memory_space<vmem>>, vector<1x256xf32>
    %74 = vector.broadcast %73 : vector<1x256xf32> to vector<16x256xf32>
    %75 = arith.addf %72, %74 : vector<16x256xf32>
    %c0_82 = arith.constant 0 : index
    %c0_83 = arith.constant 0 : index
    %c0_84 = arith.constant 0 : index
    %76 = vector.load %arg8[%c0_82, %c0_83, %c0_84] : memref<1x16x256xf32, #tpu.memory_space<vmem>>, vector<1x16x256xf32>
    %77 = vector.shape_cast %75 : vector<16x256xf32> to vector<1x16x256xf32>
    %78 = arith.addf %76, %77 : vector<1x16x256xf32>
    %c0_85 = arith.constant 0 : index
    %c0_86 = arith.constant 0 : index
    %c0_87 = arith.constant 0 : index
    %79 = vector.load %arg8[%c0_85, %c0_86, %c0_87] : memref<1x16x256xf32, #tpu.memory_space<vmem>>, vector<1x16x256xf32>
    tpu.vector_store %arg8[%c0_85, %c0_86, %c0_87], %78 {strides = array<i32>} : memref<1x16x256xf32, #tpu.memory_space<vmem>>, vector<1x16x256xf32>,
    return
  }
  func.func @transform_0(%arg0: i32) -> (i32, i32, i32) {
    %c0_i32 = arith.constant 0 : i32
    %c0_i32_0 = arith.constant 0 : i32
    %c0_i32_1 = arith.constant 0 : i32
    return %arg0, %c0_i32, %c0_i32_0 : i32, i32, i32
  }
  func.func @transform_1(%arg0: i32) -> (i32, i32, i32) {
    %c0_i32 = arith.constant 0 : i32
    %c0_i32_0 = arith.constant 0 : i32
    %c0_i32_1 = arith.constant 0 : i32
    %c0_i32_2 = arith.constant 0 : i32
    return %c0_i32, %c0_i32_0, %c0_i32_1 : i32, i32, i32
  }
  func.func @transform_2(%arg0: i32) -> (i32, i32) {
    %c0_i32 = arith.constant 0 : i32
    %c0_i32_0 = arith.constant 0 : i32
    %c0_i32_1 = arith.constant 0 : i32
    return %c0_i32, %c0_i32_0 : i32, i32
  }
  func.func @transform_3(%arg0: i32) -> (i32, i32, i32) {
    %c0_i32 = arith.constant 0 : i32
    %c0_i32_0 = arith.constant 0 : i32
    %c0_i32_1 = arith.constant 0 : i32
    %c0_i32_2 = arith.constant 0 : i32
    return %c0_i32, %c0_i32_0, %c0_i32_1 : i32, i32, i32
  }
  func.func @transform_4(%arg0: i32) -> (i32, i32) {
    %c0_i32 = arith.constant 0 : i32
    %c0_i32_0 = arith.constant 0 : i32
    %c0_i32_1 = arith.constant 0 : i32
    return %c0_i32, %c0_i32_0 : i32, i32
  }
  func.func @transform_5(%arg0: i32) -> (i32, i32, i32) {
    %c0_i32 = arith.constant 0 : i32
    %c0_i32_0 = arith.constant 0 : i32
    %c0_i32_1 = arith.constant 0 : i32
    %c0_i32_2 = arith.constant 0 : i32
    return %c0_i32, %c0_i32_0, %c0_i32_1 : i32, i32, i32
  }
  func.func @transform_6(%arg0: i32) -> (i32, i32) {
    %c0_i32 = arith.constant 0 : i32
    %c0_i32_0 = arith.constant 0 : i32
    %c0_i32_1 = arith.constant 0 : i32
    return %c0_i32, %c0_i32_0 : i32, i32
  }
  func.func @transform_7(%arg0: i32) -> (i32, i32, i32) {
    %c0_i32 = arith.constant 0 : i32
    %c0_i32_0 = arith.constant 0 : i32
    %c0_i32_1 = arith.constant 0 : i32
    return %arg0, %c0_i32, %c0_i32_0 : i32, i32, i32
  }
}

</mosaic_0001>

<llo_original>
// kernel: tpu_custom_call.1
$region0: #{tpu_custom_call.1}
  #allocation0 [shape = 'u32[]', space=smem, size = 0x4, offset = 0x4, fixed_abs, tag = 'smem constant byte address 0x4 - core index']
  #allocation1 [shape = 'u32[144,128]{1,0:T(1,128)}', space=vmem, size = 0x12000, scoped, tag = 'internal scratch']
  #allocation2 [shape = 'bf16[1,18,288]{2,1,0:T(8,128)(2,1)}', space=vmem, size = 0x4800, scoped, tag = 'scratch operand']
  %s0 = inlined_call_operand.vmem [shape: bf16[2,18,288], index: 0, kind: input, shape index: {}]
  %s1 = inlined_call_operand.hbm [shape: bf16[3,288,288], index: 1, kind: input, shape index: {}]
  %s2 = inlined_call_operand.hbm [shape: f32[1,288], index: 2, kind: input, shape index: {}]
  %s3 = inlined_call_operand.hbm [shape: bf16[3,288,544], index: 3, kind: input, shape index: {}]
  %s4 = inlined_call_operand.hbm [shape: f32[1,544], index: 4, kind: input, shape index: {}]
  %s5 = inlined_call_operand.hbm [shape: bf16[3,288,256], index: 5, kind: input, shape index: {}]
  %s6 = inlined_call_operand.hbm [shape: f32[1,256], index: 6, kind: input, shape index: {}]
  %s7 = inlined_call_operand.hbm [shape: f32[2,16,256], index: 7, kind: output, shape index: {}]
  %s8 = sld [smem:[#allocation0]]
  $region85: #{tpu_custom_call.1} parent=0
    _
  %s10 = ssub.s32 1, %s8
  %s11 = scalar_select 0, %s10, %s8
  $region1: #{tpu_custom_call.1} parent=0
    #allocation3 [shape = 'u8[663552]{0}', space=vmem, size = 0xa2000, scoped, tag = 'input window, operand 1, single buffered']
    #allocation4 [shape = 's32[2]{0}', space=sflag, size = 0x8, scoped, tag = 'scoped memory for tpu_custom_call.1']
    #allocation5 [shape = 's32[2]{0}', space=sflag, size = 0x8, scoped, tag = 'scoped memory for tpu_custom_call.1']
    #allocation6 [shape = 'u8[1536]{0}', space=vmem, size = 0x800, scoped, tag = 'input window, operand 2, single buffered']
    #allocation7 [shape = 's32[1]{0}', space=sflag, size = 0x4, scoped, tag = 'scoped memory for tpu_custom_call.1']
    #allocation8 [shape = 'u8[1105920]{0}', space=vmem, size = 0x10e000, scoped, tag = 'input window, operand 3, single buffered']
    #allocation9 [shape = 'u8[2560]{0}', space=vmem, size = 0xc00, scoped, tag = 'input window, operand 4, single buffered']
    #allocation10 [shape = 's32[1]{0}', space=sflag, size = 0x4, scoped, tag = 'scoped memory for tpu_custom_call.1']
    #allocation11 [shape = 'u8[442368]{0}', space=vmem, size = 0x6c000, scoped, tag = 'input window, operand 5, single buffered']
    #allocation12 [shape = 'u8[1024]{0}', space=vmem, size = 0x400, scoped, tag = 'input window, operand 6, single buffered']
    #allocation13 [shape = 's32[1]{0}', space=sflag, size = 0x4, scoped, tag = 'scoped memory for tpu_custom_call.1']
    #allocation14 [shape = 'u8[32768]{0}', space=vmem, size = 0x8000, scoped, tag = 'output window, operand 0']
    %12 = vsyncpa [#allocation4], 0
    %13 = vsyncpa [#allocation7], 0
    %14 = vsyncpa [#allocation10], 0
    %15 = vsyncpa [#allocation13], 0
    %16 = vsyncpa [#allocation5], 0
    %s17 = scalar_lea.sflag [#allocation5], 1
    %18 = vsyncpa %s17, 0
    loop: start=0, step=1, limit=4
    $region2: #{tpu_custom_call.1} parent=1 // loop_pre_header
      _
    $region3: #{tpu_custom_call.1} parent=1 // loop_header
      %s20 = sphi 0, %s24
      %p21 = scmp.ge.s32.totalorder %s20, 4
      %s30 = sphi 0, %s32
      %s33 = sphi 0, %s30
      %s34 = sphi 0, %s33
      %s50 = sphi 0, %s34
      %s54 = sphi 0, %s54
      %s56 = sphi 0, %s54
      %s57 = sphi 0, %s56
      %s71 = sphi 0, %s57
      %s75 = sphi 0, %s75
      %s77 = sphi 0, %s75
      %s78 = sphi 0, %s77
      %s92 = sphi 0, %s78
      %s96 = sphi 0, %s96
      %s98 = sphi 0, %s96
      %s99 = sphi 0, %s98
      %s113 = sphi 0, %s99
      %s117 = sphi 0, %s117
      %s119 = sphi 0, %s117
      %s120 = sphi 0, %s119
      %s134 = sphi 0, %s120
      %s138 = sphi 0, %s138
      %s140 = sphi 0, %s138
      %s141 = sphi 0, %s140
      %s155 = sphi 0, %s141
      %s159 = sphi 0, %s159
      %s161 = sphi 0, %s159
      %s162 = sphi 0, %s161
      %s176 = sphi 0, %s162
      %s182 = sphi 0, %s184
      %s185 = sphi 0, %s182
      %s186 = sphi 0, %s185
      %s202 = sphi 0, %s186
    $region4: #{tpu_custom_call.1} parent=1 // loop_header_branch
      %23 = sbr.rel (%p21) target = $region8
    $region5: #{tpu_custom_call.1} parent=1 // loop_body
      %s25 = ssub.s32 %s20, 1
      %s26 = ssub.s32 %s20, 2
      %s27 = sadd.s32 %s20, 1
      %s28 = ssub.s32 %s20, %s27
      %p29 = scmp.eq.s32.totalorder %s28, 0
      %s31 = sadd.s32 %s30, 1
      %s32 = scalar_select %p29, %s30, %s31
      %p35 = pneg %p29
      %p36 = scmp.eq.s32.totalorder %s20, 1
      %p37 = por %p35, %p36
      %p38 = scmp.ne.s32.totalorder %s30, %s33
      %p39 = scmp.eq.s32.totalorder %s20, 0
      %p40 = por %p38, %p39
      %p41 = scmp.ne.s32.totalorder %s30, %s33
      %p42 = scmp.eq.s32.totalorder %s25, 1
      %p43 = por %p41, %p42
      %p44 = scmp.ne.s32.totalorder %s33, %s34
      %p45 = scmp.eq.s32.totalorder %s25, 0
      %p46 = por %p44, %p45
      %p47 = scmp.ne.s32.totalorder %s33, %s34
      %p48 = scmp.eq.s32.totalorder %s26, 1
      %p49 = por %p47, %p48
      %p51 = scmp.ne.s32.totalorder %s34, %s50
      %p52 = scmp.eq.s32.totalorder %s26, 0
      %p53 = por %p51, %p52
      %s55 = sadd.s32 %s54, 1
      %p58 = scmp.eq.s32.totalorder %s20, 1
      %p59 = scmp.ne.s32.totalorder %s54, %s56
      %p60 = scmp.eq.s32.totalorder %s20, 0
      %p61 = por %p59, %p60
      %p62 = scmp.ne.s32.totalorder %s54, %s56
      %p63 = scmp.eq.s32.totalorder %s25, 1
      %p64 = por %p62, %p63
      %p65 = scmp.ne.s32.totalorder %s56, %s57
      %p66 = scmp.eq.s32.totalorder %s25, 0
      %p67 = por %p65, %p66
      %p68 = scmp.ne.s32.totalorder %s56, %s57
      %p69 = scmp.eq.s32.totalorder %s26, 1
      %p70 = por %p68, %p69
      %p72 = scmp.ne.s32.totalorder %s57, %s71
      %p73 = scmp.eq.s32.totalorder %s26, 0
      %p74 = por %p72, %p73
      %s76 = sadd.s32 %s75, 1
      %p79 = scmp.eq.s32.totalorder %s20, 1
      %p80 = scmp.ne.s32.totalorder %s75, %s77
      %p81 = scmp.eq.s32.totalorder %s20, 0
      %p82 = por %p80, %p81
      %p83 = scmp.ne.s32.totalorder %s75, %s77
      %p84 = scmp.eq.s32.totalorder %s25, 1
      %p85 = por %p83, %p84
      %p86 = scmp.ne.s32.totalorder %s77, %s78
      %p87 = scmp.eq.s32.totalorder %s25, 0
      %p88 = por %p86, %p87
      %p89 = scmp.ne.s32.totalorder %s77, %s78
      %p90 = scmp.eq.s32.totalorder %s26, 1
      %p91 = por %p89, %p90
      %p93 = scmp.ne.s32.totalorder %s78, %s92
      %p94 = scmp.eq.s32.totalorder %s26, 0
      %p95 = por %p93, %p94
      %s97 = sadd.s32 %s96, 1
      %p100 = scmp.eq.s32.totalorder %s20, 1
      %p101 = scmp.ne.s32.totalorder %s96, %s98
      %p102 = scmp.eq.s32.totalorder %s20, 0
      %p103 = por %p101, %p102
      %p104 = scmp.ne.s32.totalorder %s96, %s98
      %p105 = scmp.eq.s32.totalorder %s25, 1
      %p106 = por %p104, %p105
      %p107 = scmp.ne.s32.totalorder %s98, %s99
      %p108 = scmp.eq.s32.totalorder %s25, 0
      %p109 = por %p107, %p108
      %p110 = scmp.ne.s32.totalorder %s98, %s99
      %p111 = scmp.eq.s32.totalorder %s26, 1
      %p112 = por %p110, %p111
      %p114 = scmp.ne.s32.totalorder %s99, %s113
      %p115 = scmp.eq.s32.totalorder %s26, 0
      %p116 = por %p114, %p115
      %s118 = sadd.s32 %s117, 1
      %p121 = scmp.eq.s32.totalorder %s20, 1
      %p122 = scmp.ne.s32.totalorder %s117, %s119
      %p123 = scmp.eq.s32.totalorder %s20, 0
      %p124 = por %p122, %p123
      %p125 = scmp.ne.s32.totalorder %s117, %s119
      %p126 = scmp.eq.s32.totalorder %s25, 1
      %p127 = por %p125, %p126
      %p128 = scmp.ne.s32.totalorder %s119, %s120
      %p129 = scmp.eq.s32.totalorder %s25, 0
      %p130 = por %p128, %p129
      %p131 = scmp.ne.s32.totalorder %s119, %s120
      %p132 = scmp.eq.s32.totalorder %s26, 1
      %p133 = por %p131, %p132
      %p135 = scmp.ne.s32.totalorder %s120, %s134
      %p136 = scmp.eq.s32.totalorder %s26, 0
      %p137 = por %p135, %p136
      %s139 = sadd.s32 %s138, 1
      %p142 = scmp.eq.s32.totalorder %s20, 1
      %p143 = scmp.ne.s32.totalorder %s138, %s140
      %p144 = scmp.eq.s32.totalorder %s20, 0
      %p145 = por %p143, %p144
      %p146 = scmp.ne.s32.totalorder %s138, %s140
      %p147 = scmp.eq.s32.totalorder %s25, 1
      %p148 = por %p146, %p147
      %p149 = scmp.ne.s32.totalorder %s140, %s141
      %p150 = scmp.eq.s32.totalorder %s25, 0
      %p151 = por %p149, %p150
      %p152 = scmp.ne.s32.totalorder %s140, %s141
      %p153 = scmp.eq.s32.totalorder %s26, 1
      %p154 = por %p152, %p153
      %p156 = scmp.ne.s32.totalorder %s141, %s155
      %p157 = scmp.eq.s32.totalorder %s26, 0
      %p158 = por %p156, %p157
      %s160 = sadd.s32 %s159, 1
      %p163 = scmp.eq.s32.totalorder %s20, 1
      %p164 = scmp.ne.s32.totalorder %s159, %s161
      %p165 = scmp.eq.s32.totalorder %s20, 0
      %p166 = por %p164, %p165
      %p167 = scmp.ne.s32.totalorder %s159, %s161
      %p168 = scmp.eq.s32.totalorder %s25, 1
      %p169 = por %p167, %p168
      %p170 = scmp.ne.s32.totalorder %s161, %s162
      %p171 = scmp.eq.s32.totalorder %s25, 0
      %p172 = por %p170, %p171
      %p173 = scmp.ne.s32.totalorder %s161, %s162
      %p174 = scmp.eq.s32.totalorder %s26, 1
      %p175 = por %p173, %p174
      %p177 = scmp.ne.s32.totalorder %s162, %s176
      %p178 = scmp.eq.s32.totalorder %s26, 0
      %p179 = por %p177, %p178
      %s180 = ssub.s32 %s20, %s27
      %p181 = scmp.eq.s32.totalorder %s180, 0
      %s183 = sadd.s32 %s182, 1
      %s184 = scalar_select %p181, %s182, %s183
      %p187 = pneg %p181
      %p188 = scmp.eq.s32.totalorder %s20, 1
      %p189 = por %p187, %p188
      %p190 = scmp.ne.s32.totalorder %s182, %s185
      %p191 = scmp.eq.s32.totalorder %s20, 0
      %p192 = por %p190, %p191
      %p193 = scmp.ne.s32.totalorder %s182, %s185
      %p194 = scmp.eq.s32.totalorder %s25, 1
      %p195 = por %p193, %p194
      %p196 = scmp.ne.s32.totalorder %s185, %s186
      %p197 = scmp.eq.s32.totalorder %s25, 0
      %p198 = por %p196, %p197
      %p199 = scmp.ne.s32.totalorder %s185, %s186
      %p200 = scmp.eq.s32.totalorder %s26, 1
      %p201 = por %p199, %p200
      %p203 = scmp.ne.s32.totalorder %s186, %s202
      %p204 = scmp.eq.s32.totalorder %s26, 0
      %p205 = por %p203, %p204
      %p206 = scmp.le.s32.totalorder 1, %s20
      %p207 = scmp.lt.s32.totalorder %s20, 3
      %p208 = pnand %p206, %p207
      %p209 = pneg %p208
      // Predicated region
      $region9: #{tpu_custom_call.1} parent=5 // pred_check
        _
      $region10: #{tpu_custom_call.1} parent=5 // pred_check_branch
        %211 = sbr.rel (%p208) target = $region12
      $region11: #{tpu_custom_call.1} parent=5 // pred_region
        %s212 = ssub.s32 %s20, 1
        // Predicated region
        $region13: #{tpu_custom_call.1} parent=11 // pred_check
          %p213 = pneg %p67
        $region14: #{tpu_custom_call.1} parent=11 // pred_check_branch
          %215 = sbr.rel (%p213) target = $region16
        $region15: #{tpu_custom_call.1} parent=11 // pred_region
          %s217 = ssub.s32 20736, 20736
          %218 = vsyncadd [#allocation4], %s217
          %s219 = sshll.u32 [#allocation3], 4
          %s220 = int_to_ptr.vmem [resolvable:$true] %s219
          %225 = dma.hbm_to_vmem [thread:$0]  %s1, 20736, %s220, [#allocation4], 192, 192, 12
        $region16: #{tpu_custom_call.1} parent=11 // pred_fallthru
          _
        // Predicated region
        $region17: #{tpu_custom_call.1} parent=11 // pred_check
          %p226 = pneg %p88
        $region18: #{tpu_custom_call.1} parent=11 // pred_check_branch
          %228 = sbr.rel (%p226) target = $region20
        $region19: #{tpu_custom_call.1} parent=11 // pred_region
          %s230 = ssub.s32 48, 48
          %231 = vsyncadd [#allocation7], %s230
          %s233 = sshll.u32 [#allocation6], 4
          %s234 = int_to_ptr.vmem [resolvable:$true] %s233
          %236 = dma.hbm_to_vmem [thread:$0]  %s2, 48, %s234, [#allocation7]
        $region20: #{tpu_custom_call.1} parent=11 // pred_fallthru
          _
        // Predicated region
        $region21: #{tpu_custom_call.1} parent=11 // pred_check
          %p237 = pneg %p109
        $region22: #{tpu_custom_call.1} parent=11 // pred_check_branch
          %239 = sbr.rel (%p237) target = $region24
        $region23: #{tpu_custom_call.1} parent=11 // pred_region
          %s241 = ssub.s32 34560, 34560
          %242 = vsyncadd [#allocation7], %s241
          %s243 = sshll.u32 [#allocation8], 4
          %s244 = int_to_ptr.vmem [resolvable:$true] %s243
          %249 = dma.hbm_to_vmem [thread:$0]  %s3, 34560, %s244, [#allocation7], 320, 320, 20
        $region24: #{tpu_custom_call.1} parent=11 // pred_fallthru
          _
        // Predicated region
        $region25: #{tpu_custom_call.1} parent=11 // pred_check
          %p250 = pneg %p130
        $region26: #{tpu_custom_call.1} parent=11 // pred_check_branch
          %252 = sbr.rel (%p250) target = $region28
        $region27: #{tpu_custom_call.1} parent=11 // pred_region
          %s254 = ssub.s32 80, 80
          %255 = vsyncadd [#allocation10], %s254
          %s257 = sshll.u32 [#allocation9], 4
          %s258 = int_to_ptr.vmem [resolvable:$true] %s257
          %260 = dma.hbm_to_vmem [thread:$0]  %s4, 80, %s258, [#allocation10]
        $region28: #{tpu_custom_call.1} parent=11 // pred_fallthru
          _
        // Predicated region
        $region29: #{tpu_custom_call.1} parent=11 // pred_check
          %p261 = pneg %p151
        $region30: #{tpu_custom_call.1} parent=11 // pred_check_branch
          %263 = sbr.rel (%p261) target = $region32
        $region31: #{tpu_custom_call.1} parent=11 // pred_region
          %s265 = ssub.s32 13824, 13824
          %266 = vsyncadd [#allocation10], %s265
          %s267 = sshll.u32 [#allocation11], 4
          %s268 = int_to_ptr.vmem [resolvable:$true] %s267
          %273 = dma.hbm_to_vmem [thread:$0]  %s5, 13824, %s268, [#allocation10], 128, 128, 8
        $region32: #{tpu_custom_call.1} parent=11 // pred_fallthru
          _
        // Predicated region
        $region33: #{tpu_custom_call.1} parent=11 // pred_check
          %p274 = pneg %p172
        $region34: #{tpu_custom_call.1} parent=11 // pred_check_branch
          %276 = sbr.rel (%p274) target = $region36
        $region35: #{tpu_custom_call.1} parent=11 // pred_region
          %s278 = ssub.s32 32, 32
          %279 = vsyncadd [#allocation13], %s278
          %s281 = sshll.u32 [#allocation12], 4
          %s282 = int_to_ptr.vmem [resolvable:$true] %s281
          %284 = dma.hbm_to_vmem [thread:$0]  %s6, 32, %s282, [#allocation13]
        $region36: #{tpu_custom_call.1} parent=11 // pred_fallthru
          _
      $region12: #{tpu_custom_call.1} parent=5 // pred_fallthru
        _
      %p285 = scmp.lt.s32.totalorder %s20, 2
      // Predicated region
      $region37: #{tpu_custom_call.1} parent=5 // pred_check
        %p286 = pneg %p285
      $region38: #{tpu_custom_call.1} parent=5 // pred_check_branch
        %288 = sbr.rel (%p286) target = $region40
      $region39: #{tpu_custom_call.1} parent=5 // pred_region
        // Predicated region
        $region41: #{tpu_custom_call.1} parent=39 // pred_check
          %p289 = pneg %p40
        $region42: #{tpu_custom_call.1} parent=39 // pred_check_branch
          %291 = sbr.rel (%p289) target = $region44
        $region43: #{tpu_custom_call.1} parent=39 // pred_region
          %p292 = scmp.lt.s32.totalorder %s20, 1
          %s293 = scalar_select %p292, %s20, 1
          %s294 = smul.addr %s293, 9
          %s295 = smul.addr %s294, 4
          %s296 = scalar_lea.vmem %s0, %s295
        $region44: #{tpu_custom_call.1} parent=39 // pred_fallthru
          _
      $region40: #{tpu_custom_call.1} parent=5 // pred_fallthru
        _
      %p297 = scmp.le.s32.totalorder 1, %s20
      %p298 = scmp.lt.s32.totalorder %s20, 3
      %p299 = pnand %p297, %p298
      %p300 = pneg %p299
      // Predicated region
      $region45: #{tpu_custom_call.1} parent=5 // pred_check
        _
      $region46: #{tpu_custom_call.1} parent=5 // pred_check_branch
        %302 = sbr.rel (%p299) target = $region48
      $region47: #{tpu_custom_call.1} parent=5 // pred_region
        %s303 = ssub.s32 %s20, 1
        // Predicated region
        $region49: #{tpu_custom_call.1} parent=47 // pred_check
          %p304 = pneg %p67
        $region50: #{tpu_custom_call.1} parent=47 // pred_check_branch
          %306 = sbr.rel (%p304) target = $region52
        $region51: #{tpu_custom_call.1} parent=47 // pred_region
          %307 = dma.done [#allocation4], 20736
        $region52: #{tpu_custom_call.1} parent=47 // pred_fallthru
          _
        // Predicated region
        $region53: #{tpu_custom_call.1} parent=47 // pred_check
          %p308 = pneg %p88
        $region54: #{tpu_custom_call.1} parent=47 // pred_check_branch
          %310 = sbr.rel (%p308) target = $region56
        $region55: #{tpu_custom_call.1} parent=47 // pred_region
          %311 = dma.done [#allocation7], 48
        $region56: #{tpu_custom_call.1} parent=47 // pred_fallthru
          _
        // Predicated region
        $region57: #{tpu_custom_call.1} parent=47 // pred_check
          %p312 = pneg %p109
        $region58: #{tpu_custom_call.1} parent=47 // pred_check_branch
          %314 = sbr.rel (%p312) target = $region60
        $region59: #{tpu_custom_call.1} parent=47 // pred_region
          %315 = dma.done [#allocation7], 34560
        $region60: #{tpu_custom_call.1} parent=47 // pred_fallthru
          _
        // Predicated region
        $region61: #{tpu_custom_call.1} parent=47 // pred_check
          %p316 = pneg %p130
        $region62: #{tpu_custom_call.1} parent=47 // pred_check_branch
          %318 = sbr.rel (%p316) target = $region64
        $region63: #{tpu_custom_call.1} parent=47 // pred_region
          %319 = dma.done [#allocation10], 80
        $region64: #{tpu_custom_call.1} parent=47 // pred_fallthru
          _
        // Predicated region
        $region65: #{tpu_custom_call.1} parent=47 // pred_check
          %p320 = pneg %p151
        $region66: #{tpu_custom_call.1} parent=47 // pred_check_branch
          %322 = sbr.rel (%p320) target = $region68
        $region67: #{tpu_custom_call.1} parent=47 // pred_region
          %323 = dma.done [#allocation10], 13824
        $region68: #{tpu_custom_call.1} parent=47 // pred_fallthru
          _
        // Predicated region
        $region69: #{tpu_custom_call.1} parent=47 // pred_check
          %p324 = pneg %p172
        $region70: #{tpu_custom_call.1} parent=47 // pred_check_branch
          %326 = sbr.rel (%p324) target = $region72
        $region71: #{tpu_custom_call.1} parent=47 // pred_region
          %327 = dma.done [#allocation13], 32
        $region72: #{tpu_custom_call.1} parent=47 // pred_fallthru
          _
        %p328 = scmp.lt.s32.totalorder %s25, 1
        %s329 = scalar_select %p328, %s25, 1
        %s330 = smul.addr %s329, 9
        %s331 = smul.addr %s330, 4
        %s332 = scalar_lea.vmem %s0, %s331
        %p333 = pneg %p46
        %p334 = pneg %p43
        %p335 = pneg %p67
        %p336 = pneg %p64
        %p337 = pneg %p88
        %p338 = pneg %p85
        %p339 = pneg %p109
        %p340 = pneg %p106
        %p341 = pneg %p130
        %p342 = pneg %p127
        %p343 = pneg %p151
        %p344 = pneg %p148
        %p345 = pneg %p172
        %p346 = pneg %p169
        %p347 = pneg %p198
        %p348 = pneg %p195
        %s349 = sand.u32 %s185, 1
        %s350 = scalar_lea.sflag [#allocation5], %s349
        %s351 = sand.u32 %s185, 1
        %s352 = smul.addr %s351, 32
        %s353 = scalar_lea.vmem [#allocation14], %s352
        %p354 = scmp.lt.s32.totalorder %s25, 1
        %s355 = scalar_select %p354, %s25, 1
        %s356 = smul.addr %s355, 9
        %s357 = smul.addr %s356, 4
        %s358 = scalar_lea.vmem %s0, %s357
        %v360 = vld [vmem:[%s358] sm:$0xff]
        %v361 = vld [vmem:[%s358 + $0x8] sm:$0xf]
        %v362 = vld [vmem:[%s358 + $0xc] sm:$0xff]
        %v363 = vld [vmem:[%s358 + $0x14] sm:$0xf]
        %v364 = vld [vmem:[#allocation3] sm:$0xff]
        %v365 = vld [vmem:[#allocation3 + $0x8] sm:$0xf]
        %v366 = vld [vmem:[#allocation3 + $0xc] sm:$0xff]
        %v367 = vld [vmem:[#allocation3 + $0x14] sm:$0xf]
        %v368 = vld [vmem:[#allocation3 + $0x18] sm:$0xff]
        %v369 = vld [vmem:[#allocation3 + $0x20] sm:$0xf]
        %v370 = vld [vmem:[#allocation3 + $0x24] sm:$0xff]
        %v371 = vld [vmem:[#allocation3 + $0x2c] sm:$0xf]
        %v372 = vld [vmem:[#allocation3 + $0x30] sm:$0xff]
        %v373 = vld [vmem:[#allocation3 + $0x38] sm:$0xf]
        %v374 = vld [vmem:[#allocation3 + $0x3c] sm:$0xff]
        %v375 = vld [vmem:[#allocation3 + $0x44] sm:$0xf]
        %v376 = vld [vmem:[#allocation3 + $0x48] sm:$0xff]
        %v377 = vld [vmem:[#allocation3 + $0x50] sm:$0xf]
        %v378 = vld [vmem:[#allocation3 + $0x54] sm:$0xff]
        %v379 = vld [vmem:[#allocation3 + $0x5c] sm:$0xf]
        %v380 = vld [vmem:[#allocation3 + $0x60] sm:$0xff]
        %v381 = vld [vmem:[#allocation3 + $0x68] sm:$0xf]
        %v382 = vld [vmem:[#allocation3 + $0x6c] sm:$0xff]
        %v383 = vld [vmem:[#allocation3 + $0x74] sm:$0xf]
        %v384 = vld [vmem:[#allocation3 + $0x78] sm:$0xff]
        %v385 = vld [vmem:[#allocation3 + $0x80] sm:$0xf]
        %v386 = vld [vmem:[#allocation3 + $0x84] sm:$0xff]
        %v387 = vld [vmem:[#allocation3 + $0x8c] sm:$0xf]
        %v388 = vld [vmem:[#allocation3 + $0x90] sm:$0xff]
        %v389 = vld [vmem:[#allocation3 + $0x98] sm:$0xf]
        %v390 = vld [vmem:[#allocation3 + $0x9c] sm:$0xff]
        %v391 = vld [vmem:[#allocation3 + $0xa4] sm:$0xf]
        %v392 = vld [vmem:[#allocation3 + $0xa8] sm:$0xff]
        %v393 = vld [vmem:[#allocation3 + $0xb0] sm:$0xf]
        %v394 = vld [vmem:[#allocation3 + $0xb4] sm:$0xff]
        %v395 = vld [vmem:[#allocation3 + $0xbc] sm:$0xf]
        %v396 = vld [vmem:[#allocation3 + $0xc0] sm:$0xff]
        %v397 = vld [vmem:[#allocation3 + $0xc8] sm:$0xf]
        %v398 = vld [vmem:[#allocation3 + $0xcc] sm:$0xff]
        %v399 = vld [vmem:[#allocation3 + $0xd4] sm:$0xf]
        %v400 = vld [vmem:[#allocation3 + $0xd8] sm:$0xff]
        %v401 = vld [vmem:[#allocation3 + $0xe0] sm:$0xf]
        %v402 = vld [vmem:[#allocation3 + $0xe4] sm:$0xff]
        %v403 = vld [vmem:[#allocation3 + $0xec] sm:$0xf]
        %v404 = vld [vmem:[#allocation3 + $0xf0] sm:$0xff]
        %v405 = vld [vmem:[#allocation3 + $0xf8] sm:$0xf]
        %v406 = vld [vmem:[#allocation3 + $0xfc] sm:$0xff]
        %v407 = vld [vmem:[#allocation3 + $0x104] sm:$0xf]
        %v408 = vld [vmem:[#allocation3 + $0x108] sm:$0xff]
        %v409 = vld [vmem:[#allocation3 + $0x110] sm:$0xf]
        %v410 = vld [vmem:[#allocation3 + $0x114] sm:$0xff]
        %v411 = vld [vmem:[#allocation3 + $0x11c] sm:$0xf]
        %v412 = vld [vmem:[#allocation3 + $0x120] sm:$0xff]
        %v413 = vld [vmem:[#allocation3 + $0x128] sm:$0xf]
        %v414 = vld [vmem:[#allocation3 + $0x12c] sm:$0xff]
        %v415 = vld [vmem:[#allocation3 + $0x134] sm:$0xf]
        %v416 = vld [vmem:[#allocation3 + $0x138] sm:$0xff]
        %v417 = vld [vmem:[#allocation3 + $0x140] sm:$0xf]
        %v418 = vld [vmem:[#allocation3 + $0x144] sm:$0xff]
        %v419 = vld [vmem:[#allocation3 + $0x14c] sm:$0xf]
        %v420 = vld [vmem:[#allocation3 + $0x150] sm:$0xff]
        %v421 = vld [vmem:[#allocation3 + $0x158] sm:$0xf]
        %v422 = vld [vmem:[#allocation3 + $0x15c] sm:$0xff]
        %v423 = vld [vmem:[#allocation3 + $0x164] sm:$0xf]
        %v424 = vld [vmem:[#allocation3 + $0x168] sm:$0xff]
        %v425 = vld [vmem:[#allocation3 + $0x170] sm:$0xf]
        %v426 = vld [vmem:[#allocation3 + $0x174] sm:$0xff]
        %v427 = vld [vmem:[#allocation3 + $0x17c] sm:$0xf]
        %v428 = vld [vmem:[#allocation3 + $0x180] sm:$0xff]
        %v429 = vld [vmem:[#allocation3 + $0x188] sm:$0xf]
        %v430 = vld [vmem:[#allocation3 + $0x18c] sm:$0xff]
        %v431 = vld [vmem:[#allocation3 + $0x194] sm:$0xf]
        %v432 = vld [vmem:[#allocation3 + $0x198] sm:$0xff]
        %v433 = vld [vmem:[#allocation3 + $0x1a0] sm:$0xf]
        %v434 = vld [vmem:[#allocation3 + $0x1a4] sm:$0xff]
        %v435 = vld [vmem:[#allocation3 + $0x1ac] sm:$0xf]
        %v436 = vld [vmem:[%s358 + $0x18] sm:$0x11]
        %v437 = vld [vmem:[%s358 + $0x20] sm:$0x1]
        %s438 = scalar_lea.vmem [#allocation3], 432
        %v439 = vld [vmem:[%s438] sm:$0xff]
        %v440 = vld [vmem:[%s438 + $0x8] sm:$0xf]
        %v441 = vld [vmem:[%s438 + $0xc] sm:$0xff]
        %v442 = vld [vmem:[%s438 + $0x14] sm:$0xf]
        %v443 = vld [vmem:[%s438 + $0x18] sm:$0xff]
        %v444 = vld [vmem:[%s438 + $0x20] sm:$0xf]
        %v445 = vld [vmem:[%s438 + $0x24] sm:$0xff]
        %v446 = vld [vmem:[%s438 + $0x2c] sm:$0xf]
        %v447 = vld [vmem:[%s438 + $0x30] sm:$0xff]
        %v448 = vld [vmem:[%s438 + $0x38] sm:$0xf]
        %v449 = vld [vmem:[%s438 + $0x3c] sm:$0xff]
        %v450 = vld [vmem:[%s438 + $0x44] sm:$0xf]
        %v451 = vld [vmem:[%s438 + $0x48] sm:$0xff]
        %v452 = vld [vmem:[%s438 + $0x50] sm:$0xf]
        %v453 = vld [vmem:[%s438 + $0x54] sm:$0xff]
        %v454 = vld [vmem:[%s438 + $0x5c] sm:$0xf]
        %v455 = vld [vmem:[%s438 + $0x60] sm:$0xff]
        %v456 = vld [vmem:[%s438 + $0x68] sm:$0xf]
        %v457 = vld [vmem:[%s438 + $0x6c] sm:$0xff]
        %v458 = vld [vmem:[%s438 + $0x74] sm:$0xf]
        %v459 = vld [vmem:[%s438 + $0x78] sm:$0xff]
        %v460 = vld [vmem:[%s438 + $0x80] sm:$0xf]
        %v461 = vld [vmem:[%s438 + $0x84] sm:$0xff]
        %v462 = vld [vmem:[%s438 + $0x8c] sm:$0xf]
        %v463 = vld [vmem:[%s438 + $0x90] sm:$0xff]
        %v464 = vld [vmem:[%s438 + $0x98] sm:$0xf]
        %v465 = vld [vmem:[%s438 + $0x9c] sm:$0xff]
        %v466 = vld [vmem:[%s438 + $0xa4] sm:$0xf]
        %v467 = vld [vmem:[%s438 + $0xa8] sm:$0xff]
        %v468 = vld [vmem:[%s438 + $0xb0] sm:$0xf]
        %v469 = vld [vmem:[%s438 + $0xb4] sm:$0xff]
        %v470 = vld [vmem:[%s438 + $0xbc] sm:$0xf]
        %v471 = vld [vmem:[%s438 + $0xc0] sm:$0xff]
        %v472 = vld [vmem:[%s438 + $0xc8] sm:$0xf]
        %v473 = vld [vmem:[%s438 + $0xcc] sm:$0xff]
        %v474 = vld [vmem:[%s438 + $0xd4] sm:$0xf]
        %v475 = vld [vmem:[%s438 + $0xd8] sm:$0xff]
        %v476 = vld [vmem:[%s438 + $0xe0] sm:$0xf]
        %v477 = vld [vmem:[%s438 + $0xe4] sm:$0xff]
        %v478 = vld [vmem:[%s438 + $0xec] sm:$0xf]
        %v479 = vld [vmem:[%s438 + $0xf0] sm:$0xff]
        %v480 = vld [vmem:[%s438 + $0xf8] sm:$0xf]
        %v481 = vld [vmem:[%s438 + $0xfc] sm:$0xff]
        %v482 = vld [vmem:[%s438 + $0x104] sm:$0xf]
        %v483 = vld [vmem:[%s438 + $0x108] sm:$0xff]
        %v484 = vld [vmem:[%s438 + $0x110] sm:$0xf]
        %v485 = vld [vmem:[%s438 + $0x114] sm:$0xff]
        %v486 = vld [vmem:[%s438 + $0x11c] sm:$0xf]
        %v487 = vld [vmem:[%s438 + $0x120] sm:$0xff]
        %v488 = vld [vmem:[%s438 + $0x128] sm:$0xf]
        %v489 = vld [vmem:[%s438 + $0x12c] sm:$0xff]
        %v490 = vld [vmem:[%s438 + $0x134] sm:$0xf]
        %v491 = vld [vmem:[%s438 + $0x138] sm:$0xff]
        %v492 = vld [vmem:[%s438 + $0x140] sm:$0xf]
        %v493 = vld [vmem:[%s438 + $0x144] sm:$0xff]
        %v494 = vld [vmem:[%s438 + $0x14c] sm:$0xf]
        %v495 = vld [vmem:[%s438 + $0x150] sm:$0xff]
        %v496 = vld [vmem:[%s438 + $0x158] sm:$0xf]
        %v497 = vld [vmem:[%s438 + $0x15c] sm:$0xff]
        %v498 = vld [vmem:[%s438 + $0x164] sm:$0xf]
        %v499 = vld [vmem:[%s438 + $0x168] sm:$0xff]
        %v500 = vld [vmem:[%s438 + $0x170] sm:$0xf]
        %v501 = vld [vmem:[%s438 + $0x174] sm:$0xff]
        %v502 = vld [vmem:[%s438 + $0x17c] sm:$0xf]
        %v503 = vld [vmem:[%s438 + $0x180] sm:$0xff]
        %v504 = vld [vmem:[%s438 + $0x188] sm:$0xf]
        %v505 = vld [vmem:[%s438 + $0x18c] sm:$0xff]
        %v506 = vld [vmem:[%s438 + $0x194] sm:$0xf]
        %v507 = vld [vmem:[%s438 + $0x198] sm:$0xff]
        %v508 = vld [vmem:[%s438 + $0x1a0] sm:$0xf]
        %v509 = vld [vmem:[%s438 + $0x1a4] sm:$0xff]
        %v510 = vld [vmem:[%s438 + $0x1ac] sm:$0xf]
        %v517 = vunpack.c.l.b16 %v360
        %v518 = vunpack.c.h.b16 %v360
        %v519 = vunpack.c.l.b16 %v361
        %v520 = vunpack.c.l.b16 %v362
        %v521 = vunpack.c.h.b16 %v362
        %v522 = vunpack.c.l.b16 %v363
        %v523 = vunpack.c.l.b16 %v436
        %v524 = vunpack.c.h.b16 %v436
        %v525 = vunpack.c.l.b16 %v437
        %v526 = vpack.c.b16 %v520, %v517
        %v527 = vpack.c.b16 %v521, %v518
        %v528 = vpack.c.b16 %v522, %v519
        %v529 = vpack.c.b16 %v523, %v523
        %v530 = vpack.c.b16 %v524, %v524
        %v531 = vpack.c.b16 %v525, %v525
        %vm532 = vsmask.f32 7424
        %v534 = vshrl.u32 %v526, 16
        %v536 = vshll.u32 %v526, 16
        %v538 = vrot.slane %v536, 1
        %v539 = vor.u32 %v534, %v538
        %v541 = vshll.u32 %v529, 16
        %v543 = vrot.slane %v541, 1
        %v544 = vsel %vm532, %v539, %v543
        %v546 = vshrl.u32 %v527, 16
        %v548 = vshll.u32 %v527, 16
        %v550 = vrot.slane %v548, 1
        %v551 = vor.u32 %v546, %v550
        %v553 = vshll.u32 %v530, 16
        %v555 = vrot.slane %v553, 1
        %v556 = vsel %vm532, %v551, %v555
        %v558 = vshrl.u32 %v528, 16
        %v560 = vshll.u32 %v528, 16
        %v562 = vrot.slane %v560, 1
        %v563 = vor.u32 %v558, %v562
        %v565 = vshll.u32 %v531, 16
        %v567 = vrot.slane %v565, 1
        %v568 = vsel %vm532, %v563, %v567
        %v643 = vunpack.c.l.b16 %v439
        %v644 = vunpack.c.h.b16 %v439
        %v645 = vunpack.c.l.b16 %v440
        %v646 = vunpack.c.l.b16 %v441
        %v647 = vunpack.c.h.b16 %v441
        %v648 = vunpack.c.l.b16 %v442
        %v649 = vunpack.c.l.b16 %v443
        %v650 = vunpack.c.h.b16 %v443
        %v651 = vunpack.c.l.b16 %v444
        %v652 = vunpack.c.l.b16 %v445
        %v653 = vunpack.c.h.b16 %v445
        %v654 = vunpack.c.l.b16 %v446
        %v655 = vunpack.c.l.b16 %v447
        %v656 = vunpack.c.h.b16 %v447
        %v657 = vunpack.c.l.b16 %v448
        %v658 = vunpack.c.l.b16 %v449
        %v659 = vunpack.c.h.b16 %v449
        %v660 = vunpack.c.l.b16 %v450
        %v661 = vunpack.c.l.b16 %v451
        %v662 = vunpack.c.h.b16 %v451
        %v663 = vunpack.c.l.b16 %v452
        %v664 = vunpack.c.l.b16 %v453
        %v665 = vunpack.c.h.b16 %v453
        %v666 = vunpack.c.l.b16 %v454
        %v667 = vunpack.c.l.b16 %v455
        %v668 = vunpack.c.h.b16 %v455
        %v669 = vunpack.c.l.b16 %v456
        %v670 = vunpack.c.l.b16 %v457
        %v671 = vunpack.c.h.b16 %v457
        %v672 = vunpack.c.l.b16 %v458
        %v673 = vunpack.c.l.b16 %v459
        %v674 = vunpack.c.h.b16 %v459
        %v675 = vunpack.c.l.b16 %v460
        %v676 = vunpack.c.l.b16 %v461
        %v677 = vunpack.c.h.b16 %v461
        %v678 = vunpack.c.l.b16 %v462
        %v679 = vunpack.c.l.b16 %v463
        %v680 = vunpack.c.h.b16 %v463
        %v681 = vunpack.c.l.b16 %v464
        %v682 = vunpack.c.l.b16 %v465
        %v683 = vunpack.c.h.b16 %v465
        %v684 = vunpack.c.l.b16 %v466
        %v685 = vunpack.c.l.b16 %v467
        %v686 = vunpack.c.h.b16 %v467
        %v687 = vunpack.c.l.b16 %v468
        %v688 = vunpack.c.l.b16 %v469
        %v689 = vunpack.c.h.b16 %v469
        %v690 = vunpack.c.l.b16 %v470
        %v691 = vunpack.c.l.b16 %v471
        %v692 = vunpack.c.h.b16 %v471
        %v693 = vunpack.c.l.b16 %v472
        %v694 = vunpack.c.l.b16 %v473
        %v695 = vunpack.c.h.b16 %v473
        %v696 = vunpack.c.l.b16 %v474
        %v697 = vunpack.c.l.b16 %v475
        %v698 = vunpack.c.h.b16 %v475
        %v699 = vunpack.c.l.b16 %v476
        %v700 = vunpack.c.l.b16 %v477
        %v701 = vunpack.c.h.b16 %v477
        %v702 = vunpack.c.l.b16 %v478
        %v703 = vunpack.c.l.b16 %v479
        %v704 = vunpack.c.h.b16 %v479
        %v705 = vunpack.c.l.b16 %v480
        %v706 = vunpack.c.l.b16 %v481
        %v707 = vunpack.c.h.b16 %v481
        %v708 = vunpack.c.l.b16 %v482
        %v709 = vunpack.c.l.b16 %v483
        %v710 = vunpack.c.h.b16 %v483
        %v711 = vunpack.c.l.b16 %v484
        %v712 = vunpack.c.l.b16 %v485
        %v713 = vunpack.c.h.b16 %v485
        %v714 = vunpack.c.l.b16 %v486
        %v715 = vunpack.c.l.b16 %v487
        %v716 = vunpack.c.h.b16 %v487
        %v717 = vunpack.c.l.b16 %v488
        %v718 = vunpack.c.l.b16 %v489
        %v719 = vunpack.c.h.b16 %v489
        %v720 = vunpack.c.l.b16 %v490
        %v721 = vunpack.c.l.b16 %v491
        %v722 = vunpack.c.h.b16 %v491
        %v723 = vunpack.c.l.b16 %v492
        %v724 = vunpack.c.l.b16 %v493
        %v725 = vunpack.c.h.b16 %v493
        %v726 = vunpack.c.l.b16 %v494
        %v727 = vunpack.c.l.b16 %v495
        %v728 = vunpack.c.h.b16 %v495
        %v729 = vunpack.c.l.b16 %v496
        %v730 = vunpack.c.l.b16 %v497
        %v731 = vunpack.c.h.b16 %v497
        %v732 = vunpack.c.l.b16 %v498
        %v733 = vunpack.c.l.b16 %v499
        %v734 = vunpack.c.h.b16 %v499
        %v735 = vunpack.c.l.b16 %v500
        %v736 = vunpack.c.l.b16 %v501
        %v737 = vunpack.c.h.b16 %v501
        %v738 = vunpack.c.l.b16 %v502
        %v739 = vunpack.c.l.b16 %v503
        %v740 = vunpack.c.h.b16 %v503
        %v741 = vunpack.c.l.b16 %v504
        %v742 = vunpack.c.l.b16 %v505
        %v743 = vunpack.c.h.b16 %v505
        %v744 = vunpack.c.l.b16 %v506
        %v745 = vunpack.c.l.b16 %v507
        %v746 = vunpack.c.h.b16 %v507
        %v747 = vunpack.c.l.b16 %v508
        %v748 = vunpack.c.l.b16 %v509
        %v749 = vunpack.c.h.b16 %v509
        %v750 = vunpack.c.l.b16 %v510
        %v751 = vpack.c.b16 %v646, %v643
        %v752 = vpack.c.b16 %v647, %v644
        %v753 = vpack.c.b16 %v648, %v645
        %v754 = vpack.c.b16 %v652, %v649
        %v755 = vpack.c.b16 %v653, %v650
        %v756 = vpack.c.b16 %v654, %v651
        %v757 = vpack.c.b16 %v658, %v655
        %v758 = vpack.c.b16 %v659, %v656
        %v759 = vpack.c.b16 %v660, %v657
        %v760 = vpack.c.b16 %v664, %v661
        %v761 = vpack.c.b16 %v665, %v662
        %v762 = vpack.c.b16 %v666, %v663
        %v763 = vpack.c.b16 %v670, %v667
        %v764 = vpack.c.b16 %v671, %v668
        %v765 = vpack.c.b16 %v672, %v669
        %v766 = vpack.c.b16 %v676, %v673
        %v767 = vpack.c.b16 %v677, %v674
        %v768 = vpack.c.b16 %v678, %v675
        %v769 = vpack.c.b16 %v682, %v679
        %v770 = vpack.c.b16 %v683, %v680
        %v771 = vpack.c.b16 %v684, %v681
        %v772 = vpack.c.b16 %v688, %v685
        %v773 = vpack.c.b16 %v689, %v686
        %v774 = vpack.c.b16 %v690, %v687
        %v775 = vpack.c.b16 %v694, %v691
        %v776 = vpack.c.b16 %v695, %v692
        %v777 = vpack.c.b16 %v696, %v693
        %v778 = vpack.c.b16 %v700, %v697
        %v779 = vpack.c.b16 %v701, %v698
        %v780 = vpack.c.b16 %v702, %v699
        %v781 = vpack.c.b16 %v706, %v703
        %v782 = vpack.c.b16 %v707, %v704
        %v783 = vpack.c.b16 %v708, %v705
        %v784 = vpack.c.b16 %v712, %v709
        %v785 = vpack.c.b16 %v713, %v710
        %v786 = vpack.c.b16 %v714, %v711
        %v787 = vpack.c.b16 %v718, %v715
        %v788 = vpack.c.b16 %v719, %v716
        %v789 = vpack.c.b16 %v720, %v717
        %v790 = vpack.c.b16 %v724, %v721
        %v791 = vpack.c.b16 %v725, %v722
        %v792 = vpack.c.b16 %v726, %v723
        %v793 = vpack.c.b16 %v730, %v727
        %v794 = vpack.c.b16 %v731, %v728
        %v795 = vpack.c.b16 %v732, %v729
        %v796 = vpack.c.b16 %v736, %v733
        %v797 = vpack.c.b16 %v737, %v734
        %v798 = vpack.c.b16 %v738, %v735
        %v799 = vpack.c.b16 %v742, %v739
        %v800 = vpack.c.b16 %v743, %v740
        %v801 = vpack.c.b16 %v744, %v741
        %v802 = vpack.c.b16 %v748, %v745
        %v803 = vpack.c.b16 %v749, %v746
        %v804 = vpack.c.b16 %v750, %v747
        %vm859 = vcmask 261120
        %v861 = vsel %vm859, %v568, 0
        %863 = vmatprep.subr.bf16.mxu0 %v752
        %864 = vmatpush1.bf16.msra.mxu0 %v751
        %865 = vmatprep.subr.bf16.mxu0 %v755
        %866 = vmatpush1.bf16.msra.mxu0 %v754
        %867 = vmatprep.subr.bf16.mxu0 %v758
        %868 = vmatpush1.bf16.msra.mxu0 %v757
        %869 = vmatprep.subr.bf16.mxu0 %v761
        %870 = vmatpush1.bf16.msra.mxu0 %v760
        %871 = vmatprep.subr.bf16.mxu0 %v764
        %872 = vmatpush1.bf16.msra.mxu0 %v763
        %873 = vmatprep.subr.bf16.mxu0 %v767
        %874 = vmatpush1.bf16.msra.mxu0 %v766
        %875 = vmatprep.subr.bf16.mxu0 %v770
        %876 = vmatpush1.bf16.msra.mxu0 %v769
        %877 = vmatprep.subr.bf16.mxu0 %v773
        %878 = vmatpush1.bf16.msra.mxu0 %v772
        %879 = vmatprep.subr.bf16.mxu0 %v776
        %880 = vmatpush1.bf16.msra.mxu0 %v775
        %881 = vmatprep.subr.bf16.mxu0 %v779
        %882 = vmatpush1.bf16.msra.mxu0 %v778
        %883 = vmatprep.subr.bf16.mxu0 %v782
        %884 = vmatpush1.bf16.msra.mxu0 %v781
        %885 = vmatprep.subr.bf16.mxu0 %v785
        %886 = vmatpush1.bf16.msra.mxu0 %v784
        %887 = vmatprep.subr.bf16.mxu0 %v788
        %888 = vmatpush1.bf16.msra.mxu0 %v787
        %889 = vmatprep.subr.bf16.mxu0 %v791
        %890 = vmatpush1.bf16.msra.mxu0 %v790
        %891 = vmatprep.subr.bf16.mxu0 %v794
        %892 = vmatpush1.bf16.msra.mxu0 %v793
        %893 = vmatprep.subr.bf16.mxu0 %v797
        %894 = vmatpush1.bf16.msra.mxu0 %v796
        %895 = vmatprep.mubr.bf16.mxu0 %v556
        %896 = vmatmul.mubr.bf16.gmra.mrb[0].mxu0 %v544
        %v897 = vpop.f32.mrb[0].mxu0
        %v898 = vadd.f32 0.0, %v897
        %v899 = vpop.f32.mrb[0].mxu0
        %v900 = vadd.f32 0.0, %v899
        %v901 = vpop.f32.mrb[0].mxu0
        %v902 = vadd.f32 0.0, %v901
        %v903 = vpop.f32.mrb[0].mxu0
        %v904 = vadd.f32 0.0, %v903
        %905 = vdwg.mxu0
        %906 = vmatprep.subr.bf16.mxu0 %v800
        %907 = vmatpush1.bf16.msra.mxu0 %v799
        %908 = vmatprep.subr.bf16.mxu0 %v803
        %909 = vmatpush1.bf16.msra.mxu0 %v802
        %910 = vmatprep.subr.bf16.mxu0 0
        %911 = vmatpush1.bf16.msra.mxu0 0
        %912 = vmatprep.subr.bf16.mxu0 0
        %913 = vmatpush1.bf16.msra.mxu0 0
        %914 = vmatprep.subr.bf16.mxu0 0
        %915 = vmatpush1.bf16.msra.mxu0 0
        %916 = vmatprep.subr.bf16.mxu0 0
        %917 = vmatpush1.bf16.msra.mxu0 0
        %918 = vmatprep.subr.bf16.mxu0 0
        %919 = vmatpush1.bf16.msra.mxu0 0
        %920 = vmatprep.subr.bf16.mxu0 0
        %921 = vmatpush1.bf16.msra.mxu0 0
        %922 = vmatprep.subr.bf16.mxu0 0
        %923 = vmatpush1.bf16.msra.mxu0 0
        %924 = vmatprep.subr.bf16.mxu0 0
        %925 = vmatpush1.bf16.msra.mxu0 0
        %926 = vmatprep.subr.bf16.mxu0 0
        %927 = vmatpush1.bf16.msra.mxu0 0
        %928 = vmatprep.subr.bf16.mxu0 0
        %929 = vmatpush1.bf16.msra.mxu0 0
        %930 = vmatprep.subr.bf16.mxu0 0
        %931 = vmatpush1.bf16.msra.mxu0 0
        %932 = vmatprep.subr.bf16.mxu0 0
        %933 = vmatpush1.bf16.msra.mxu0 0
        %934 = vmatprep.subr.bf16.mxu0 0
        %935 = vmatpush1.bf16.msra.mxu0 0
        %936 = vmatprep.subr.bf16.mxu0 0
        %937 = vmatpush1.bf16.msra.mxu0 0
        %938 = vmatprep.mubr.bf16.mxu0 0
        %939 = vmatmul.mubr.bf16.gmra.mrb[0].mxu0 %v861
        %v940 = vpop.f32.mrb[0].mxu0
        %v941 = vadd.f32 %v898, %v940
        %v942 = vpop.f32.mrb[0].mxu0
        %v943 = vadd.f32 %v900, %v942
        %v944 = vpop.f32.mrb[0].mxu0
        %v945 = vadd.f32 %v902, %v944
        %v946 = vpop.f32.mrb[0].mxu0
        %v947 = vadd.f32 %v904, %v946
        %948 = vdwg.mxu0
        %949 = vmatprep.subr.bf16.mxu0 0
        %950 = vmatpush1.bf16.msra.mxu0 %v753
        %951 = vmatprep.subr.bf16.mxu0 0
        %952 = vmatpush1.bf16.msra.mxu0 %v756
        %953 = vmatprep.subr.bf16.mxu0 0
        %954 = vmatpush1.bf16.msra.mxu0 %v759
        %955 = vmatprep.subr.bf16.mxu0 0
        %956 = vmatpush1.bf16.msra.mxu0 %v762
        %957 = vmatprep.subr.bf16.mxu0 0
        %958 = vmatpush1.bf16.msra.mxu0 %v765
        %959 = vmatprep.subr.bf16.mxu0 0
        %960 = vmatpush1.bf16.msra.mxu0 %v768
        %961 = vmatprep.subr.bf16.mxu0 0
        %962 = vmatpush1.bf16.msra.mxu0 %v771
        %963 = vmatprep.subr.bf16.mxu0 0
        %964 = vmatpush1.bf16.msra.mxu0 %v774
        %965 = vmatprep.subr.bf16.mxu0 0
        %966 = vmatpush1.bf16.msra.mxu0 %v777
        %967 = vmatprep.subr.bf16.mxu0 0
        %968 = vmatpush1.bf16.msra.mxu0 %v780
        %969 = vmatprep.subr.bf16.mxu0 0
        %970 = vmatpush1.bf16.msra.mxu0 %v783
        %971 = vmatprep.subr.bf16.mxu0 0
        %972 = vmatpush1.bf16.msra.mxu0 %v786
        %973 = vmatprep.subr.bf16.mxu0 0
        %974 = vmatpush1.bf16.msra.mxu0 %v789
        %975 = vmatprep.subr.bf16.mxu0 0
        %976 = vmatpush1.bf16.msra.mxu0 %v792
        %977 = vmatprep.subr.bf16.mxu0 0
        %978 = vmatpush1.bf16.msra.mxu0 %v795
        %979 = vmatprep.subr.bf16.mxu0 0
        %980 = vmatpush1.bf16.msra.mxu0 %v798
        %981 = vmatprep.mubr.bf16.mxu0 %v556
        %982 = vmatmul.mubr.bf16.gmra.mrb[0].mxu0 %v544
        %v983 = vpop.f32.mrb[0].mxu0
        %v984 = vadd.f32 0.0, %v983
        %v985 = vpop.f32.mrb[0].mxu0
        %v986 = vpop.f32.mrb[0].mxu0
        %v987 = vadd.f32 0.0, %v986
        %v988 = vpop.f32.mrb[0].mxu0
        %989 = vdwg.mxu0
        %990 = vmatprep.subr.bf16.mxu0 0
        %991 = vmatpush1.bf16.msra.mxu0 %v801
        %992 = vmatprep.subr.bf16.mxu0 0
        %993 = vmatpush1.bf16.msra.mxu0 %v804
        %994 = vmatprep.subr.bf16.mxu0 0
        %995 = vmatpush1.bf16.msra.mxu0 0
        %996 = vmatprep.subr.bf16.mxu0 0
        %997 = vmatpush1.bf16.msra.mxu0 0
        %998 = vmatprep.subr.bf16.mxu0 0
        %999 = vmatpush1.bf16.msra.mxu0 0
        %1000 = vmatprep.subr.bf16.mxu0 0
        %1001 = vmatpush1.bf16.msra.mxu0 0
        %1002 = vmatprep.subr.bf16.mxu0 0
        %1003 = vmatpush1.bf16.msra.mxu0 0
        %1004 = vmatprep.subr.bf16.mxu0 0
        %1005 = vmatpush1.bf16.msra.mxu0 0
        %1006 = vmatprep.subr.bf16.mxu0 0
        %1007 = vmatpush1.bf16.msra.mxu0 0
        %1008 = vmatprep.subr.bf16.mxu0 0
        %1009 = vmatpush1.bf16.msra.mxu0 0
        %1010 = vmatprep.subr.bf16.mxu0 0
        %1011 = vmatpush1.bf16.msra.mxu0 0
        %1012 = vmatprep.subr.bf16.mxu0 0
        %1013 = vmatpush1.bf16.msra.mxu0 0
        %1014 = vmatprep.subr.bf16.mxu0 0
        %1015 = vmatpush1.bf16.msra.mxu0 0
        %1016 = vmatprep.subr.bf16.mxu0 0
        %1017 = vmatpush1.bf16.msra.mxu0 0
        %1018 = vmatprep.subr.bf16.mxu0 0
        %1019 = vmatpush1.bf16.msra.mxu0 0
        %1020 = vmatprep.subr.bf16.mxu0 0
        %1021 = vmatpush1.bf16.msra.mxu0 0
        %1022 = vmatprep.mubr.bf16.mxu0 0
        %1023 = vmatmul.mubr.bf16.gmra.mrb[0].mxu0 %v861
        %v1024 = vpop.f32.mrb[0].mxu0
        %v1025 = vadd.f32 %v984, %v1024
        %v1026 = vpop.f32.mrb[0].mxu0
        %v1027 = vpop.f32.mrb[0].mxu0
        %v1028 = vadd.f32 %v987, %v1027
        %v1029 = vpop.f32.mrb[0].mxu0
        %1030 = vdwg.mxu0
        %v1105 = vunpack.c.l.b16 %v364
        %v1106 = vunpack.c.h.b16 %v364
        %v1107 = vunpack.c.l.b16 %v365
        %v1108 = vunpack.c.l.b16 %v366
        %v1109 = vunpack.c.h.b16 %v366
        %v1110 = vunpack.c.l.b16 %v367
        %v1111 = vunpack.c.l.b16 %v368
        %v1112 = vunpack.c.h.b16 %v368
        %v1113 = vunpack.c.l.b16 %v369
        %v1114 = vunpack.c.l.b16 %v370
        %v1115 = vunpack.c.h.b16 %v370
        %v1116 = vunpack.c.l.b16 %v371
        %v1117 = vunpack.c.l.b16 %v372
        %v1118 = vunpack.c.h.b16 %v372
        %v1119 = vunpack.c.l.b16 %v373
        %v1120 = vunpack.c.l.b16 %v374
        %v1121 = vunpack.c.h.b16 %v374
        %v1122 = vunpack.c.l.b16 %v375
        %v1123 = vunpack.c.l.b16 %v376
        %v1124 = vunpack.c.h.b16 %v376
        %v1125 = vunpack.c.l.b16 %v377
        %v1126 = vunpack.c.l.b16 %v378
        %v1127 = vunpack.c.h.b16 %v378
        %v1128 = vunpack.c.l.b16 %v379
        %v1129 = vunpack.c.l.b16 %v380
        %v1130 = vunpack.c.h.b16 %v380
        %v1131 = vunpack.c.l.b16 %v381
        %v1132 = vunpack.c.l.b16 %v382
        %v1133 = vunpack.c.h.b16 %v382
        %v1134 = vunpack.c.l.b16 %v383
        %v1135 = vunpack.c.l.b16 %v384
        %v1136 = vunpack.c.h.b16 %v384
        %v1137 = vunpack.c.l.b16 %v385
        %v1138 = vunpack.c.l.b16 %v386
        %v1139 = vunpack.c.h.b16 %v386
        %v1140 = vunpack.c.l.b16 %v387
        %v1141 = vunpack.c.l.b16 %v388
        %v1142 = vunpack.c.h.b16 %v388
        %v1143 = vunpack.c.l.b16 %v389
        %v1144 = vunpack.c.l.b16 %v390
        %v1145 = vunpack.c.h.b16 %v390
        %v1146 = vunpack.c.l.b16 %v391
        %v1147 = vunpack.c.l.b16 %v392
        %v1148 = vunpack.c.h.b16 %v392
        %v1149 = vunpack.c.l.b16 %v393
        %v1150 = vunpack.c.l.b16 %v394
        %v1151 = vunpack.c.h.b16 %v394
        %v1152 = vunpack.c.l.b16 %v395
        %v1153 = vunpack.c.l.b16 %v396
        %v1154 = vunpack.c.h.b16 %v396
        %v1155 = vunpack.c.l.b16 %v397
        %v1156 = vunpack.c.l.b16 %v398
        %v1157 = vunpack.c.h.b16 %v398
        %v1158 = vunpack.c.l.b16 %v399
        %v1159 = vunpack.c.l.b16 %v400
        %v1160 = vunpack.c.h.b16 %v400
        %v1161 = vunpack.c.l.b16 %v401
        %v1162 = vunpack.c.l.b16 %v402
        %v1163 = vunpack.c.h.b16 %v402
        %v1164 = vunpack.c.l.b16 %v403
        %v1165 = vunpack.c.l.b16 %v404
        %v1166 = vunpack.c.h.b16 %v404
        %v1167 = vunpack.c.l.b16 %v405
        %v1168 = vunpack.c.l.b16 %v406
        %v1169 = vunpack.c.h.b16 %v406
        %v1170 = vunpack.c.l.b16 %v407
        %v1171 = vunpack.c.l.b16 %v408
        %v1172 = vunpack.c.h.b16 %v408
        %v1173 = vunpack.c.l.b16 %v409
        %v1174 = vunpack.c.l.b16 %v410
        %v1175 = vunpack.c.h.b16 %v410
        %v1176 = vunpack.c.l.b16 %v411
        %v1177 = vunpack.c.l.b16 %v412
        %v1178 = vunpack.c.h.b16 %v412
        %v1179 = vunpack.c.l.b16 %v413
        %v1180 = vunpack.c.l.b16 %v414
        %v1181 = vunpack.c.h.b16 %v414
        %v1182 = vunpack.c.l.b16 %v415
        %v1183 = vunpack.c.l.b16 %v416
        %v1184 = vunpack.c.h.b16 %v416
        %v1185 = vunpack.c.l.b16 %v417
        %v1186 = vunpack.c.l.b16 %v418
        %v1187 = vunpack.c.h.b16 %v418
        %v1188 = vunpack.c.l.b16 %v419
        %v1189 = vunpack.c.l.b16 %v420
        %v1190 = vunpack.c.h.b16 %v420
        %v1191 = vunpack.c.l.b16 %v421
        %v1192 = vunpack.c.l.b16 %v422
        %v1193 = vunpack.c.h.b16 %v422
        %v1194 = vunpack.c.l.b16 %v423
        %v1195 = vunpack.c.l.b16 %v424
        %v1196 = vunpack.c.h.b16 %v424
        %v1197 = vunpack.c.l.b16 %v425
        %v1198 = vunpack.c.l.b16 %v426
        %v1199 = vunpack.c.h.b16 %v426
        %v1200 = vunpack.c.l.b16 %v427
        %v1201 = vunpack.c.l.b16 %v428
        %v1202 = vunpack.c.h.b16 %v428
        %v1203 = vunpack.c.l.b16 %v429
        %v1204 = vunpack.c.l.b16 %v430
        %v1205 = vunpack.c.h.b16 %v430
        %v1206 = vunpack.c.l.b16 %v431
        %v1207 = vunpack.c.l.b16 %v432
        %v1208 = vunpack.c.h.b16 %v432
        %v1209 = vunpack.c.l.b16 %v433
        %v1210 = vunpack.c.l.b16 %v434
        %v1211 = vunpack.c.h.b16 %v434
        %v1212 = vunpack.c.l.b16 %v435
        %v1213 = vpack.c.b16 %v1108, %v1105
        %v1214 = vpack.c.b16 %v1109, %v1106
        %v1215 = vpack.c.b16 %v1110, %v1107
        %v1216 = vpack.c.b16 %v1114, %v1111
        %v1217 = vpack.c.b16 %v1115, %v1112
        %v1218 = vpack.c.b16 %v1116, %v1113
        %v1219 = vpack.c.b16 %v1120, %v1117
        %v1220 = vpack.c.b16 %v1121, %v1118
        %v1221 = vpack.c.b16 %v1122, %v1119
        %v1222 = vpack.c.b16 %v1126, %v1123
        %v1223 = vpack.c.b16 %v1127, %v1124
        %v1224 = vpack.c.b16 %v1128, %v1125
        %v1225 = vpack.c.b16 %v1132, %v1129
        %v1226 = vpack.c.b16 %v1133, %v1130
        %v1227 = vpack.c.b16 %v1134, %v1131
        %v1228 = vpack.c.b16 %v1138, %v1135
        %v1229 = vpack.c.b16 %v1139, %v1136
        %v1230 = vpack.c.b16 %v1140, %v1137
        %v1231 = vpack.c.b16 %v1144, %v1141
        %v1232 = vpack.c.b16 %v1145, %v1142
        %v1233 = vpack.c.b16 %v1146, %v1143
        %v1234 = vpack.c.b16 %v1150, %v1147
        %v1235 = vpack.c.b16 %v1151, %v1148
        %v1236 = vpack.c.b16 %v1152, %v1149
        %v1237 = vpack.c.b16 %v1156, %v1153
        %v1238 = vpack.c.b16 %v1157, %v1154
        %v1239 = vpack.c.b16 %v1158, %v1155
        %v1240 = vpack.c.b16 %v1162, %v1159
        %v1241 = vpack.c.b16 %v1163, %v1160
        %v1242 = vpack.c.b16 %v1164, %v1161
        %v1243 = vpack.c.b16 %v1168, %v1165
        %v1244 = vpack.c.b16 %v1169, %v1166
        %v1245 = vpack.c.b16 %v1170, %v1167
        %v1246 = vpack.c.b16 %v1174, %v1171
        %v1247 = vpack.c.b16 %v1175, %v1172
        %v1248 = vpack.c.b16 %v1176, %v1173
        %v1249 = vpack.c.b16 %v1180, %v1177
        %v1250 = vpack.c.b16 %v1181, %v1178
        %v1251 = vpack.c.b16 %v1182, %v1179
        %v1252 = vpack.c.b16 %v1186, %v1183
        %v1253 = vpack.c.b16 %v1187, %v1184
        %v1254 = vpack.c.b16 %v1188, %v1185
        %v1255 = vpack.c.b16 %v1192, %v1189
        %v1256 = vpack.c.b16 %v1193, %v1190
        %v1257 = vpack.c.b16 %v1194, %v1191
        %v1258 = vpack.c.b16 %v1198, %v1195
        %v1259 = vpack.c.b16 %v1199, %v1196
        %v1260 = vpack.c.b16 %v1200, %v1197
        %v1261 = vpack.c.b16 %v1204, %v1201
        %v1262 = vpack.c.b16 %v1205, %v1202
        %v1263 = vpack.c.b16 %v1206, %v1203
        %v1264 = vpack.c.b16 %v1210, %v1207
        %v1265 = vpack.c.b16 %v1211, %v1208
        %v1266 = vpack.c.b16 %v1212, %v1209
        %v1321 = vsel %vm859, %v528, 0
        %1323 = vmatprep.subr.bf16.mxu0 %v1214
        %1324 = vmatpush1.bf16.msra.mxu0 %v1213
        %1325 = vmatprep.subr.bf16.mxu0 %v1217
        %1326 = vmatpush1.bf16.msra.mxu0 %v1216
        %1327 = vmatprep.subr.bf16.mxu0 %v1220
        %1328 = vmatpush1.bf16.msra.mxu0 %v1219
        %1329 = vmatprep.subr.bf16.mxu0 %v1223
        %1330 = vmatpush1.bf16.msra.mxu0 %v1222
        %1331 = vmatprep.subr.bf16.mxu0 %v1226
        %1332 = vmatpush1.bf16.msra.mxu0 %v1225
        %1333 = vmatprep.subr.bf16.mxu0 %v1229
        %1334 = vmatpush1.bf16.msra.mxu0 %v1228
        %1335 = vmatprep.subr.bf16.mxu0 %v1232
        %1336 = vmatpush1.bf16.msra.mxu0 %v1231
        %1337 = vmatprep.subr.bf16.mxu0 %v1235
        %1338 = vmatpush1.bf16.msra.mxu0 %v1234
        %1339 = vmatprep.subr.bf16.mxu0 %v1238
        %1340 = vmatpush1.bf16.msra.mxu0 %v1237
        %1341 = vmatprep.subr.bf16.mxu0 %v1241
        %1342 = vmatpush1.bf16.msra.mxu0 %v1240
        %1343 = vmatprep.subr.bf16.mxu0 %v1244
        %1344 = vmatpush1.bf16.msra.mxu0 %v1243
        %1345 = vmatprep.subr.bf16.mxu0 %v1247
        %1346 = vmatpush1.bf16.msra.mxu0 %v1246
        %1347 = vmatprep.subr.bf16.mxu0 %v1250
        %1348 = vmatpush1.bf16.msra.mxu0 %v1249
        %1349 = vmatprep.subr.bf16.mxu0 %v1253
        %1350 = vmatpush1.bf16.msra.mxu0 %v1252
        %1351 = vmatprep.subr.bf16.mxu0 %v1256
        %1352 = vmatpush1.bf16.msra.mxu0 %v1255
        %1353 = vmatprep.subr.bf16.mxu0 %v1259
        %1354 = vmatpush1.bf16.msra.mxu0 %v1258
        %1355 = vmatprep.mubr.bf16.mxu0 %v527
        %1356 = vmatmul.mubr.bf16.gmra.mrb[0].mxu0 %v526
        %v1357 = vpop.f32.mrb[0].mxu0
        %v1358 = vadd.f32 %v941, %v1357
        %v1359 = vpop.f32.mrb[0].mxu0
        %v1360 = vadd.f32 %v943, %v1359
        %v1361 = vpop.f32.mrb[0].mxu0
        %v1362 = vadd.f32 %v945, %v1361
        %v1363 = vpop.f32.mrb[0].mxu0
        %v1364 = vadd.f32 %v947, %v1363
        %1365 = vdwg.mxu0
        %1366 = vmatprep.subr.bf16.mxu0 %v1262
        %1367 = vmatpush1.bf16.msra.mxu0 %v1261
        %1368 = vmatprep.subr.bf16.mxu0 %v1265
        %1369 = vmatpush1.bf16.msra.mxu0 %v1264
        %1370 = vmatprep.subr.bf16.mxu0 0
        %1371 = vmatpush1.bf16.msra.mxu0 0
        %1372 = vmatprep.subr.bf16.mxu0 0
        %1373 = vmatpush1.bf16.msra.mxu0 0
        %1374 = vmatprep.subr.bf16.mxu0 0
        %1375 = vmatpush1.bf16.msra.mxu0 0
        %1376 = vmatprep.subr.bf16.mxu0 0
        %1377 = vmatpush1.bf16.msra.mxu0 0
        %1378 = vmatprep.subr.bf16.mxu0 0
        %1379 = vmatpush1.bf16.msra.mxu0 0
        %1380 = vmatprep.subr.bf16.mxu0 0
        %1381 = vmatpush1.bf16.msra.mxu0 0
        %1382 = vmatprep.subr.bf16.mxu0 0
        %1383 = vmatpush1.bf16.msra.mxu0 0
        %1384 = vmatprep.subr.bf16.mxu0 0
        %1385 = vmatpush1.bf16.msra.mxu0 0
        %1386 = vmatprep.subr.bf16.mxu0 0
        %1387 = vmatpush1.bf16.msra.mxu0 0
        %1388 = vmatprep.subr.bf16.mxu0 0
        %1389 = vmatpush1.bf16.msra.mxu0 0
        %1390 = vmatprep.subr.bf16.mxu0 0
        %1391 = vmatpush1.bf16.msra.mxu0 0
        %1392 = vmatprep.subr.bf16.mxu0 0
        %1393 = vmatpush1.bf16.msra.mxu0 0
        %1394 = vmatprep.subr.bf16.mxu0 0
        %1395 = vmatpush1.bf16.msra.mxu0 0
        %1396 = vmatprep.subr.bf16.mxu0 0
        %1397 = vmatpush1.bf16.msra.mxu0 0
        %1398 = vmatprep.mubr.bf16.mxu0 0
        %1399 = vmatmul.mubr.bf16.gmra.mrb[0].mxu0 %v1321
        %v1400 = vpop.f32.mrb[0].mxu0
        %v1401 = vadd.f32 %v1358, %v1400
        %v1402 = vpop.f32.mrb[0].mxu0
        %v1403 = vadd.f32 %v1360, %v1402
        %v1404 = vpop.f32.mrb[0].mxu0
        %v1405 = vadd.f32 %v1362, %v1404
        %v1406 = vpop.f32.mrb[0].mxu0
        %v1407 = vadd.f32 %v1364, %v1406
        %1408 = vdwg.mxu0
        %1409 = vmatprep.subr.bf16.mxu0 0
        %1410 = vmatpush1.bf16.msra.mxu0 %v1215
        %1411 = vmatprep.subr.bf16.mxu0 0
        %1412 = vmatpush1.bf16.msra.mxu0 %v1218
        %1413 = vmatprep.subr.bf16.mxu0 0
        %1414 = vmatpush1.bf16.msra.mxu0 %v1221
        %1415 = vmatprep.subr.bf16.mxu0 0
        %1416 = vmatpush1.bf16.msra.mxu0 %v1224
        %1417 = vmatprep.subr.bf16.mxu0 0
        %1418 = vmatpush1.bf16.msra.mxu0 %v1227
        %1419 = vmatprep.subr.bf16.mxu0 0
        %1420 = vmatpush1.bf16.msra.mxu0 %v1230
        %1421 = vmatprep.subr.bf16.mxu0 0
        %1422 = vmatpush1.bf16.msra.mxu0 %v1233
        %1423 = vmatprep.subr.bf16.mxu0 0
        %1424 = vmatpush1.bf16.msra.mxu0 %v1236
        %1425 = vmatprep.subr.bf16.mxu0 0
        %1426 = vmatpush1.bf16.msra.mxu0 %v1239
        %1427 = vmatprep.subr.bf16.mxu0 0
        %1428 = vmatpush1.bf16.msra.mxu0 %v1242
        %1429 = vmatprep.subr.bf16.mxu0 0
        %1430 = vmatpush1.bf16.msra.mxu0 %v1245
        %1431 = vmatprep.subr.bf16.mxu0 0
        %1432 = vmatpush1.bf16.msra.mxu0 %v1248
        %1433 = vmatprep.subr.bf16.mxu0 0
        %1434 = vmatpush1.bf16.msra.mxu0 %v1251
        %1435 = vmatprep.subr.bf16.mxu0 0
        %1436 = vmatpush1.bf16.msra.mxu0 %v1254
        %1437 = vmatprep.subr.bf16.mxu0 0
        %1438 = vmatpush1.bf16.msra.mxu0 %v1257
        %1439 = vmatprep.subr.bf16.mxu0 0
        %1440 = vmatpush1.bf16.msra.mxu0 %v1260
        %1441 = vmatprep.mubr.bf16.mxu0 %v527
        %1442 = vmatmul.mubr.bf16.gmra.mrb[0].mxu0 %v526
        %v1443 = vpop.f32.mrb[0].mxu0
        %v1444 = vadd.f32 %v1025, %v1443
        %v1445 = vpop.f32.mrb[0].mxu0
        %v1446 = vpop.f32.mrb[0].mxu0
        %v1447 = vadd.f32 %v1028, %v1446
        %v1448 = vpop.f32.mrb[0].mxu0
        %1449 = vdwg.mxu0
        %1450 = vmatprep.subr.bf16.mxu0 0
        %1451 = vmatpush1.bf16.msra.mxu0 %v1263
        %1452 = vmatprep.subr.bf16.mxu0 0
        %1453 = vmatpush1.bf16.msra.mxu0 %v1266
        %1454 = vmatprep.subr.bf16.mxu0 0
        %1455 = vmatpush1.bf16.msra.mxu0 0
        %1456 = vmatprep.subr.bf16.mxu0 0
        %1457 = vmatpush1.bf16.msra.mxu0 0
        %1458 = vmatprep.subr.bf16.mxu0 0
        %1459 = vmatpush1.bf16.msra.mxu0 0
        %1460 = vmatprep.subr.bf16.mxu0 0
        %1461 = vmatpush1.bf16.msra.mxu0 0
        %1462 = vmatprep.subr.bf16.mxu0 0
        %1463 = vmatpush1.bf16.msra.mxu0 0
        %1464 = vmatprep.subr.bf16.mxu0 0
        %1465 = vmatpush1.bf16.msra.mxu0 0
        %1466 = vmatprep.subr.bf16.mxu0 0
        %1467 = vmatpush1.bf16.msra.mxu0 0
        %1468 = vmatprep.subr.bf16.mxu0 0
        %1469 = vmatpush1.bf16.msra.mxu0 0
        %1470 = vmatprep.subr.bf16.mxu0 0
        %1471 = vmatpush1.bf16.msra.mxu0 0
        %1472 = vmatprep.subr.bf16.mxu0 0
        %1473 = vmatpush1.bf16.msra.mxu0 0
        %1474 = vmatprep.subr.bf16.mxu0 0
        %1475 = vmatpush1.bf16.msra.mxu0 0
        %1476 = vmatprep.subr.bf16.mxu0 0
        %1477 = vmatpush1.bf16.msra.mxu0 0
        %1478 = vmatprep.subr.bf16.mxu0 0
        %1479 = vmatpush1.bf16.msra.mxu0 0
        %1480 = vmatprep.subr.bf16.mxu0 0
        %1481 = vmatpush1.bf16.msra.mxu0 0
        %1482 = vmatprep.mubr.bf16.mxu0 0
        %1483 = vmatmul.mubr.bf16.gmra.mrb[0].mxu0 %v1321
        %v1484 = vpop.f32.mrb[0].mxu0
        %v1485 = vadd.f32 %v1444, %v1484
        %v1486 = vpop.f32.mrb[0].mxu0
        %v1487 = vpop.f32.mrb[0].mxu0
        %v1488 = vadd.f32 %v1447, %v1487
        %v1489 = vpop.f32.mrb[0].mxu0
        %1490 = vdwg.mxu0
        %v1491 = vld [vmem:[%s358] sm:$0xee]
        %v1492 = vld [vmem:[%s358 + $0x8] sm:$0xe]
        %s1493 = scalar_lea.vmem [#allocation3], 864
        %v1494 = vld [vmem:[%s1493] sm:$0xff]
        %v1495 = vld [vmem:[%s1493 + $0x8] sm:$0xf]
        %v1496 = vld [vmem:[%s1493 + $0xc] sm:$0xff]
        %v1497 = vld [vmem:[%s1493 + $0x14] sm:$0xf]
        %v1498 = vld [vmem:[%s1493 + $0x18] sm:$0xff]
        %v1499 = vld [vmem:[%s1493 + $0x20] sm:$0xf]
        %v1500 = vld [vmem:[%s1493 + $0x24] sm:$0xff]
        %v1501 = vld [vmem:[%s1493 + $0x2c] sm:$0xf]
        %v1502 = vld [vmem:[%s1493 + $0x30] sm:$0xff]
        %v1503 = vld [vmem:[%s1493 + $0x38] sm:$0xf]
        %v1504 = vld [vmem:[%s1493 + $0x3c] sm:$0xff]
        %v1505 = vld [vmem:[%s1493 + $0x44] sm:$0xf]
        %v1506 = vld [vmem:[%s1493 + $0x48] sm:$0xff]
        %v1507 = vld [vmem:[%s1493 + $0x50] sm:$0xf]
        %v1508 = vld [vmem:[%s1493 + $0x54] sm:$0xff]
        %v1509 = vld [vmem:[%s1493 + $0x5c] sm:$0xf]
        %v1510 = vld [vmem:[%s1493 + $0x60] sm:$0xff]
        %v1511 = vld [vmem:[%s1493 + $0x68] sm:$0xf]
        %v1512 = vld [vmem:[%s1493 + $0x6c] sm:$0xff]
        %v1513 = vld [vmem:[%s1493 + $0x74] sm:$0xf]
        %v1514 = vld [vmem:[%s1493 + $0x78] sm:$0xff]
        %v1515 = vld [vmem:[%s1493 + $0x80] sm:$0xf]
        %v1516 = vld [vmem:[%s1493 + $0x84] sm:$0xff]
        %v1517 = vld [vmem:[%s1493 + $0x8c] sm:$0xf]
        %v1518 = vld [vmem:[%s1493 + $0x90] sm:$0xff]
        %v1519 = vld [vmem:[%s1493 + $0x98] sm:$0xf]
        %v1520 = vld [vmem:[%s1493 + $0x9c] sm:$0xff]
        %v1521 = vld [vmem:[%s1493 + $0xa4] sm:$0xf]
        %v1522 = vld [vmem:[%s1493 + $0xa8] sm:$0xff]
        %v1523 = vld [vmem:[%s1493 + $0xb0] sm:$0xf]
        %v1524 = vld [vmem:[%s1493 + $0xb4] sm:$0xff]
        %v1525 = vld [vmem:[%s1493 + $0xbc] sm:$0xf]
        %v1526 = vld [vmem:[%s1493 + $0xc0] sm:$0xff]
        %v1527 = vld [vmem:[%s1493 + $0xc8] sm:$0xf]
        %v1528 = vld [vmem:[%s1493 + $0xcc] sm:$0xff]
        %v1529 = vld [vmem:[%s1493 + $0xd4] sm:$0xf]
        %v1530 = vld [vmem:[%s1493 + $0xd8] sm:$0xff]
        %v1531 = vld [vmem:[%s1493 + $0xe0] sm:$0xf]
        %v1532 = vld [vmem:[%s1493 + $0xe4] sm:$0xff]
        %v1533 = vld [vmem:[%s1493 + $0xec] sm:$0xf]
        %v1534 = vld [vmem:[%s1493 + $0xf0] sm:$0xff]
        %v1535 = vld [vmem:[%s1493 + $0xf8] sm:$0xf]
        %v1536 = vld [vmem:[%s1493 + $0xfc] sm:$0xff]
        %v1537 = vld [vmem:[%s1493 + $0x104] sm:$0xf]
        %v1538 = vld [vmem:[%s1493 + $0x108] sm:$0xff]
        %v1539 = vld [vmem:[%s1493 + $0x110] sm:$0xf]
        %v1540 = vld [vmem:[%s1493 + $0x114] sm:$0xff]
        %v1541 = vld [vmem:[%s1493 + $0x11c] sm:$0xf]
        %v1542 = vld [vmem:[%s1493 + $0x120] sm:$0xff]
        %v1543 = vld [vmem:[%s1493 + $0x128] sm:$0xf]
        %v1544 = vld [vmem:[%s1493 + $0x12c] sm:$0xff]
        %v1545 = vld [vmem:[%s1493 + $0x134] sm:$0xf]
        %v1546 = vld [vmem:[%s1493 + $0x138] sm:$0xff]
        %v1547 = vld [vmem:[%s1493 + $0x140] sm:$0xf]
        %v1548 = vld [vmem:[%s1493 + $0x144] sm:$0xff]
        %v1549 = vld [vmem:[%s1493 + $0x14c] sm:$0xf]
        %v1550 = vld [vmem:[%s1493 + $0x150] sm:$0xff]
        %v1551 = vld [vmem:[%s1493 + $0x158] sm:$0xf]
        %v1552 = vld [vmem:[%s1493 + $0x15c] sm:$0xff]
        %v1553 = vld [vmem:[%s1493 + $0x164] sm:$0xf]
        %v1554 = vld [vmem:[%s1493 + $0x168] sm:$0xff]
        %v1555 = vld [vmem:[%s1493 + $0x170] sm:$0xf]
        %v1556 = vld [vmem:[%s1493 + $0x174] sm:$0xff]
        %v1557 = vld [vmem:[%s1493 + $0x17c] sm:$0xf]
        %v1558 = vld [vmem:[%s1493 + $0x180] sm:$0xff]
        %v1559 = vld [vmem:[%s1493 + $0x188] sm:$0xf]
        %v1560 = vld [vmem:[%s1493 + $0x18c] sm:$0xff]
        %v1561 = vld [vmem:[%s1493 + $0x194] sm:$0xf]
        %v1562 = vld [vmem:[%s1493 + $0x198] sm:$0xff]
        %v1563 = vld [vmem:[%s1493 + $0x1a0] sm:$0xf]
        %v1564 = vld [vmem:[%s1493 + $0x1a4] sm:$0xff]
        %v1565 = vld [vmem:[%s1493 + $0x1ac] sm:$0xf]
        %v1568 = vunpack.c.l.b16 %v1491
        %v1569 = vunpack.c.h.b16 %v1491
        %v1570 = vunpack.c.l.b16 %v1492
        %v1571 = vpack.c.b16 %v520, %v1568
        %v1572 = vpack.c.b16 %v521, %v1569
        %v1573 = vpack.c.b16 %v522, %v1570
        %vm1574 = vcmask 1046528
        %v1575 = vrot.slane %v1571, 1
        %v1576 = vrot.slane %v529, 1
        %v1577 = vsel %vm1574, %v1575, %v1576
        %v1578 = vrot.slane %v1572, 1
        %v1579 = vrot.slane %v530, 1
        %v1580 = vsel %vm1574, %v1578, %v1579
        %v1581 = vrot.slane %v1573, 1
        %v1582 = vrot.slane %v531, 1
        %v1583 = vsel %vm1574, %v1581, %v1582
        %v1658 = vunpack.c.l.b16 %v1494
        %v1659 = vunpack.c.h.b16 %v1494
        %v1660 = vunpack.c.l.b16 %v1495
        %v1661 = vunpack.c.l.b16 %v1496
        %v1662 = vunpack.c.h.b16 %v1496
        %v1663 = vunpack.c.l.b16 %v1497
        %v1664 = vunpack.c.l.b16 %v1498
        %v1665 = vunpack.c.h.b16 %v1498
        %v1666 = vunpack.c.l.b16 %v1499
        %v1667 = vunpack.c.l.b16 %v1500
        %v1668 = vunpack.c.h.b16 %v1500
        %v1669 = vunpack.c.l.b16 %v1501
        %v1670 = vunpack.c.l.b16 %v1502
        %v1671 = vunpack.c.h.b16 %v1502
        %v1672 = vunpack.c.l.b16 %v1503
        %v1673 = vunpack.c.l.b16 %v1504
        %v1674 = vunpack.c.h.b16 %v1504
        %v1675 = vunpack.c.l.b16 %v1505
        %v1676 = vunpack.c.l.b16 %v1506
        %v1677 = vunpack.c.h.b16 %v1506
        %v1678 = vunpack.c.l.b16 %v1507
        %v1679 = vunpack.c.l.b16 %v1508
        %v1680 = vunpack.c.h.b16 %v1508
        %v1681 = vunpack.c.l.b16 %v1509
        %v1682 = vunpack.c.l.b16 %v1510
        %v1683 = vunpack.c.h.b16 %v1510
        %v1684 = vunpack.c.l.b16 %v1511
        %v1685 = vunpack.c.l.b16 %v1512
        %v1686 = vunpack.c.h.b16 %v1512
        %v1687 = vunpack.c.l.b16 %v1513
        %v1688 = vunpack.c.l.b16 %v1514
        %v1689 = vunpack.c.h.b16 %v1514
        %v1690 = vunpack.c.l.b16 %v1515
        %v1691 = vunpack.c.l.b16 %v1516
        %v1692 = vunpack.c.h.b16 %v1516
        %v1693 = vunpack.c.l.b16 %v1517
        %v1694 = vunpack.c.l.b16 %v1518
        %v1695 = vunpack.c.h.b16 %v1518
        %v1696 = vunpack.c.l.b16 %v1519
        %v1697 = vunpack.c.l.b16 %v1520
        %v1698 = vunpack.c.h.b16 %v1520
        %v1699 = vunpack.c.l.b16 %v1521
        %v1700 = vunpack.c.l.b16 %v1522
        %v1701 = vunpack.c.h.b16 %v1522
        %v1702 = vunpack.c.l.b16 %v1523
        %v1703 = vunpack.c.l.b16 %v1524
        %v1704 = vunpack.c.h.b16 %v1524
        %v1705 = vunpack.c.l.b16 %v1525
        %v1706 = vunpack.c.l.b16 %v1526
        %v1707 = vunpack.c.h.b16 %v1526
        %v1708 = vunpack.c.l.b16 %v1527
        %v1709 = vunpack.c.l.b16 %v1528
        %v1710 = vunpack.c.h.b16 %v1528
        %v1711 = vunpack.c.l.b16 %v1529
        %v1712 = vunpack.c.l.b16 %v1530
        %v1713 = vunpack.c.h.b16 %v1530
        %v1714 = vunpack.c.l.b16 %v1531
        %v1715 = vunpack.c.l.b16 %v1532
        %v1716 = vunpack.c.h.b16 %v1532
        %v1717 = vunpack.c.l.b16 %v1533
        %v1718 = vunpack.c.l.b16 %v1534
        %v1719 = vunpack.c.h.b16 %v1534
        %v1720 = vunpack.c.l.b16 %v1535
        %v1721 = vunpack.c.l.b16 %v1536
        %v1722 = vunpack.c.h.b16 %v1536
        %v1723 = vunpack.c.l.b16 %v1537
        %v1724 = vunpack.c.l.b16 %v1538
        %v1725 = vunpack.c.h.b16 %v1538
        %v1726 = vunpack.c.l.b16 %v1539
        %v1727 = vunpack.c.l.b16 %v1540
        %v1728 = vunpack.c.h.b16 %v1540
        %v1729 = vunpack.c.l.b16 %v1541
        %v1730 = vunpack.c.l.b16 %v1542
        %v1731 = vunpack.c.h.b16 %v1542
        %v1732 = vunpack.c.l.b16 %v1543
        %v1733 = vunpack.c.l.b16 %v1544
        %v1734 = vunpack.c.h.b16 %v1544
        %v1735 = vunpack.c.l.b16 %v1545
        %v1736 = vunpack.c.l.b16 %v1546
        %v1737 = vunpack.c.h.b16 %v1546
        %v1738 = vunpack.c.l.b16 %v1547
        %v1739 = vunpack.c.l.b16 %v1548
        %v1740 = vunpack.c.h.b16 %v1548
        %v1741 = vunpack.c.l.b16 %v1549
        %v1742 = vunpack.c.l.b16 %v1550
        %v1743 = vunpack.c.h.b16 %v1550
        %v1744 = vunpack.c.l.b16 %v1551
        %v1745 = vunpack.c.l.b16 %v1552
        %v1746 = vunpack.c.h.b16 %v1552
        %v1747 = vunpack.c.l.b16 %v1553
        %v1748 = vunpack.c.l.b16 %v1554
        %v1749 = vunpack.c.h.b16 %v1554
        %v1750 = vunpack.c.l.b16 %v1555
        %v1751 = vunpack.c.l.b16 %v1556
        %v1752 = vunpack.c.h.b16 %v1556
        %v1753 = vunpack.c.l.b16 %v1557
        %v1754 = vunpack.c.l.b16 %v1558
        %v1755 = vunpack.c.h.b16 %v1558
        %v1756 = vunpack.c.l.b16 %v1559
        %v1757 = vunpack.c.l.b16 %v1560
        %v1758 = vunpack.c.h.b16 %v1560
        %v1759 = vunpack.c.l.b16 %v1561
        %v1760 = vunpack.c.l.b16 %v1562
        %v1761 = vunpack.c.h.b16 %v1562
        %v1762 = vunpack.c.l.b16 %v1563
        %v1763 = vunpack.c.l.b16 %v1564
        %v1764 = vunpack.c.h.b16 %v1564
        %v1765 = vunpack.c.l.b16 %v1565
        %v1766 = vpack.c.b16 %v1661, %v1658
        %v1767 = vpack.c.b16 %v1662, %v1659
        %v1768 = vpack.c.b16 %v1663, %v1660
        %v1769 = vpack.c.b16 %v1667, %v1664
        %v1770 = vpack.c.b16 %v1668, %v1665
        %v1771 = vpack.c.b16 %v1669, %v1666
        %v1772 = vpack.c.b16 %v1673, %v1670
        %v1773 = vpack.c.b16 %v1674, %v1671
        %v1774 = vpack.c.b16 %v1675, %v1672
        %v1775 = vpack.c.b16 %v1679, %v1676
        %v1776 = vpack.c.b16 %v1680, %v1677
        %v1777 = vpack.c.b16 %v1681, %v1678
        %v1778 = vpack.c.b16 %v1685, %v1682
        %v1779 = vpack.c.b16 %v1686, %v1683
        %v1780 = vpack.c.b16 %v1687, %v1684
        %v1781 = vpack.c.b16 %v1691, %v1688
        %v1782 = vpack.c.b16 %v1692, %v1689
        %v1783 = vpack.c.b16 %v1693, %v1690
        %v1784 = vpack.c.b16 %v1697, %v1694
        %v1785 = vpack.c.b16 %v1698, %v1695
        %v1786 = vpack.c.b16 %v1699, %v1696
        %v1787 = vpack.c.b16 %v1703, %v1700
        %v1788 = vpack.c.b16 %v1704, %v1701
        %v1789 = vpack.c.b16 %v1705, %v1702
        %v1790 = vpack.c.b16 %v1709, %v1706
        %v1791 = vpack.c.b16 %v1710, %v1707
        %v1792 = vpack.c.b16 %v1711, %v1708
        %v1793 = vpack.c.b16 %v1715, %v1712
        %v1794 = vpack.c.b16 %v1716, %v1713
        %v1795 = vpack.c.b16 %v1717, %v1714
        %v1796 = vpack.c.b16 %v1721, %v1718
        %v1797 = vpack.c.b16 %v1722, %v1719
        %v1798 = vpack.c.b16 %v1723, %v1720
        %v1799 = vpack.c.b16 %v1727, %v1724
        %v1800 = vpack.c.b16 %v1728, %v1725
        %v1801 = vpack.c.b16 %v1729, %v1726
        %v1802 = vpack.c.b16 %v1733, %v1730
        %v1803 = vpack.c.b16 %v1734, %v1731
        %v1804 = vpack.c.b16 %v1735, %v1732
        %v1805 = vpack.c.b16 %v1739, %v1736
        %v1806 = vpack.c.b16 %v1740, %v1737
        %v1807 = vpack.c.b16 %v1741, %v1738
        %v1808 = vpack.c.b16 %v1745, %v1742
        %v1809 = vpack.c.b16 %v1746, %v1743
        %v1810 = vpack.c.b16 %v1747, %v1744
        %v1811 = vpack.c.b16 %v1751, %v1748
        %v1812 = vpack.c.b16 %v1752, %v1749
        %v1813 = vpack.c.b16 %v1753, %v1750
        %v1814 = vpack.c.b16 %v1757, %v1754
        %v1815 = vpack.c.b16 %v1758, %v1755
        %v1816 = vpack.c.b16 %v1759, %v1756
        %v1817 = vpack.c.b16 %v1763, %v1760
        %v1818 = vpack.c.b16 %v1764, %v1761
        %v1819 = vpack.c.b16 %v1765, %v1762
        %v1875 = vsel %vm859, %v1583, 0
        %1877 = vmatprep.subr.bf16.mxu0 %v1767
        %1878 = vmatpush1.bf16.msra.mxu0 %v1766
        %1879 = vmatprep.subr.bf16.mxu0 %v1770
        %1880 = vmatpush1.bf16.msra.mxu0 %v1769
        %1881 = vmatprep.subr.bf16.mxu0 %v1773
        %1882 = vmatpush1.bf16.msra.mxu0 %v1772
        %1883 = vmatprep.subr.bf16.mxu0 %v1776
        %1884 = vmatpush1.bf16.msra.mxu0 %v1775
        %1885 = vmatprep.subr.bf16.mxu0 %v1779
        %1886 = vmatpush1.bf16.msra.mxu0 %v1778
        %1887 = vmatprep.subr.bf16.mxu0 %v1782
        %1888 = vmatpush1.bf16.msra.mxu0 %v1781
        %1889 = vmatprep.subr.bf16.mxu0 %v1785
        %1890 = vmatpush1.bf16.msra.mxu0 %v1784
        %1891 = vmatprep.subr.bf16.mxu0 %v1788
        %1892 = vmatpush1.bf16.msra.mxu0 %v1787
        %1893 = vmatprep.subr.bf16.mxu0 %v1791
        %1894 = vmatpush1.bf16.msra.mxu0 %v1790
        %1895 = vmatprep.subr.bf16.mxu0 %v1794
        %1896 = vmatpush1.bf16.msra.mxu0 %v1793
        %1897 = vmatprep.subr.bf16.mxu0 %v1797
        %1898 = vmatpush1.bf16.msra.mxu0 %v1796
        %1899 = vmatprep.subr.bf16.mxu0 %v1800
        %1900 = vmatpush1.bf16.msra.mxu0 %v1799
        %1901 = vmatprep.subr.bf16.mxu0 %v1803
        %1902 = vmatpush1.bf16.msra.mxu0 %v1802
        %1903 = vmatprep.subr.bf16.mxu0 %v1806
        %1904 = vmatpush1.bf16.msra.mxu0 %v1805
        %1905 = vmatprep.subr.bf16.mxu0 %v1809
        %1906 = vmatpush1.bf16.msra.mxu0 %v1808
        %1907 = vmatprep.subr.bf16.mxu0 %v1812
        %1908 = vmatpush1.bf16.msra.mxu0 %v1811
        %1909 = vmatprep.mubr.bf16.mxu0 %v1580
        %1910 = vmatmul.mubr.bf16.gmra.mrb[0].mxu0 %v1577
        %v1911 = vpop.f32.mrb[0].mxu0
        %v1912 = vadd.f32 0.0, %v1911
        %v1913 = vpop.f32.mrb[0].mxu0
        %v1914 = vadd.f32 0.0, %v1913
        %v1915 = vpop.f32.mrb[0].mxu0
        %v1916 = vadd.f32 0.0, %v1915
        %v1917 = vpop.f32.mrb[0].mxu0
        %v1918 = vadd.f32 0.0, %v1917
        %1919 = vdwg.mxu0
        %1920 = vmatprep.subr.bf16.mxu0 %v1815
        %1921 = vmatpush1.bf16.msra.mxu0 %v1814
        %1922 = vmatprep.subr.bf16.mxu0 %v1818
        %1923 = vmatpush1.bf16.msra.mxu0 %v1817
        %1924 = vmatprep.subr.bf16.mxu0 0
        %1925 = vmatpush1.bf16.msra.mxu0 0
        %1926 = vmatprep.subr.bf16.mxu0 0
        %1927 = vmatpush1.bf16.msra.mxu0 0
        %1928 = vmatprep.subr.bf16.mxu0 0
        %1929 = vmatpush1.bf16.msra.mxu0 0
        %1930 = vmatprep.subr.bf16.mxu0 0
        %1931 = vmatpush1.bf16.msra.mxu0 0
        %1932 = vmatprep.subr.bf16.mxu0 0
        %1933 = vmatpush1.bf16.msra.mxu0 0
        %1934 = vmatprep.subr.bf16.mxu0 0
        %1935 = vmatpush1.bf16.msra.mxu0 0
        %1936 = vmatprep.subr.bf16.mxu0 0
        %1937 = vmatpush1.bf16.msra.mxu0 0
        %1938 = vmatprep.subr.bf16.mxu0 0
        %1939 = vmatpush1.bf16.msra.mxu0 0
        %1940 = vmatprep.subr.bf16.mxu0 0
        %1941 = vmatpush1.bf16.msra.mxu0 0
        %1942 = vmatprep.subr.bf16.mxu0 0
        %1943 = vmatpush1.bf16.msra.mxu0 0
        %1944 = vmatprep.subr.bf16.mxu0 0
        %1945 = vmatpush1.bf16.msra.mxu0 0
        %1946 = vmatprep.subr.bf16.mxu0 0
        %1947 = vmatpush1.bf16.msra.mxu0 0
        %1948 = vmatprep.subr.bf16.mxu0 0
        %1949 = vmatpush1.bf16.msra.mxu0 0
        %1950 = vmatprep.subr.bf16.mxu0 0
        %1951 = vmatpush1.bf16.msra.mxu0 0
        %1952 = vmatprep.mubr.bf16.mxu0 0
        %1953 = vmatmul.mubr.bf16.gmra.mrb[0].mxu0 %v1875
        %v1954 = vpop.f32.mrb[0].mxu0
        %v1955 = vadd.f32 %v1912, %v1954
        %v1956 = vpop.f32.mrb[0].mxu0
        %v1957 = vadd.f32 %v1914, %v1956
        %v1958 = vpop.f32.mrb[0].mxu0
        %v1959 = vadd.f32 %v1916, %v1958
        %v1960 = vpop.f32.mrb[0].mxu0
        %v1961 = vadd.f32 %v1918, %v1960
        %1962 = vdwg.mxu0
        %1963 = vmatprep.subr.bf16.mxu0 0
        %1964 = vmatpush1.bf16.msra.mxu0 %v1768
        %1965 = vmatprep.subr.bf16.mxu0 0
        %1966 = vmatpush1.bf16.msra.mxu0 %v1771
        %1967 = vmatprep.subr.bf16.mxu0 0
        %1968 = vmatpush1.bf16.msra.mxu0 %v1774
        %1969 = vmatprep.subr.bf16.mxu0 0
        %1970 = vmatpush1.bf16.msra.mxu0 %v1777
        %1971 = vmatprep.subr.bf16.mxu0 0
        %1972 = vmatpush1.bf16.msra.mxu0 %v1780
        %1973 = vmatprep.subr.bf16.mxu0 0
        %1974 = vmatpush1.bf16.msra.mxu0 %v1783
        %1975 = vmatprep.subr.bf16.mxu0 0
        %1976 = vmatpush1.bf16.msra.mxu0 %v1786
        %1977 = vmatprep.subr.bf16.mxu0 0
        %1978 = vmatpush1.bf16.msra.mxu0 %v1789
        %1979 = vmatprep.subr.bf16.mxu0 0
        %1980 = vmatpush1.bf16.msra.mxu0 %v1792
        %1981 = vmatprep.subr.bf16.mxu0 0
        %1982 = vmatpush1.bf16.msra.mxu0 %v1795
        %1983 = vmatprep.subr.bf16.mxu0 0
        %1984 = vmatpush1.bf16.msra.mxu0 %v1798
        %1985 = vmatprep.subr.bf16.mxu0 0
        %1986 = vmatpush1.bf16.msra.mxu0 %v1801
        %1987 = vmatprep.subr.bf16.mxu0 0
        %1988 = vmatpush1.bf16.msra.mxu0 %v1804
        %1989 = vmatprep.subr.bf16.mxu0 0
        %1990 = vmatpush1.bf16.msra.mxu0 %v1807
        %1991 = vmatprep.subr.bf16.mxu0 0
        %1992 = vmatpush1.bf16.msra.mxu0 %v1810
        %1993 = vmatprep.subr.bf16.mxu0 0
        %1994 = vmatpush1.bf16.msra.mxu0 %v1813
        %1995 = vmatprep.mubr.bf16.mxu0 %v1580
        %1996 = vmatmul.mubr.bf16.gmra.mrb[0].mxu0 %v1577
        %v1997 = vpop.f32.mrb[0].mxu0
        %v1998 = vadd.f32 0.0, %v1997
        %v1999 = vpop.f32.mrb[0].mxu0
        %v2000 = vpop.f32.mrb[0].mxu0
        %v2001 = vadd.f32 0.0, %v2000
        %v2002 = vpop.f32.mrb[0].mxu0
        %2003 = vdwg.mxu0
        %2004 = vmatprep.subr.bf16.mxu0 0
        %2005 = vmatpush1.bf16.msra.mxu0 %v1816
        %2006 = vmatprep.subr.bf16.mxu0 0
        %2007 = vmatpush1.bf16.msra.mxu0 %v1819
        %2008 = vmatprep.subr.bf16.mxu0 0
        %2009 = vmatpush1.bf16.msra.mxu0 0
        %2010 = vmatprep.subr.bf16.mxu0 0
        %2011 = vmatpush1.bf16.msra.mxu0 0
        %2012 = vmatprep.subr.bf16.mxu0 0
        %2013 = vmatpush1.bf16.msra.mxu0 0
        %2014 = vmatprep.subr.bf16.mxu0 0
        %2015 = vmatpush1.bf16.msra.mxu0 0
        %2016 = vmatprep.subr.bf16.mxu0 0
        %2017 = vmatpush1.bf16.msra.mxu0 0
        %2018 = vmatprep.subr.bf16.mxu0 0
        %2019 = vmatpush1.bf16.msra.mxu0 0
        %2020 = vmatprep.subr.bf16.mxu0 0
        %2021 = vmatpush1.bf16.msra.mxu0 0
        %2022 = vmatprep.subr.bf16.mxu0 0
        %2023 = vmatpush1.bf16.msra.mxu0 0
        %2024 = vmatprep.subr.bf16.mxu0 0
        %2025 = vmatpush1.bf16.msra.mxu0 0
        %2026 = vmatprep.subr.bf16.mxu0 0
        %2027 = vmatpush1.bf16.msra.mxu0 0
        %2028 = vmatprep.subr.bf16.mxu0 0
        %2029 = vmatpush1.bf16.msra.mxu0 0
        %2030 = vmatprep.subr.bf16.mxu0 0
        %2031 = vmatpush1.bf16.msra.mxu0 0
        %2032 = vmatprep.subr.bf16.mxu0 0
        %2033 = vmatpush1.bf16.msra.mxu0 0
        %2034 = vmatprep.subr.bf16.mxu0 0
        %2035 = vmatpush1.bf16.msra.mxu0 0
        %2036 = vmatprep.mubr.bf16.mxu0 0
        %2037 = vmatmul.mubr.bf16.gmra.mrb[0].mxu0 %v1875
        %v2038 = vpop.f32.mrb[0].mxu0
        %v2039 = vadd.f32 %v1998, %v2038
        %v2040 = vpop.f32.mrb[0].mxu0
        %v2041 = vpop.f32.mrb[0].mxu0
        %v2042 = vadd.f32 %v2001, %v2041
        %v2043 = vpop.f32.mrb[0].mxu0
        %2044 = vdwg.mxu0
        %v2045 = vadd.f32 %v1401, %v1955
        %v2046 = vadd.f32 %v1403, %v1957
        %v2047 = vadd.f32 %v1485, %v2039
        %v2048 = vadd.f32 %v1405, %v1959
        %v2049 = vadd.f32 %v1407, %v1961
        %v2050 = vadd.f32 %v1488, %v2042
        %v2051 = vld [vmem:[#allocation6] sm:$0x7]
        %v2053 = vlaneseq
        %v2054 = vshrl.u32 %v2053, 7
        %v2055 = vsub.s32 0, %v2054
        %v2056 = vrot.slane %v2051, %v2055
        %v2057 = vlaneseq
        %v2058 = vshrl.u32 %v2057, 7
        %v2059 = vsub.s32 1, %v2058
        %v2060 = vrot.slane %v2051, %v2059
        %v2061 = vlaneseq
        %v2062 = vshrl.u32 %v2061, 7
        %v2063 = vsub.s32 2, %v2062
        %v2064 = vrot.slane %v2051, %v2063
        %v2068 = vadd.f32 %v2045, %v2056
        %v2069 = vadd.f32 %v2046, %v2060
        %v2070 = vadd.f32 %v2047, %v2064
        %v2071 = vadd.f32 %v2048, %v2056
        %v2072 = vadd.f32 %v2049, %v2060
        %v2073 = vadd.f32 %v2050, %v2064
        %vm2074 = vcmask 1040384
        %vm2075 = vsmask.f32 256
        %vm2076 = vmand %vm2074, %vm2075
        %vm2077 = vcmask 1044484
        %vm2078 = vsmask.f32 4352
        %vm2079 = vmand %vm2077, %vm2078
        %vm2080 = vmor %vm2079, %vm2076
        %v2081 = vld [vmem:[#allocation2] sm:$0x11]
        %v2082 = vsel %vm2080, 0, %v2081
        %2083 = vst [vmem:[#allocation2] sm:$0x11] %v2082
        %vm2084 = vcmask 253952
        %vm2085 = vmand %vm2084, %vm2075
        %v2086 = vld [vmem:[#allocation2 + $0x8] sm:$0x1]
        %v2087 = vsel %vm2085, 0, %v2086
        %2088 = vst [vmem:[#allocation2 + $0x8] sm:$0x1] %v2087
        %vm2089 = vsmask.f32 7938
        %vm2090 = vmand %vm2074, %vm2089
        %vm2091 = vsmask.f32 7954
        %vm2092 = vmand %vm2077, %vm2091
        %vm2093 = vmor %vm2092, %vm2090
        %v2094 = vld [vmem:[#allocation2 + $0x18] sm:$0x11]
        %v2095 = vsel %vm2093, 0, %v2094
        %2096 = vst [vmem:[#allocation2 + $0x18] sm:$0x11] %v2095
        %vm2097 = vmand %vm2084, %vm2089
        %v2098 = vld [vmem:[#allocation2 + $0x20] sm:$0x1]
        %v2099 = vsel %vm2097, 0, %v2098
        %2100 = vst [vmem:[#allocation2 + $0x20] sm:$0x1] %v2099
        %v2101 = vpack.c.bf16 %v2071, %v2068
        %v2102 = vpack.c.bf16 %v2072, %v2069
        %v2103 = vpack.c.bf16 %v2073, %v2070
        %v2107 = vunpack.c.l.b16 %v2101
        %v2108 = vunpack.c.l.b16 %v2102
        %v2109 = vunpack.c.l.b16 %v2103
        %v2110 = vunpack.c.h.b16 %v2101
        %v2111 = vunpack.c.h.b16 %v2102
        %v2112 = vunpack.c.h.b16 %v2103
        %v2113 = vpack.c.b16 %v2108, %v2107
        %v2114 = vpack.c.b16 %v2109, %v2109
        %v2115 = vpack.c.b16 %v2111, %v2110
        %v2116 = vpack.c.b16 %v2112, %v2112
        %vm2117 = vsmask.f32 4368
        %vm2118 = vmor %vm2075, %vm2117
        %v2120 = vshrl.u32 %v2113, 16
        %v2122 = vrot.slane %v2120, 7
        %v2123 = vshll.u32 %v2113, 16
        %v2125 = vor.u32 %v2122, %v2123
        %v2127 = vshrl.u32 %v2114, 16
        %v2129 = vrot.slane %v2127, 7
        %v2130 = vshll.u32 %v2114, 16
        %v2132 = vor.u32 %v2129, %v2130
        %v2133 = vrot.slane %v2122, 4
        %v2135 = vshrl.u32 %v2115, 16
        %v2137 = vrot.slane %v2135, 7
        %v2138 = vshll.u32 %v2115, 16
        %v2140 = vor.u32 %v2137, %v2138
        %v2141 = vsel %vm2118, %v2133, %v2140
        %v2142 = vrot.slane %v2129, 4
        %v2144 = vshrl.u32 %v2116, 16
        %v2146 = vrot.slane %v2144, 7
        %v2147 = vshll.u32 %v2116, 16
        %v2149 = vor.u32 %v2146, %v2147
        %v2150 = vsel %vm2118, %v2142, %v2149
        %v2151 = vrot.slane %v2137, 4
        %v2152 = vrot.slane %v2146, 4
        %vm2159 = vcmask 1043456
        %vm2160 = vmand %vm2159, %vm2089
        %vm2161 = vcmask 1047556
        %vm2162 = vmand %vm2161, %vm2091
        %vm2163 = vmor %vm2162, %vm2160
        %v2164 = vld [vmem:[#allocation2] sm:$0xff]
        %v2165 = vsel %vm2163, %v2125, %v2164
        %2166 = vst [vmem:[#allocation2] sm:$0xff] %v2165
        %vm2167 = vcmask 257024
        %vm2168 = vmand %vm2167, %vm2089
        %v2169 = vld [vmem:[#allocation2 + $0x8] sm:$0xf]
        %v2170 = vsel %vm2168, %v2132, %v2169
        %2171 = vst [vmem:[#allocation2 + $0x8] sm:$0xf] %v2170
        %2172 = vst [vmem:[#allocation2 + $0xc] sm:$0xff] %v2141
        %vm2173 = vcmask 257024
        %2174 = vst.msk [vmem:[#allocation2 + $0x14] sm:$0xf] %vm2173, %v2150
        %v2175 = vld [vmem:[#allocation2 + $0x18] sm:$0x11]
        %v2176 = vsel %vm2080, %v2151, %v2175
        %2177 = vst [vmem:[#allocation2 + $0x18] sm:$0x11] %v2176
        %v2178 = vld [vmem:[#allocation2 + $0x20] sm:$0x1]
        %v2179 = vsel %vm2085, %v2152, %v2178
        %2180 = vst [vmem:[#allocation2 + $0x20] sm:$0x1] %v2179
        %v2181 = vld [vmem:[#allocation2] sm:$0xff]
        %v2182 = vld [vmem:[#allocation2 + $0x8] sm:$0xf]
        %v2183 = vld [vmem:[#allocation2 + $0xc] sm:$0xff]
        %v2184 = vld [vmem:[#allocation2 + $0x14] sm:$0xf]
        %v2185 = vld [vmem:[#allocation8] sm:$0xff]
        %v2186 = vld [vmem:[#allocation8 + $0x8] sm:$0xff]
        %v2187 = vld [vmem:[#allocation8 + $0x10] sm:$0xf]
        %v2188 = vld [vmem:[#allocation8 + $0x14] sm:$0xff]
        %v2189 = vld [vmem:[#allocation8 + $0x1c] sm:$0xff]
        %v2190 = vld [vmem:[#allocation8 + $0x24] sm:$0xf]
        %v2191 = vld [vmem:[#allocation8 + $0x28] sm:$0xff]
        %v2192 = vld [vmem:[#allocation8 + $0x30] sm:$0xff]
        %v2193 = vld [vmem:[#allocation8 + $0x38] sm:$0xf]
        %v2194 = vld [vmem:[#allocation8 + $0x3c] sm:$0xff]
        %v2195 = vld [vmem:[#allocation8 + $0x44] sm:$0xff]
        %v2196 = vld [vmem:[#allocation8 + $0x4c] sm:$0xf]
        %v2197 = vld [vmem:[#allocation8 + $0x50] sm:$0xff]
        %v2198 = vld [vmem:[#allocation8 + $0x58] sm:$0xff]
        %v2199 = vld [vmem:[#allocation8 + $0x60] sm:$0xf]
        %v2200 = vld [vmem:[#allocation8 + $0x64] sm:$0xff]
        %v2201 = vld [vmem:[#allocation8 + $0x6c] sm:$0xff]
        %v2202 = vld [vmem:[#allocation8 + $0x74] sm:$0xf]
        %v2203 = vld [vmem:[#allocation8 + $0x78] sm:$0xff]
        %v2204 = vld [vmem:[#allocation8 + $0x80] sm:$0xff]
        %v2205 = vld [vmem:[#allocation8 + $0x88] sm:$0xf]
        %v2206 = vld [vmem:[#allocation8 + $0x8c] sm:$0xff]
        %v2207 = vld [vmem:[#allocation8 + $0x94] sm:$0xff]
        %v2208 = vld [vmem:[#allocation8 + $0x9c] sm:$0xf]
        %v2209 = vld [vmem:[#allocation8 + $0xa0] sm:$0xff]
        %v2210 = vld [vmem:[#allocation8 + $0xa8] sm:$0xff]
        %v2211 = vld [vmem:[#allocation8 + $0xb0] sm:$0xf]
        %v2212 = vld [vmem:[#allocation8 + $0xb4] sm:$0xff]
        %v2213 = vld [vmem:[#allocation8 + $0xbc] sm:$0xff]
        %v2214 = vld [vmem:[#allocation8 + $0xc4] sm:$0xf]
        %v2215 = vld [vmem:[#allocation8 + $0xc8] sm:$0xff]
        %v2216 = vld [vmem:[#allocation8 + $0xd0] sm:$0xff]
        %v2217 = vld [vmem:[#allocation8 + $0xd8] sm:$0xf]
        %v2218 = vld [vmem:[#allocation8 + $0xdc] sm:$0xff]
        %v2219 = vld [vmem:[#allocation8 + $0xe4] sm:$0xff]
        %v2220 = vld [vmem:[#allocation8 + $0xec] sm:$0xf]
        %v2221 = vld [vmem:[#allocation8 + $0xf0] sm:$0xff]
        %v2222 = vld [vmem:[#allocation8 + $0xf8] sm:$0xff]
        %v2223 = vld [vmem:[#allocation8 + $0x100] sm:$0xf]
        %v2224 = vld [vmem:[#allocation8 + $0x104] sm:$0xff]
        %v2225 = vld [vmem:[#allocation8 + $0x10c] sm:$0xff]
        %v2226 = vld [vmem:[#allocation8 + $0x114] sm:$0xf]
        %v2227 = vld [vmem:[#allocation8 + $0x118] sm:$0xff]
        %v2228 = vld [vmem:[#allocation8 + $0x120] sm:$0xff]
        %v2229 = vld [vmem:[#allocation8 + $0x128] sm:$0xf]
        %v2230 = vld [vmem:[#allocation8 + $0x12c] sm:$0xff]
        %v2231 = vld [vmem:[#allocation8 + $0x134] sm:$0xff]
        %v2232 = vld [vmem:[#allocation8 + $0x13c] sm:$0xf]
        %v2233 = vld [vmem:[#allocation8 + $0x140] sm:$0xff]
        %v2234 = vld [vmem:[#allocation8 + $0x148] sm:$0xff]
        %v2235 = vld [vmem:[#allocation8 + $0x150] sm:$0xf]
        %v2236 = vld [vmem:[#allocation8 + $0x154] sm:$0xff]
        %v2237 = vld [vmem:[#allocation8 + $0x15c] sm:$0xff]
        %v2238 = vld [vmem:[#allocation8 + $0x164] sm:$0xf]
        %v2239 = vld [vmem:[#allocation8 + $0x168] sm:$0xff]
        %v2240 = vld [vmem:[#allocation8 + $0x170] sm:$0xff]
        %v2241 = vld [vmem:[#allocation8 + $0x178] sm:$0xf]
        %v2242 = vld [vmem:[#allocation8 + $0x17c] sm:$0xff]
        %v2243 = vld [vmem:[#allocation8 + $0x184] sm:$0xff]
        %v2244 = vld [vmem:[#allocation8 + $0x18c] sm:$0xf]
        %v2245 = vld [vmem:[#allocation8 + $0x190] sm:$0xff]
        %v2246 = vld [vmem:[#allocation8 + $0x198] sm:$0xff]
        %v2247 = vld [vmem:[#allocation8 + $0x1a0] sm:$0xf]
        %v2248 = vld [vmem:[#allocation8 + $0x1a4] sm:$0xff]
        %v2249 = vld [vmem:[#allocation8 + $0x1ac] sm:$0xff]
        %v2250 = vld [vmem:[#allocation8 + $0x1b4] sm:$0xf]
        %v2251 = vld [vmem:[#allocation8 + $0x1b8] sm:$0xff]
        %v2252 = vld [vmem:[#allocation8 + $0x1c0] sm:$0xff]
        %v2253 = vld [vmem:[#allocation8 + $0x1c8] sm:$0xf]
        %v2254 = vld [vmem:[#allocation8 + $0x1cc] sm:$0xff]
        %v2255 = vld [vmem:[#allocation8 + $0x1d4] sm:$0xff]
        %v2256 = vld [vmem:[#allocation8 + $0x1dc] sm:$0xf]
        %v2257 = vld [vmem:[#allocation8 + $0x1e0] sm:$0xff]
        %v2258 = vld [vmem:[#allocation8 + $0x1e8] sm:$0xff]
        %v2259 = vld [vmem:[#allocation8 + $0x1f0] sm:$0xf]
        %v2260 = vld [vmem:[#allocation8 + $0x1f4] sm:$0xff]
        %v2261 = vld [vmem:[#allocation8 + $0x1fc] sm:$0xff]
        %v2262 = vld [vmem:[#allocation8 + $0x204] sm:$0xf]
        %v2263 = vld [vmem:[#allocation8 + $0x208] sm:$0xff]
        %v2264 = vld [vmem:[#allocation8 + $0x210] sm:$0xff]
        %v2265 = vld [vmem:[#allocation8 + $0x218] sm:$0xf]
        %v2266 = vld [vmem:[#allocation8 + $0x21c] sm:$0xff]
        %v2267 = vld [vmem:[#allocation8 + $0x224] sm:$0xff]
        %v2268 = vld [vmem:[#allocation8 + $0x22c] sm:$0xf]
        %v2269 = vld [vmem:[#allocation8 + $0x230] sm:$0xff]
        %v2270 = vld [vmem:[#allocation8 + $0x238] sm:$0xff]
        %v2271 = vld [vmem:[#allocation8 + $0x240] sm:$0xf]
        %v2272 = vld [vmem:[#allocation8 + $0x244] sm:$0xff]
        %v2273 = vld [vmem:[#allocation8 + $0x24c] sm:$0xff]
        %v2274 = vld [vmem:[#allocation8 + $0x254] sm:$0xf]
        %v2275 = vld [vmem:[#allocation8 + $0x258] sm:$0xff]
        %v2276 = vld [vmem:[#allocation8 + $0x260] sm:$0xff]
        %v2277 = vld [vmem:[#allocation8 + $0x268] sm:$0xf]
        %v2278 = vld [vmem:[#allocation8 + $0x26c] sm:$0xff]
        %v2279 = vld [vmem:[#allocation8 + $0x274] sm:$0xff]
        %v2280 = vld [vmem:[#allocation8 + $0x27c] sm:$0xf]
        %v2281 = vld [vmem:[#allocation8 + $0x280] sm:$0xff]
        %v2282 = vld [vmem:[#allocation8 + $0x288] sm:$0xff]
        %v2283 = vld [vmem:[#allocation8 + $0x290] sm:$0xf]
        %v2284 = vld [vmem:[#allocation8 + $0x294] sm:$0xff]
        %v2285 = vld [vmem:[#allocation8 + $0x29c] sm:$0xff]
        %v2286 = vld [vmem:[#allocation8 + $0x2a4] sm:$0xf]
        %v2287 = vld [vmem:[#allocation8 + $0x2a8] sm:$0xff]
        %v2288 = vld [vmem:[#allocation8 + $0x2b0] sm:$0xff]
        %v2289 = vld [vmem:[#allocation8 + $0x2b8] sm:$0xf]
        %v2290 = vld [vmem:[#allocation8 + $0x2bc] sm:$0xff]
        %v2291 = vld [vmem:[#allocation8 + $0x2c4] sm:$0xff]
        %v2292 = vld [vmem:[#allocation8 + $0x2cc] sm:$0xf]
        %v2293 = vld [vmem:[#allocation2 + $0x18] sm:$0x11]
        %v2294 = vld [vmem:[#allocation2 + $0x20] sm:$0x1]
        %s2295 = scalar_lea.vmem [#allocation8], 720
        %v2296 = vld [vmem:[%s2295] sm:$0xff]
        %v2297 = vld [vmem:[%s2295 + $0x8] sm:$0xff]
        %v2298 = vld [vmem:[%s2295 + $0x10] sm:$0xf]
        %v2299 = vld [vmem:[%s2295 + $0x14] sm:$0xff]
        %v2300 = vld [vmem:[%s2295 + $0x1c] sm:$0xff]
        %v2301 = vld [vmem:[%s2295 + $0x24] sm:$0xf]
        %v2302 = vld [vmem:[%s2295 + $0x28] sm:$0xff]
        %v2303 = vld [vmem:[%s2295 + $0x30] sm:$0xff]
        %v2304 = vld [vmem:[%s2295 + $0x38] sm:$0xf]
        %v2305 = vld [vmem:[%s2295 + $0x3c] sm:$0xff]
        %v2306 = vld [vmem:[%s2295 + $0x44] sm:$0xff]
        %v2307 = vld [vmem:[%s2295 + $0x4c] sm:$0xf]
        %v2308 = vld [vmem:[%s2295 + $0x50] sm:$0xff]
        %v2309 = vld [vmem:[%s2295 + $0x58] sm:$0xff]
        %v2310 = vld [vmem:[%s2295 + $0x60] sm:$0xf]
        %v2311 = vld [vmem:[%s2295 + $0x64] sm:$0xff]
        %v2312 = vld [vmem:[%s2295 + $0x6c] sm:$0xff]
        %v2313 = vld [vmem:[%s2295 + $0x74] sm:$0xf]
        %v2314 = vld [vmem:[%s2295 + $0x78] sm:$0xff]
        %v2315 = vld [vmem:[%s2295 + $0x80] sm:$0xff]
        %v2316 = vld [vmem:[%s2295 + $0x88] sm:$0xf]
        %v2317 = vld [vmem:[%s2295 + $0x8c] sm:$0xff]
        %v2318 = vld [vmem:[%s2295 + $0x94] sm:$0xff]
        %v2319 = vld [vmem:[%s2295 + $0x9c] sm:$0xf]
        %v2320 = vld [vmem:[%s2295 + $0xa0] sm:$0xff]
        %v2321 = vld [vmem:[%s2295 + $0xa8] sm:$0xff]
        %v2322 = vld [vmem:[%s2295 + $0xb0] sm:$0xf]
        %v2323 = vld [vmem:[%s2295 + $0xb4] sm:$0xff]
        %v2324 = vld [vmem:[%s2295 + $0xbc] sm:$0xff]
        %v2325 = vld [vmem:[%s2295 + $0xc4] sm:$0xf]
        %v2326 = vld [vmem:[%s2295 + $0xc8] sm:$0xff]
        %v2327 = vld [vmem:[%s2295 + $0xd0] sm:$0xff]
        %v2328 = vld [vmem:[%s2295 + $0xd8] sm:$0xf]
        %v2329 = vld [vmem:[%s2295 + $0xdc] sm:$0xff]
        %v2330 = vld [vmem:[%s2295 + $0xe4] sm:$0xff]
        %v2331 = vld [vmem:[%s2295 + $0xec] sm:$0xf]
        %v2332 = vld [vmem:[%s2295 + $0xf0] sm:$0xff]
        %v2333 = vld [vmem:[%s2295 + $0xf8] sm:$0xff]
        %v2334 = vld [vmem:[%s2295 + $0x100] sm:$0xf]
        %v2335 = vld [vmem:[%s2295 + $0x104] sm:$0xff]
        %v2336 = vld [vmem:[%s2295 + $0x10c] sm:$0xff]
        %v2337 = vld [vmem:[%s2295 + $0x114] sm:$0xf]
        %v2338 = vld [vmem:[%s2295 + $0x118] sm:$0xff]
        %v2339 = vld [vmem:[%s2295 + $0x120] sm:$0xff]
        %v2340 = vld [vmem:[%s2295 + $0x128] sm:$0xf]
        %v2341 = vld [vmem:[%s2295 + $0x12c] sm:$0xff]
        %v2342 = vld [vmem:[%s2295 + $0x134] sm:$0xff]
        %v2343 = vld [vmem:[%s2295 + $0x13c] sm:$0xf]
        %v2344 = vld [vmem:[%s2295 + $0x140] sm:$0xff]
        %v2345 = vld [vmem:[%s2295 + $0x148] sm:$0xff]
        %v2346 = vld [vmem:[%s2295 + $0x150] sm:$0xf]
        %v2347 = vld [vmem:[%s2295 + $0x154] sm:$0xff]
        %v2348 = vld [vmem:[%s2295 + $0x15c] sm:$0xff]
        %v2349 = vld [vmem:[%s2295 + $0x164] sm:$0xf]
        %v2350 = vld [vmem:[%s2295 + $0x168] sm:$0xff]
        %v2351 = vld [vmem:[%s2295 + $0x170] sm:$0xff]
        %v2352 = vld [vmem:[%s2295 + $0x178] sm:$0xf]
        %v2353 = vld [vmem:[%s2295 + $0x17c] sm:$0xff]
        %v2354 = vld [vmem:[%s2295 + $0x184] sm:$0xff]
        %v2355 = vld [vmem:[%s2295 + $0x18c] sm:$0xf]
        %v2356 = vld [vmem:[%s2295 + $0x190] sm:$0xff]
        %v2357 = vld [vmem:[%s2295 + $0x198] sm:$0xff]
        %v2358 = vld [vmem:[%s2295 + $0x1a0] sm:$0xf]
        %v2359 = vld [vmem:[%s2295 + $0x1a4] sm:$0xff]
        %v2360 = vld [vmem:[%s2295 + $0x1ac] sm:$0xff]
        %v2361 = vld [vmem:[%s2295 + $0x1b4] sm:$0xf]
        %v2362 = vld [vmem:[%s2295 + $0x1b8] sm:$0xff]
        %v2363 = vld [vmem:[%s2295 + $0x1c0] sm:$0xff]
        %v2364 = vld [vmem:[%s2295 + $0x1c8] sm:$0xf]
        %v2365 = vld [vmem:[%s2295 + $0x1cc] sm:$0xff]
        %v2366 = vld [vmem:[%s2295 + $0x1d4] sm:$0xff]
        %v2367 = vld [vmem:[%s2295 + $0x1dc] sm:$0xf]
        %v2368 = vld [vmem:[%s2295 + $0x1e0] sm:$0xff]
        %v2369 = vld [vmem:[%s2295 + $0x1e8] sm:$0xff]
        %v2370 = vld [vmem:[%s2295 + $0x1f0] sm:$0xf]
        %v2371 = vld [vmem:[%s2295 + $0x1f4] sm:$0xff]
        %v2372 = vld [vmem:[%s2295 + $0x1fc] sm:$0xff]
        %v2373 = vld [vmem:[%s2295 + $0x204] sm:$0xf]
        %v2374 = vld [vmem:[%s2295 + $0x208] sm:$0xff]
        %v2375 = vld [vmem:[%s2295 + $0x210] sm:$0xff]
        %v2376 = vld [vmem:[%s2295 + $0x218] sm:$0xf]
        %v2377 = vld [vmem:[%s2295 + $0x21c] sm:$0xff]
        %v2378 = vld [vmem:[%s2295 + $0x224] sm:$0xff]
        %v2379 = vld [vmem:[%s2295 + $0x22c] sm:$0xf]
        %v2380 = vld [vmem:[%s2295 + $0x230] sm:$0xff]
        %v2381 = vld [vmem:[%s2295 + $0x238] sm:$0xff]
        %v2382 = vld [vmem:[%s2295 + $0x240] sm:$0xf]
        %v2383 = vld [vmem:[%s2295 + $0x244] sm:$0xff]
        %v2384 = vld [vmem:[%s2295 + $0x24c] sm:$0xff]
        %v2385 = vld [vmem:[%s2295 + $0x254] sm:$0xf]
        %v2386 = vld [vmem:[%s2295 + $0x258] sm:$0xff]
        %v2387 = vld [vmem:[%s2295 + $0x260] sm:$0xff]
        %v2388 = vld [vmem:[%s2295 + $0x268] sm:$0xf]
        %v2389 = vld [vmem:[%s2295 + $0x26c] sm:$0xff]
        %v2390 = vld [vmem:[%s2295 + $0x274] sm:$0xff]
        %v2391 = vld [vmem:[%s2295 + $0x27c] sm:$0xf]
        %v2392 = vld [vmem:[%s2295 + $0x280] sm:$0xff]
        %v2393 = vld [vmem:[%s2295 + $0x288] sm:$0xff]
        %v2394 = vld [vmem:[%s2295 + $0x290] sm:$0xf]
        %v2395 = vld [vmem:[%s2295 + $0x294] sm:$0xff]
        %v2396 = vld [vmem:[%s2295 + $0x29c] sm:$0xff]
        %v2397 = vld [vmem:[%s2295 + $0x2a4] sm:$0xf]
        %v2398 = vld [vmem:[%s2295 + $0x2a8] sm:$0xff]
        %v2399 = vld [vmem:[%s2295 + $0x2b0] sm:$0xff]
        %v2400 = vld [vmem:[%s2295 + $0x2b8] sm:$0xf]
        %v2401 = vld [vmem:[%s2295 + $0x2bc] sm:$0xff]
        %v2402 = vld [vmem:[%s2295 + $0x2c4] sm:$0xff]
        %v2403 = vld [vmem:[%s2295 + $0x2cc] sm:$0xf]
        %v2410 = vunpack.c.l.b16 %v2181
        %v2411 = vunpack.c.h.b16 %v2181
        %v2412 = vunpack.c.l.b16 %v2182
        %v2413 = vunpack.c.l.b16 %v2183
        %v2414 = vunpack.c.h.b16 %v2183
        %v2415 = vunpack.c.l.b16 %v2184
        %v2416 = vunpack.c.l.b16 %v2293
        %v2417 = vunpack.c.h.b16 %v2293
        %v2418 = vunpack.c.l.b16 %v2294
        %v2419 = vpack.c.b16 %v2413, %v2410
        %v2420 = vpack.c.b16 %v2414, %v2411
        %v2421 = vpack.c.b16 %v2415, %v2412
        %v2422 = vpack.c.b16 %v2416, %v2416
        %v2423 = vpack.c.b16 %v2417, %v2417
        %v2424 = vpack.c.b16 %v2418, %v2418
        %v2426 = vshrl.u32 %v2419, 16
        %v2428 = vshll.u32 %v2419, 16
        %v2430 = vrot.slane %v2428, 1
        %v2431 = vor.u32 %v2426, %v2430
        %v2433 = vshll.u32 %v2422, 16
        %v2435 = vrot.slane %v2433, 1
        %v2436 = vsel %vm532, %v2431, %v2435
        %v2438 = vshrl.u32 %v2420, 16
        %v2440 = vshll.u32 %v2420, 16
        %v2442 = vrot.slane %v2440, 1
        %v2443 = vor.u32 %v2438, %v2442
        %v2445 = vshll.u32 %v2423, 16
        %v2447 = vrot.slane %v2445, 1
        %v2448 = vsel %vm532, %v2443, %v2447
        %v2450 = vshrl.u32 %v2421, 16
        %v2452 = vshll.u32 %v2421, 16
        %v2454 = vrot.slane %v2452, 1
        %v2455 = vor.u32 %v2450, %v2454
        %v2457 = vshll.u32 %v2424, 16
        %v2459 = vrot.slane %v2457, 1
        %v2460 = vsel %vm532, %v2455, %v2459
        %v2571 = vunpack.c.l.b16 %v2296
        %v2572 = vunpack.c.h.b16 %v2296
        %v2573 = vunpack.c.l.b16 %v2297
        %v2574 = vunpack.c.h.b16 %v2297
        %v2575 = vunpack.c.l.b16 %v2298
        %v2576 = vunpack.c.l.b16 %v2299
        %v2577 = vunpack.c.h.b16 %v2299
        %v2578 = vunpack.c.l.b16 %v2300
        %v2579 = vunpack.c.h.b16 %v2300
        %v2580 = vunpack.c.l.b16 %v2301
        %v2581 = vunpack.c.l.b16 %v2302
        %v2582 = vunpack.c.h.b16 %v2302
        %v2583 = vunpack.c.l.b16 %v2303
        %v2584 = vunpack.c.h.b16 %v2303
        %v2585 = vunpack.c.l.b16 %v2304
        %v2586 = vunpack.c.l.b16 %v2305
        %v2587 = vunpack.c.h.b16 %v2305
        %v2588 = vunpack.c.l.b16 %v2306
        %v2589 = vunpack.c.h.b16 %v2306
        %v2590 = vunpack.c.l.b16 %v2307
        %v2591 = vunpack.c.l.b16 %v2308
        %v2592 = vunpack.c.h.b16 %v2308
        %v2593 = vunpack.c.l.b16 %v2309
        %v2594 = vunpack.c.h.b16 %v2309
        %v2595 = vunpack.c.l.b16 %v2310
        %v2596 = vunpack.c.l.b16 %v2311
        %v2597 = vunpack.c.h.b16 %v2311
        %v2598 = vunpack.c.l.b16 %v2312
        %v2599 = vunpack.c.h.b16 %v2312
        %v2600 = vunpack.c.l.b16 %v2313
        %v2601 = vunpack.c.l.b16 %v2314
        %v2602 = vunpack.c.h.b16 %v2314
        %v2603 = vunpack.c.l.b16 %v2315
        %v2604 = vunpack.c.h.b16 %v2315
        %v2605 = vunpack.c.l.b16 %v2316
        %v2606 = vunpack.c.l.b16 %v2317
        %v2607 = vunpack.c.h.b16 %v2317
        %v2608 = vunpack.c.l.b16 %v2318
        %v2609 = vunpack.c.h.b16 %v2318
        %v2610 = vunpack.c.l.b16 %v2319
        %v2611 = vunpack.c.l.b16 %v2320
        %v2612 = vunpack.c.h.b16 %v2320
        %v2613 = vunpack.c.l.b16 %v2321
        %v2614 = vunpack.c.h.b16 %v2321
        %v2615 = vunpack.c.l.b16 %v2322
        %v2616 = vunpack.c.l.b16 %v2323
        %v2617 = vunpack.c.h.b16 %v2323
        %v2618 = vunpack.c.l.b16 %v2324
        %v2619 = vunpack.c.h.b16 %v2324
        %v2620 = vunpack.c.l.b16 %v2325
        %v2621 = vunpack.c.l.b16 %v2326
        %v2622 = vunpack.c.h.b16 %v2326
        %v2623 = vunpack.c.l.b16 %v2327
        %v2624 = vunpack.c.h.b16 %v2327
        %v2625 = vunpack.c.l.b16 %v2328
        %v2626 = vunpack.c.l.b16 %v2329
        %v2627 = vunpack.c.h.b16 %v2329
        %v2628 = vunpack.c.l.b16 %v2330
        %v2629 = vunpack.c.h.b16 %v2330
        %v2630 = vunpack.c.l.b16 %v2331
        %v2631 = vunpack.c.l.b16 %v2332
        %v2632 = vunpack.c.h.b16 %v2332
        %v2633 = vunpack.c.l.b16 %v2333
        %v2634 = vunpack.c.h.b16 %v2333
        %v2635 = vunpack.c.l.b16 %v2334
        %v2636 = vunpack.c.l.b16 %v2335
        %v2637 = vunpack.c.h.b16 %v2335
        %v2638 = vunpack.c.l.b16 %v2336
        %v2639 = vunpack.c.h.b16 %v2336
        %v2640 = vunpack.c.l.b16 %v2337
        %v2641 = vunpack.c.l.b16 %v2338
        %v2642 = vunpack.c.h.b16 %v2338
        %v2643 = vunpack.c.l.b16 %v2339
        %v2644 = vunpack.c.h.b16 %v2339
        %v2645 = vunpack.c.l.b16 %v2340
        %v2646 = vunpack.c.l.b16 %v2341
        %v2647 = vunpack.c.h.b16 %v2341
        %v2648 = vunpack.c.l.b16 %v2342
        %v2649 = vunpack.c.h.b16 %v2342
        %v2650 = vunpack.c.l.b16 %v2343
        %v2651 = vunpack.c.l.b16 %v2344
        %v2652 = vunpack.c.h.b16 %v2344
        %v2653 = vunpack.c.l.b16 %v2345
        %v2654 = vunpack.c.h.b16 %v2345
        %v2655 = vunpack.c.l.b16 %v2346
        %v2656 = vunpack.c.l.b16 %v2347
        %v2657 = vunpack.c.h.b16 %v2347
        %v2658 = vunpack.c.l.b16 %v2348
        %v2659 = vunpack.c.h.b16 %v2348
        %v2660 = vunpack.c.l.b16 %v2349
        %v2661 = vunpack.c.l.b16 %v2350
        %v2662 = vunpack.c.h.b16 %v2350
        %v2663 = vunpack.c.l.b16 %v2351
        %v2664 = vunpack.c.h.b16 %v2351
        %v2665 = vunpack.c.l.b16 %v2352
        %v2666 = vunpack.c.l.b16 %v2353
        %v2667 = vunpack.c.h.b16 %v2353
        %v2668 = vunpack.c.l.b16 %v2354
        %v2669 = vunpack.c.h.b16 %v2354
        %v2670 = vunpack.c.l.b16 %v2355
        %v2671 = vunpack.c.l.b16 %v2356
        %v2672 = vunpack.c.h.b16 %v2356
        %v2673 = vunpack.c.l.b16 %v2357
        %v2674 = vunpack.c.h.b16 %v2357
        %v2675 = vunpack.c.l.b16 %v2358
        %v2676 = vunpack.c.l.b16 %v2359
        %v2677 = vunpack.c.h.b16 %v2359
        %v2678 = vunpack.c.l.b16 %v2360
        %v2679 = vunpack.c.h.b16 %v2360
        %v2680 = vunpack.c.l.b16 %v2361
        %v2681 = vunpack.c.l.b16 %v2362
        %v2682 = vunpack.c.h.b16 %v2362
        %v2683 = vunpack.c.l.b16 %v2363
        %v2684 = vunpack.c.h.b16 %v2363
        %v2685 = vunpack.c.l.b16 %v2364
        %v2686 = vunpack.c.l.b16 %v2365
        %v2687 = vunpack.c.h.b16 %v2365
        %v2688 = vunpack.c.l.b16 %v2366
        %v2689 = vunpack.c.h.b16 %v2366
        %v2690 = vunpack.c.l.b16 %v2367
        %v2691 = vunpack.c.l.b16 %v2368
        %v2692 = vunpack.c.h.b16 %v2368
        %v2693 = vunpack.c.l.b16 %v2369
        %v2694 = vunpack.c.h.b16 %v2369
        %v2695 = vunpack.c.l.b16 %v2370
        %v2696 = vunpack.c.l.b16 %v2371
        %v2697 = vunpack.c.h.b16 %v2371
        %v2698 = vunpack.c.l.b16 %v2372
        %v2699 = vunpack.c.h.b16 %v2372
        %v2700 = vunpack.c.l.b16 %v2373
        %v2701 = vunpack.c.l.b16 %v2374
        %v2702 = vunpack.c.h.b16 %v2374
        %v2703 = vunpack.c.l.b16 %v2375
        %v2704 = vunpack.c.h.b16 %v2375
        %v2705 = vunpack.c.l.b16 %v2376
        %v2706 = vunpack.c.l.b16 %v2377
        %v2707 = vunpack.c.h.b16 %v2377
        %v2708 = vunpack.c.l.b16 %v2378
        %v2709 = vunpack.c.h.b16 %v2378
        %v2710 = vunpack.c.l.b16 %v2379
        %v2711 = vunpack.c.l.b16 %v2380
        %v2712 = vunpack.c.h.b16 %v2380
        %v2713 = vunpack.c.l.b16 %v2381
        %v2714 = vunpack.c.h.b16 %v2381
        %v2715 = vunpack.c.l.b16 %v2382
        %v2716 = vunpack.c.l.b16 %v2383
        %v2717 = vunpack.c.h.b16 %v2383
        %v2718 = vunpack.c.l.b16 %v2384
        %v2719 = vunpack.c.h.b16 %v2384
        %v2720 = vunpack.c.l.b16 %v2385
        %v2721 = vunpack.c.l.b16 %v2386
        %v2722 = vunpack.c.h.b16 %v2386
        %v2723 = vunpack.c.l.b16 %v2387
        %v2724 = vunpack.c.h.b16 %v2387
        %v2725 = vunpack.c.l.b16 %v2388
        %v2726 = vunpack.c.l.b16 %v2389
        %v2727 = vunpack.c.h.b16 %v2389
        %v2728 = vunpack.c.l.b16 %v2390
        %v2729 = vunpack.c.h.b16 %v2390
        %v2730 = vunpack.c.l.b16 %v2391
        %v2731 = vunpack.c.l.b16 %v2392
        %v2732 = vunpack.c.h.b16 %v2392
        %v2733 = vunpack.c.l.b16 %v2393
        %v2734 = vunpack.c.h.b16 %v2393
        %v2735 = vunpack.c.l.b16 %v2394
        %v2736 = vunpack.c.l.b16 %v2395
        %v2737 = vunpack.c.h.b16 %v2395
        %v2738 = vunpack.c.l.b16 %v2396
        %v2739 = vunpack.c.h.b16 %v2396
        %v2740 = vunpack.c.l.b16 %v2397
        %v2741 = vunpack.c.l.b16 %v2398
        %v2742 = vunpack.c.h.b16 %v2398
        %v2743 = vunpack.c.l.b16 %v2399
        %v2744 = vunpack.c.h.b16 %v2399
        %v2745 = vunpack.c.l.b16 %v2400
        %v2746 = vunpack.c.l.b16 %v2401
        %v2747 = vunpack.c.h.b16 %v2401
        %v2748 = vunpack.c.l.b16 %v2402
        %v2749 = vunpack.c.h.b16 %v2402
        %v2750 = vunpack.c.l.b16 %v2403
        %v2751 = vpack.c.b16 %v2576, %v2571
        %v2752 = vpack.c.b16 %v2577, %v2572
        %v2753 = vpack.c.b16 %v2578, %v2573
        %v2754 = vpack.c.b16 %v2579, %v2574
        %v2755 = vpack.c.b16 %v2580, %v2575
        %v2756 = vpack.c.b16 %v2586, %v2581
        %v2757 = vpack.c.b16 %v2587, %v2582
        %v2758 = vpack.c.b16 %v2588, %v2583
        %v2759 = vpack.c.b16 %v2589, %v2584
        %v2760 = vpack.c.b16 %v2590, %v2585
        %v2761 = vpack.c.b16 %v2596, %v2591
        %v2762 = vpack.c.b16 %v2597, %v2592
        %v2763 = vpack.c.b16 %v2598, %v2593
        %v2764 = vpack.c.b16 %v2599, %v2594
        %v2765 = vpack.c.b16 %v2600, %v2595
        %v2766 = vpack.c.b16 %v2606, %v2601
        %v2767 = vpack.c.b16 %v2607, %v2602
        %v2768 = vpack.c.b16 %v2608, %v2603
        %v2769 = vpack.c.b16 %v2609, %v2604
        %v2770 = vpack.c.b16 %v2610, %v2605
        %v2771 = vpack.c.b16 %v2616, %v2611
        %v2772 = vpack.c.b16 %v2617, %v2612
        %v2773 = vpack.c.b16 %v2618, %v2613
        %v2774 = vpack.c.b16 %v2619, %v2614
        %v2775 = vpack.c.b16 %v2620, %v2615
        %v2776 = vpack.c.b16 %v2626, %v2621
        %v2777 = vpack.c.b16 %v2627, %v2622
        %v2778 = vpack.c.b16 %v2628, %v2623
        %v2779 = vpack.c.b16 %v2629, %v2624
        %v2780 = vpack.c.b16 %v2630, %v2625
        %v2781 = vpack.c.b16 %v2636, %v2631
        %v2782 = vpack.c.b16 %v2637, %v2632
        %v2783 = vpack.c.b16 %v2638, %v2633
        %v2784 = vpack.c.b16 %v2639, %v2634
        %v2785 = vpack.c.b16 %v2640, %v2635
        %v2786 = vpack.c.b16 %v2646, %v2641
        %v2787 = vpack.c.b16 %v2647, %v2642
        %v2788 = vpack.c.b16 %v2648, %v2643
        %v2789 = vpack.c.b16 %v2649, %v2644
        %v2790 = vpack.c.b16 %v2650, %v2645
        %v2791 = vpack.c.b16 %v2656, %v2651
        %v2792 = vpack.c.b16 %v2657, %v2652
        %v2793 = vpack.c.b16 %v2658, %v2653
        %v2794 = vpack.c.b16 %v2659, %v2654
        %v2795 = vpack.c.b16 %v2660, %v2655
        %v2796 = vpack.c.b16 %v2666, %v2661
        %v2797 = vpack.c.b16 %v2667, %v2662
        %v2798 = vpack.c.b16 %v2668, %v2663
        %v2799 = vpack.c.b16 %v2669, %v2664
        %v2800 = vpack.c.b16 %v2670, %v2665
        %v2801 = vpack.c.b16 %v2676, %v2671
        %v2802 = vpack.c.b16 %v2677, %v2672
        %v2803 = vpack.c.b16 %v2678, %v2673
        %v2804 = vpack.c.b16 %v2679, %v2674
        %v2805 = vpack.c.b16 %v2680, %v2675
        %v2806 = vpack.c.b16 %v2686, %v2681
        %v2807 = vpack.c.b16 %v2687, %v2682
        %v2808 = vpack.c.b16 %v2688, %v2683
        %v2809 = vpack.c.b16 %v2689, %v2684
        %v2810 = vpack.c.b16 %v2690, %v2685
        %v2811 = vpack.c.b16 %v2696, %v2691
        %v2812 = vpack.c.b16 %v2697, %v2692
        %v2813 = vpack.c.b16 %v2698, %v2693
        %v2814 = vpack.c.b16 %v2699, %v2694
        %v2815 = vpack.c.b16 %v2700, %v2695
        %v2816 = vpack.c.b16 %v2706, %v2701
        %v2817 = vpack.c.b16 %v2707, %v2702
        %v2818 = vpack.c.b16 %v2708, %v2703
        %v2819 = vpack.c.b16 %v2709, %v2704
        %v2820 = vpack.c.b16 %v2710, %v2705
        %v2821 = vpack.c.b16 %v2716, %v2711
        %v2822 = vpack.c.b16 %v2717, %v2712
        %v2823 = vpack.c.b16 %v2718, %v2713
        %v2824 = vpack.c.b16 %v2719, %v2714
        %v2825 = vpack.c.b16 %v2720, %v2715
        %v2826 = vpack.c.b16 %v2726, %v2721
        %v2827 = vpack.c.b16 %v2727, %v2722
        %v2828 = vpack.c.b16 %v2728, %v2723
        %v2829 = vpack.c.b16 %v2729, %v2724
        %v2830 = vpack.c.b16 %v2730, %v2725
        %v2831 = vpack.c.b16 %v2736, %v2731
        %v2832 = vpack.c.b16 %v2737, %v2732
        %v2833 = vpack.c.b16 %v2738, %v2733
        %v2834 = vpack.c.b16 %v2739, %v2734
        %v2835 = vpack.c.b16 %v2740, %v2735
        %v2836 = vpack.c.b16 %v2746, %v2741
        %v2837 = vpack.c.b16 %v2747, %v2742
        %v2838 = vpack.c.b16 %v2748, %v2743
        %v2839 = vpack.c.b16 %v2749, %v2744
        %v2840 = vpack.c.b16 %v2750, %v2745
        %v2932 = vsel %vm859, %v2460, 0
        %2934 = vmatprep.subr.bf16.mxu0 %v2752
        %2935 = vmatpush1.bf16.msra.mxu0 %v2751
        %2936 = vmatprep.subr.bf16.mxu0 %v2757
        %2937 = vmatpush1.bf16.msra.mxu0 %v2756
        %2938 = vmatprep.subr.bf16.mxu0 %v2762
        %2939 = vmatpush1.bf16.msra.mxu0 %v2761
        %2940 = vmatprep.subr.bf16.mxu0 %v2767
        %2941 = vmatpush1.bf16.msra.mxu0 %v2766
        %2942 = vmatprep.subr.bf16.mxu0 %v2772
        %2943 = vmatpush1.bf16.msra.mxu0 %v2771
        %2944 = vmatprep.subr.bf16.mxu0 %v2777
        %2945 = vmatpush1.bf16.msra.mxu0 %v2776
        %2946 = vmatprep.subr.bf16.mxu0 %v2782
        %2947 = vmatpush1.bf16.msra.mxu0 %v2781
        %2948 = vmatprep.subr.bf16.mxu0 %v2787
        %2949 = vmatpush1.bf16.msra.mxu0 %v2786
        %2950 = vmatprep.subr.bf16.mxu0 %v2792
        %2951 = vmatpush1.bf16.msra.mxu0 %v2791
        %2952 = vmatprep.subr.bf16.mxu0 %v2797
        %2953 = vmatpush1.bf16.msra.mxu0 %v2796
        %2954 = vmatprep.subr.bf16.mxu0 %v2802
        %2955 = vmatpush1.bf16.msra.mxu0 %v2801
        %2956 = vmatprep.subr.bf16.mxu0 %v2807
        %2957 = vmatpush1.bf16.msra.mxu0 %v2806
        %2958 = vmatprep.subr.bf16.mxu0 %v2812
        %2959 = vmatpush1.bf16.msra.mxu0 %v2811
        %2960 = vmatprep.subr.bf16.mxu0 %v2817
        %2961 = vmatpush1.bf16.msra.mxu0 %v2816
        %2962 = vmatprep.subr.bf16.mxu0 %v2822
        %2963 = vmatpush1.bf16.msra.mxu0 %v2821
        %2964 = vmatprep.subr.bf16.mxu0 %v2827
        %2965 = vmatpush1.bf16.msra.mxu0 %v2826
        %2966 = vmatprep.mubr.bf16.mxu0 %v2448
        %2967 = vmatmul.mubr.bf16.gmra.mrb[0].mxu0 %v2436
        %v2968 = vpop.f32.mrb[0].mxu0
        %v2969 = vadd.f32 0.0, %v2968
        %v2970 = vpop.f32.mrb[0].mxu0
        %v2971 = vadd.f32 0.0, %v2970
        %v2972 = vpop.f32.mrb[0].mxu0
        %v2973 = vadd.f32 0.0, %v2972
        %v2974 = vpop.f32.mrb[0].mxu0
        %v2975 = vadd.f32 0.0, %v2974
        %2976 = vdwg.mxu0
        %2977 = vmatprep.subr.bf16.mxu0 %v2832
        %2978 = vmatpush1.bf16.msra.mxu0 %v2831
        %2979 = vmatprep.subr.bf16.mxu0 %v2837
        %2980 = vmatpush1.bf16.msra.mxu0 %v2836
        %2981 = vmatprep.subr.bf16.mxu0 0
        %2982 = vmatpush1.bf16.msra.mxu0 0
        %2983 = vmatprep.subr.bf16.mxu0 0
        %2984 = vmatpush1.bf16.msra.mxu0 0
        %2985 = vmatprep.subr.bf16.mxu0 0
        %2986 = vmatpush1.bf16.msra.mxu0 0
        %2987 = vmatprep.subr.bf16.mxu0 0
        %2988 = vmatpush1.bf16.msra.mxu0 0
        %2989 = vmatprep.subr.bf16.mxu0 0
        %2990 = vmatpush1.bf16.msra.mxu0 0
        %2991 = vmatprep.subr.bf16.mxu0 0
        %2992 = vmatpush1.bf16.msra.mxu0 0
        %2993 = vmatprep.subr.bf16.mxu0 0
        %2994 = vmatpush1.bf16.msra.mxu0 0
        %2995 = vmatprep.subr.bf16.mxu0 0
        %2996 = vmatpush1.bf16.msra.mxu0 0
        %2997 = vmatprep.subr.bf16.mxu0 0
        %2998 = vmatpush1.bf16.msra.mxu0 0
        %2999 = vmatprep.subr.bf16.mxu0 0
        %3000 = vmatpush1.bf16.msra.mxu0 0
        %3001 = vmatprep.subr.bf16.mxu0 0
        %3002 = vmatpush1.bf16.msra.mxu0 0
        %3003 = vmatprep.subr.bf16.mxu0 0
        %3004 = vmatpush1.bf16.msra.mxu0 0
        %3005 = vmatprep.subr.bf16.mxu0 0
        %3006 = vmatpush1.bf16.msra.mxu0 0
        %3007 = vmatprep.subr.bf16.mxu0 0
        %3008 = vmatpush1.bf16.msra.mxu0 0
        %3009 = vmatprep.mubr.bf16.mxu0 0
        %3010 = vmatmul.mubr.bf16.gmra.mrb[0].mxu0 %v2932
        %v3011 = vpop.f32.mrb[0].mxu0
        %v3012 = vadd.f32 %v2969, %v3011
        %v3013 = vpop.f32.mrb[0].mxu0
        %v3014 = vadd.f32 %v2971, %v3013
        %v3015 = vpop.f32.mrb[0].mxu0
        %v3016 = vadd.f32 %v2973, %v3015
        %v3017 = vpop.f32.mrb[0].mxu0
        %v3018 = vadd.f32 %v2975, %v3017
        %3019 = vdwg.mxu0
        %3020 = vmatprep.subr.bf16.mxu0 %v2754
        %3021 = vmatpush1.bf16.msra.mxu0 %v2753
        %3022 = vmatprep.subr.bf16.mxu0 %v2759
        %3023 = vmatpush1.bf16.msra.mxu0 %v2758
        %3024 = vmatprep.subr.bf16.mxu0 %v2764
        %3025 = vmatpush1.bf16.msra.mxu0 %v2763
        %3026 = vmatprep.subr.bf16.mxu0 %v2769
        %3027 = vmatpush1.bf16.msra.mxu0 %v2768
        %3028 = vmatprep.subr.bf16.mxu0 %v2774
        %3029 = vmatpush1.bf16.msra.mxu0 %v2773
        %3030 = vmatprep.subr.bf16.mxu0 %v2779
        %3031 = vmatpush1.bf16.msra.mxu0 %v2778
        %3032 = vmatprep.subr.bf16.mxu0 %v2784
        %3033 = vmatpush1.bf16.msra.mxu0 %v2783
        %3034 = vmatprep.subr.bf16.mxu0 %v2789
        %3035 = vmatpush1.bf16.msra.mxu0 %v2788
        %3036 = vmatprep.subr.bf16.mxu0 %v2794
        %3037 = vmatpush1.bf16.msra.mxu0 %v2793
        %3038 = vmatprep.subr.bf16.mxu0 %v2799
        %3039 = vmatpush1.bf16.msra.mxu0 %v2798
        %3040 = vmatprep.subr.bf16.mxu0 %v2804
        %3041 = vmatpush1.bf16.msra.mxu0 %v2803
        %3042 = vmatprep.subr.bf16.mxu0 %v2809
        %3043 = vmatpush1.bf16.msra.mxu0 %v2808
        %3044 = vmatprep.subr.bf16.mxu0 %v2814
        %3045 = vmatpush1.bf16.msra.mxu0 %v2813
        %3046 = vmatprep.subr.bf16.mxu0 %v2819
        %3047 = vmatpush1.bf16.msra.mxu0 %v2818
        %3048 = vmatprep.subr.bf16.mxu0 %v2824
        %3049 = vmatpush1.bf16.msra.mxu0 %v2823
        %3050 = vmatprep.subr.bf16.mxu0 %v2829
        %3051 = vmatpush1.bf16.msra.mxu0 %v2828
        %3052 = vmatprep.mubr.bf16.mxu0 %v2448
        %3053 = vmatmul.mubr.bf16.gmra.mrb[0].mxu0 %v2436
        %v3054 = vpop.f32.mrb[0].mxu0
        %v3055 = vadd.f32 0.0, %v3054
        %v3056 = vpop.f32.mrb[0].mxu0
        %v3057 = vadd.f32 0.0, %v3056
        %v3058 = vpop.f32.mrb[0].mxu0
        %v3059 = vadd.f32 0.0, %v3058
        %v3060 = vpop.f32.mrb[0].mxu0
        %v3061 = vadd.f32 0.0, %v3060
        %3062 = vdwg.mxu0
        %3063 = vmatprep.subr.bf16.mxu0 %v2834
        %3064 = vmatpush1.bf16.msra.mxu0 %v2833
        %3065 = vmatprep.subr.bf16.mxu0 %v2839
        %3066 = vmatpush1.bf16.msra.mxu0 %v2838
        %3067 = vmatprep.subr.bf16.mxu0 0
        %3068 = vmatpush1.bf16.msra.mxu0 0
        %3069 = vmatprep.subr.bf16.mxu0 0
        %3070 = vmatpush1.bf16.msra.mxu0 0
        %3071 = vmatprep.subr.bf16.mxu0 0
        %3072 = vmatpush1.bf16.msra.mxu0 0
        %3073 = vmatprep.subr.bf16.mxu0 0
        %3074 = vmatpush1.bf16.msra.mxu0 0
        %3075 = vmatprep.subr.bf16.mxu0 0
        %3076 = vmatpush1.bf16.msra.mxu0 0
        %3077 = vmatprep.subr.bf16.mxu0 0
        %3078 = vmatpush1.bf16.msra.mxu0 0
        %3079 = vmatprep.subr.bf16.mxu0 0
        %3080 = vmatpush1.bf16.msra.mxu0 0
        %3081 = vmatprep.subr.bf16.mxu0 0
        %3082 = vmatpush1.bf16.msra.mxu0 0
        %3083 = vmatprep.subr.bf16.mxu0 0
        %3084 = vmatpush1.bf16.msra.mxu0 0
        %3085 = vmatprep.subr.bf16.mxu0 0
        %3086 = vmatpush1.bf16.msra.mxu0 0
        %3087 = vmatprep.subr.bf16.mxu0 0
        %3088 = vmatpush1.bf16.msra.mxu0 0
        %3089 = vmatprep.subr.bf16.mxu0 0
        %3090 = vmatpush1.bf16.msra.mxu0 0
        %3091 = vmatprep.subr.bf16.mxu0 0
        %3092 = vmatpush1.bf16.msra.mxu0 0
        %3093 = vmatprep.subr.bf16.mxu0 0
        %3094 = vmatpush1.bf16.msra.mxu0 0
        %3095 = vmatprep.mubr.bf16.mxu0 0
        %3096 = vmatmul.mubr.bf16.gmra.mrb[0].mxu0 %v2932
        %v3097 = vpop.f32.mrb[0].mxu0
        %v3098 = vadd.f32 %v3055, %v3097
        %v3099 = vpop.f32.mrb[0].mxu0
        %v3100 = vadd.f32 %v3057, %v3099
        %v3101 = vpop.f32.mrb[0].mxu0
        %v3102 = vadd.f32 %v3059, %v3101
        %v3103 = vpop.f32.mrb[0].mxu0
        %v3104 = vadd.f32 %v3061, %v3103
        %3105 = vdwg.mxu0
        %3106 = vmatprep.subr.bf16.mxu0 0
        %3107 = vmatpush1.bf16.msra.mxu0 %v2755
        %3108 = vmatprep.subr.bf16.mxu0 0
        %3109 = vmatpush1.bf16.msra.mxu0 %v2760
        %3110 = vmatprep.subr.bf16.mxu0 0
        %3111 = vmatpush1.bf16.msra.mxu0 %v2765
        %3112 = vmatprep.subr.bf16.mxu0 0
        %3113 = vmatpush1.bf16.msra.mxu0 %v2770
        %3114 = vmatprep.subr.bf16.mxu0 0
        %3115 = vmatpush1.bf16.msra.mxu0 %v2775
        %3116 = vmatprep.subr.bf16.mxu0 0
        %3117 = vmatpush1.bf16.msra.mxu0 %v2780
        %3118 = vmatprep.subr.bf16.mxu0 0
        %3119 = vmatpush1.bf16.msra.mxu0 %v2785
        %3120 = vmatprep.subr.bf16.mxu0 0
        %3121 = vmatpush1.bf16.msra.mxu0 %v2790
        %3122 = vmatprep.subr.bf16.mxu0 0
        %3123 = vmatpush1.bf16.msra.mxu0 %v2795
        %3124 = vmatprep.subr.bf16.mxu0 0
        %3125 = vmatpush1.bf16.msra.mxu0 %v2800
        %3126 = vmatprep.subr.bf16.mxu0 0
        %3127 = vmatpush1.bf16.msra.mxu0 %v2805
        %3128 = vmatprep.subr.bf16.mxu0 0
        %3129 = vmatpush1.bf16.msra.mxu0 %v2810
        %3130 = vmatprep.subr.bf16.mxu0 0
        %3131 = vmatpush1.bf16.msra.mxu0 %v2815
        %3132 = vmatprep.subr.bf16.mxu0 0
        %3133 = vmatpush1.bf16.msra.mxu0 %v2820
        %3134 = vmatprep.subr.bf16.mxu0 0
        %3135 = vmatpush1.bf16.msra.mxu0 %v2825
        %3136 = vmatprep.subr.bf16.mxu0 0
        %3137 = vmatpush1.bf16.msra.mxu0 %v2830
        %3138 = vmatprep.mubr.bf16.mxu0 %v2448
        %3139 = vmatmul.mubr.bf16.gmra.mrb[0].mxu0 %v2436
        %v3140 = vpop.f32.mrb[0].mxu0
        %v3141 = vadd.f32 0.0, %v3140
        %v3142 = vpop.f32.mrb[0].mxu0
        %v3143 = vpop.f32.mrb[0].mxu0
        %v3144 = vadd.f32 0.0, %v3143
        %v3145 = vpop.f32.mrb[0].mxu0
        %3146 = vdwg.mxu0
        %3147 = vmatprep.subr.bf16.mxu0 0
        %3148 = vmatpush1.bf16.msra.mxu0 %v2835
        %3149 = vmatprep.subr.bf16.mxu0 0
        %3150 = vmatpush1.bf16.msra.mxu0 %v2840
        %3151 = vmatprep.subr.bf16.mxu0 0
        %3152 = vmatpush1.bf16.msra.mxu0 0
        %3153 = vmatprep.subr.bf16.mxu0 0
        %3154 = vmatpush1.bf16.msra.mxu0 0
        %3155 = vmatprep.subr.bf16.mxu0 0
        %3156 = vmatpush1.bf16.msra.mxu0 0
        %3157 = vmatprep.subr.bf16.mxu0 0
        %3158 = vmatpush1.bf16.msra.mxu0 0
        %3159 = vmatprep.subr.bf16.mxu0 0
        %3160 = vmatpush1.bf16.msra.mxu0 0
        %3161 = vmatprep.subr.bf16.mxu0 0
        %3162 = vmatpush1.bf16.msra.mxu0 0
        %3163 = vmatprep.subr.bf16.mxu0 0
        %3164 = vmatpush1.bf16.msra.mxu0 0
        %3165 = vmatprep.subr.bf16.mxu0 0
        %3166 = vmatpush1.bf16.msra.mxu0 0
        %3167 = vmatprep.subr.bf16.mxu0 0
        %3168 = vmatpush1.bf16.msra.mxu0 0
        %3169 = vmatprep.subr.bf16.mxu0 0
        %3170 = vmatpush1.bf16.msra.mxu0 0
        %3171 = vmatprep.subr.bf16.mxu0 0
        %3172 = vmatpush1.bf16.msra.mxu0 0
        %3173 = vmatprep.subr.bf16.mxu0 0
        %3174 = vmatpush1.bf16.msra.mxu0 0
        %3175 = vmatprep.subr.bf16.mxu0 0
        %3176 = vmatpush1.bf16.msra.mxu0 0
        %3177 = vmatprep.subr.bf16.mxu0 0
        %3178 = vmatpush1.bf16.msra.mxu0 0
        %3179 = vmatprep.mubr.bf16.mxu0 0
        %3180 = vmatmul.mubr.bf16.gmra.mrb[0].mxu0 %v2932
        %v3181 = vpop.f32.mrb[0].mxu0
        %v3182 = vadd.f32 %v3141, %v3181
        %v3183 = vpop.f32.mrb[0].mxu0
        %v3184 = vpop.f32.mrb[0].mxu0
        %v3185 = vadd.f32 %v3144, %v3184
        %v3186 = vpop.f32.mrb[0].mxu0
        %3187 = vdwg.mxu0
        %v3298 = vunpack.c.l.b16 %v2185
        %v3299 = vunpack.c.h.b16 %v2185
        %v3300 = vunpack.c.l.b16 %v2186
        %v3301 = vunpack.c.h.b16 %v2186
        %v3302 = vunpack.c.l.b16 %v2187
        %v3303 = vunpack.c.l.b16 %v2188
        %v3304 = vunpack.c.h.b16 %v2188
        %v3305 = vunpack.c.l.b16 %v2189
        %v3306 = vunpack.c.h.b16 %v2189
        %v3307 = vunpack.c.l.b16 %v2190
        %v3308 = vunpack.c.l.b16 %v2191
        %v3309 = vunpack.c.h.b16 %v2191
        %v3310 = vunpack.c.l.b16 %v2192
        %v3311 = vunpack.c.h.b16 %v2192
        %v3312 = vunpack.c.l.b16 %v2193
        %v3313 = vunpack.c.l.b16 %v2194
        %v3314 = vunpack.c.h.b16 %v2194
        %v3315 = vunpack.c.l.b16 %v2195
        %v3316 = vunpack.c.h.b16 %v2195
        %v3317 = vunpack.c.l.b16 %v2196
        %v3318 = vunpack.c.l.b16 %v2197
        %v3319 = vunpack.c.h.b16 %v2197
        %v3320 = vunpack.c.l.b16 %v2198
        %v3321 = vunpack.c.h.b16 %v2198
        %v3322 = vunpack.c.l.b16 %v2199
        %v3323 = vunpack.c.l.b16 %v2200
        %v3324 = vunpack.c.h.b16 %v2200
        %v3325 = vunpack.c.l.b16 %v2201
        %v3326 = vunpack.c.h.b16 %v2201
        %v3327 = vunpack.c.l.b16 %v2202
        %v3328 = vunpack.c.l.b16 %v2203
        %v3329 = vunpack.c.h.b16 %v2203
        %v3330 = vunpack.c.l.b16 %v2204
        %v3331 = vunpack.c.h.b16 %v2204
        %v3332 = vunpack.c.l.b16 %v2205
        %v3333 = vunpack.c.l.b16 %v2206
        %v3334 = vunpack.c.h.b16 %v2206
        %v3335 = vunpack.c.l.b16 %v2207
        %v3336 = vunpack.c.h.b16 %v2207
        %v3337 = vunpack.c.l.b16 %v2208
        %v3338 = vunpack.c.l.b16 %v2209
        %v3339 = vunpack.c.h.b16 %v2209
        %v3340 = vunpack.c.l.b16 %v2210
        %v3341 = vunpack.c.h.b16 %v2210
        %v3342 = vunpack.c.l.b16 %v2211
        %v3343 = vunpack.c.l.b16 %v2212
        %v3344 = vunpack.c.h.b16 %v2212
        %v3345 = vunpack.c.l.b16 %v2213
        %v3346 = vunpack.c.h.b16 %v2213
        %v3347 = vunpack.c.l.b16 %v2214
        %v3348 = vunpack.c.l.b16 %v2215
        %v3349 = vunpack.c.h.b16 %v2215
        %v3350 = vunpack.c.l.b16 %v2216
        %v3351 = vunpack.c.h.b16 %v2216
        %v3352 = vunpack.c.l.b16 %v2217
        %v3353 = vunpack.c.l.b16 %v2218
        %v3354 = vunpack.c.h.b16 %v2218
        %v3355 = vunpack.c.l.b16 %v2219
        %v3356 = vunpack.c.h.b16 %v2219
        %v3357 = vunpack.c.l.b16 %v2220
        %v3358 = vunpack.c.l.b16 %v2221
        %v3359 = vunpack.c.h.b16 %v2221
        %v3360 = vunpack.c.l.b16 %v2222
        %v3361 = vunpack.c.h.b16 %v2222
        %v3362 = vunpack.c.l.b16 %v2223
        %v3363 = vunpack.c.l.b16 %v2224
        %v3364 = vunpack.c.h.b16 %v2224
        %v3365 = vunpack.c.l.b16 %v2225
        %v3366 = vunpack.c.h.b16 %v2225
        %v3367 = vunpack.c.l.b16 %v2226
        %v3368 = vunpack.c.l.b16 %v2227
        %v3369 = vunpack.c.h.b16 %v2227
        %v3370 = vunpack.c.l.b16 %v2228
        %v3371 = vunpack.c.h.b16 %v2228
        %v3372 = vunpack.c.l.b16 %v2229
        %v3373 = vunpack.c.l.b16 %v2230
        %v3374 = vunpack.c.h.b16 %v2230
        %v3375 = vunpack.c.l.b16 %v2231
        %v3376 = vunpack.c.h.b16 %v2231
        %v3377 = vunpack.c.l.b16 %v2232
        %v3378 = vunpack.c.l.b16 %v2233
        %v3379 = vunpack.c.h.b16 %v2233
        %v3380 = vunpack.c.l.b16 %v2234
        %v3381 = vunpack.c.h.b16 %v2234
        %v3382 = vunpack.c.l.b16 %v2235
        %v3383 = vunpack.c.l.b16 %v2236
        %v3384 = vunpack.c.h.b16 %v2236
        %v3385 = vunpack.c.l.b16 %v2237
        %v3386 = vunpack.c.h.b16 %v2237
        %v3387 = vunpack.c.l.b16 %v2238
        %v3388 = vunpack.c.l.b16 %v2239
        %v3389 = vunpack.c.h.b16 %v2239
        %v3390 = vunpack.c.l.b16 %v2240
        %v3391 = vunpack.c.h.b16 %v2240
        %v3392 = vunpack.c.l.b16 %v2241
        %v3393 = vunpack.c.l.b16 %v2242
        %v3394 = vunpack.c.h.b16 %v2242
        %v3395 = vunpack.c.l.b16 %v2243
        %v3396 = vunpack.c.h.b16 %v2243
        %v3397 = vunpack.c.l.b16 %v2244
        %v3398 = vunpack.c.l.b16 %v2245
        %v3399 = vunpack.c.h.b16 %v2245
        %v3400 = vunpack.c.l.b16 %v2246
        %v3401 = vunpack.c.h.b16 %v2246
        %v3402 = vunpack.c.l.b16 %v2247
        %v3403 = vunpack.c.l.b16 %v2248
        %v3404 = vunpack.c.h.b16 %v2248
        %v3405 = vunpack.c.l.b16 %v2249
        %v3406 = vunpack.c.h.b16 %v2249
        %v3407 = vunpack.c.l.b16 %v2250
        %v3408 = vunpack.c.l.b16 %v2251
        %v3409 = vunpack.c.h.b16 %v2251
        %v3410 = vunpack.c.l.b16 %v2252
        %v3411 = vunpack.c.h.b16 %v2252
        %v3412 = vunpack.c.l.b16 %v2253
        %v3413 = vunpack.c.l.b16 %v2254
        %v3414 = vunpack.c.h.b16 %v2254
        %v3415 = vunpack.c.l.b16 %v2255
        %v3416 = vunpack.c.h.b16 %v2255
        %v3417 = vunpack.c.l.b16 %v2256
        %v3418 = vunpack.c.l.b16 %v2257
        %v3419 = vunpack.c.h.b16 %v2257
        %v3420 = vunpack.c.l.b16 %v2258
        %v3421 = vunpack.c.h.b16 %v2258
        %v3422 = vunpack.c.l.b16 %v2259
        %v3423 = vunpack.c.l.b16 %v2260
        %v3424 = vunpack.c.h.b16 %v2260
        %v3425 = vunpack.c.l.b16 %v2261
        %v3426 = vunpack.c.h.b16 %v2261
        %v3427 = vunpack.c.l.b16 %v2262
        %v3428 = vunpack.c.l.b16 %v2263
        %v3429 = vunpack.c.h.b16 %v2263
        %v3430 = vunpack.c.l.b16 %v2264
        %v3431 = vunpack.c.h.b16 %v2264
        %v3432 = vunpack.c.l.b16 %v2265
        %v3433 = vunpack.c.l.b16 %v2266
        %v3434 = vunpack.c.h.b16 %v2266
        %v3435 = vunpack.c.l.b16 %v2267
        %v3436 = vunpack.c.h.b16 %v2267
        %v3437 = vunpack.c.l.b16 %v2268
        %v3438 = vunpack.c.l.b16 %v2269
        %v3439 = vunpack.c.h.b16 %v2269
        %v3440 = vunpack.c.l.b16 %v2270
        %v3441 = vunpack.c.h.b16 %v2270
        %v3442 = vunpack.c.l.b16 %v2271
        %v3443 = vunpack.c.l.b16 %v2272
        %v3444 = vunpack.c.h.b16 %v2272
        %v3445 = vunpack.c.l.b16 %v2273
        %v3446 = vunpack.c.h.b16 %v2273
        %v3447 = vunpack.c.l.b16 %v2274
        %v3448 = vunpack.c.l.b16 %v2275
        %v3449 = vunpack.c.h.b16 %v2275
        %v3450 = vunpack.c.l.b16 %v2276
        %v3451 = vunpack.c.h.b16 %v2276
        %v3452 = vunpack.c.l.b16 %v2277
        %v3453 = vunpack.c.l.b16 %v2278
        %v3454 = vunpack.c.h.b16 %v2278
        %v3455 = vunpack.c.l.b16 %v2279
        %v3456 = vunpack.c.h.b16 %v2279
        %v3457 = vunpack.c.l.b16 %v2280
        %v3458 = vunpack.c.l.b16 %v2281
        %v3459 = vunpack.c.h.b16 %v2281
        %v3460 = vunpack.c.l.b16 %v2282
        %v3461 = vunpack.c.h.b16 %v2282
        %v3462 = vunpack.c.l.b16 %v2283
        %v3463 = vunpack.c.l.b16 %v2284
        %v3464 = vunpack.c.h.b16 %v2284
        %v3465 = vunpack.c.l.b16 %v2285
        %v3466 = vunpack.c.h.b16 %v2285
        %v3467 = vunpack.c.l.b16 %v2286
        %v3468 = vunpack.c.l.b16 %v2287
        %v3469 = vunpack.c.h.b16 %v2287
        %v3470 = vunpack.c.l.b16 %v2288
        %v3471 = vunpack.c.h.b16 %v2288
        %v3472 = vunpack.c.l.b16 %v2289
        %v3473 = vunpack.c.l.b16 %v2290
        %v3474 = vunpack.c.h.b16 %v2290
        %v3475 = vunpack.c.l.b16 %v2291
        %v3476 = vunpack.c.h.b16 %v2291
        %v3477 = vunpack.c.l.b16 %v2292
        %v3478 = vpack.c.b16 %v3303, %v3298
        %v3479 = vpack.c.b16 %v3304, %v3299
        %v3480 = vpack.c.b16 %v3305, %v3300
        %v3481 = vpack.c.b16 %v3306, %v3301
        %v3482 = vpack.c.b16 %v3307, %v3302
        %v3483 = vpack.c.b16 %v3313, %v3308
        %v3484 = vpack.c.b16 %v3314, %v3309
        %v3485 = vpack.c.b16 %v3315, %v3310
        %v3486 = vpack.c.b16 %v3316, %v3311
        %v3487 = vpack.c.b16 %v3317, %v3312
        %v3488 = vpack.c.b16 %v3323, %v3318
        %v3489 = vpack.c.b16 %v3324, %v3319
        %v3490 = vpack.c.b16 %v3325, %v3320
        %v3491 = vpack.c.b16 %v3326, %v3321
        %v3492 = vpack.c.b16 %v3327, %v3322
        %v3493 = vpack.c.b16 %v3333, %v3328
        %v3494 = vpack.c.b16 %v3334, %v3329
        %v3495 = vpack.c.b16 %v3335, %v3330
        %v3496 = vpack.c.b16 %v3336, %v3331
        %v3497 = vpack.c.b16 %v3337, %v3332
        %v3498 = vpack.c.b16 %v3343, %v3338
        %v3499 = vpack.c.b16 %v3344, %v3339
        %v3500 = vpack.c.b16 %v3345, %v3340
        %v3501 = vpack.c.b16 %v3346, %v3341
        %v3502 = vpack.c.b16 %v3347, %v3342
        %v3503 = vpack.c.b16 %v3353, %v3348
        %v3504 = vpack.c.b16 %v3354, %v3349
        %v3505 = vpack.c.b16 %v3355, %v3350
        %v3506 = vpack.c.b16 %v3356, %v3351
        %v3507 = vpack.c.b16 %v3357, %v3352
        %v3508 = vpack.c.b16 %v3363, %v3358
        %v3509 = vpack.c.b16 %v3364, %v3359
        %v3510 = vpack.c.b16 %v3365, %v3360
        %v3511 = vpack.c.b16 %v3366, %v3361
        %v3512 = vpack.c.b16 %v3367, %v3362
        %v3513 = vpack.c.b16 %v3373, %v3368
        %v3514 = vpack.c.b16 %v3374, %v3369
        %v3515 = vpack.c.b16 %v3375, %v3370
        %v3516 = vpack.c.b16 %v3376, %v3371
        %v3517 = vpack.c.b16 %v3377, %v3372
        %v3518 = vpack.c.b16 %v3383, %v3378
        %v3519 = vpack.c.b16 %v3384, %v3379
        %v3520 = vpack.c.b16 %v3385, %v3380
        %v3521 = vpack.c.b16 %v3386, %v3381
        %v3522 = vpack.c.b16 %v3387, %v3382
        %v3523 = vpack.c.b16 %v3393, %v3388
        %v3524 = vpack.c.b16 %v3394, %v3389
        %v3525 = vpack.c.b16 %v3395, %v3390
        %v3526 = vpack.c.b16 %v3396, %v3391
        %v3527 = vpack.c.b16 %v3397, %v3392
        %v3528 = vpack.c.b16 %v3403, %v3398
        %v3529 = vpack.c.b16 %v3404, %v3399
        %v3530 = vpack.c.b16 %v3405, %v3400
        %v3531 = vpack.c.b16 %v3406, %v3401
        %v3532 = vpack.c.b16 %v3407, %v3402
        %v3533 = vpack.c.b16 %v3413, %v3408
        %v3534 = vpack.c.b16 %v3414, %v3409
        %v3535 = vpack.c.b16 %v3415, %v3410
        %v3536 = vpack.c.b16 %v3416, %v3411
        %v3537 = vpack.c.b16 %v3417, %v3412
        %v3538 = vpack.c.b16 %v3423, %v3418
        %v3539 = vpack.c.b16 %v3424, %v3419
        %v3540 = vpack.c.b16 %v3425, %v3420
        %v3541 = vpack.c.b16 %v3426, %v3421
        %v3542 = vpack.c.b16 %v3427, %v3422
        %v3543 = vpack.c.b16 %v3433, %v3428
        %v3544 = vpack.c.b16 %v3434, %v3429
        %v3545 = vpack.c.b16 %v3435, %v3430
        %v3546 = vpack.c.b16 %v3436, %v3431
        %v3547 = vpack.c.b16 %v3437, %v3432
        %v3548 = vpack.c.b16 %v3443, %v3438
        %v3549 = vpack.c.b16 %v3444, %v3439
        %v3550 = vpack.c.b16 %v3445, %v3440
        %v3551 = vpack.c.b16 %v3446, %v3441
        %v3552 = vpack.c.b16 %v3447, %v3442
        %v3553 = vpack.c.b16 %v3453, %v3448
        %v3554 = vpack.c.b16 %v3454, %v3449
        %v3555 = vpack.c.b16 %v3455, %v3450
        %v3556 = vpack.c.b16 %v3456, %v3451
        %v3557 = vpack.c.b16 %v3457, %v3452
        %v3558 = vpack.c.b16 %v3463, %v3458
        %v3559 = vpack.c.b16 %v3464, %v3459
        %v3560 = vpack.c.b16 %v3465, %v3460
        %v3561 = vpack.c.b16 %v3466, %v3461
        %v3562 = vpack.c.b16 %v3467, %v3462
        %v3563 = vpack.c.b16 %v3473, %v3468
        %v3564 = vpack.c.b16 %v3474, %v3469
        %v3565 = vpack.c.b16 %v3475, %v3470
        %v3566 = vpack.c.b16 %v3476, %v3471
        %v3567 = vpack.c.b16 %v3477, %v3472
        %v3658 = vsel %vm859, %v2421, 0
        %3660 = vmatprep.subr.bf16.mxu0 %v3479
        %3661 = vmatpush1.bf16.msra.mxu0 %v3478
        %3662 = vmatprep.subr.bf16.mxu0 %v3484
        %3663 = vmatpush1.bf16.msra.mxu0 %v3483
        %3664 = vmatprep.subr.bf16.mxu0 %v3489
        %3665 = vmatpush1.bf16.msra.mxu0 %v3488
        %3666 = vmatprep.subr.bf16.mxu0 %v3494
        %3667 = vmatpush1.bf16.msra.mxu0 %v3493
        %3668 = vmatprep.subr.bf16.mxu0 %v3499
        %3669 = vmatpush1.bf16.msra.mxu0 %v3498
        %3670 = vmatprep.subr.bf16.mxu0 %v3504
        %3671 = vmatpush1.bf16.msra.mxu0 %v3503
        %3672 = vmatprep.subr.bf16.mxu0 %v3509
        %3673 = vmatpush1.bf16.msra.mxu0 %v3508
        %3674 = vmatprep.subr.bf16.mxu0 %v3514
        %3675 = vmatpush1.bf16.msra.mxu0 %v3513
        %3676 = vmatprep.subr.bf16.mxu0 %v3519
        %3677 = vmatpush1.bf16.msra.mxu0 %v3518
        %3678 = vmatprep.subr.bf16.mxu0 %v3524
        %3679 = vmatpush1.bf16.msra.mxu0 %v3523
        %3680 = vmatprep.subr.bf16.mxu0 %v3529
        %3681 = vmatpush1.bf16.msra.mxu0 %v3528
        %3682 = vmatprep.subr.bf16.mxu0 %v3534
        %3683 = vmatpush1.bf16.msra.mxu0 %v3533
        %3684 = vmatprep.subr.bf16.mxu0 %v3539
        %3685 = vmatpush1.bf16.msra.mxu0 %v3538
        %3686 = vmatprep.subr.bf16.mxu0 %v3544
        %3687 = vmatpush1.bf16.msra.mxu0 %v3543
        %3688 = vmatprep.subr.bf16.mxu0 %v3549
        %3689 = vmatpush1.bf16.msra.mxu0 %v3548
        %3690 = vmatprep.subr.bf16.mxu0 %v3554
        %3691 = vmatpush1.bf16.msra.mxu0 %v3553
        %3692 = vmatprep.mubr.bf16.mxu0 %v2420
        %3693 = vmatmul.mubr.bf16.gmra.mrb[0].mxu0 %v2419
        %v3694 = vpop.f32.mrb[0].mxu0
        %v3695 = vadd.f32 %v3012, %v3694
        %v3696 = vpop.f32.mrb[0].mxu0
        %v3697 = vadd.f32 %v3014, %v3696
        %v3698 = vpop.f32.mrb[0].mxu0
        %v3699 = vadd.f32 %v3016, %v3698
        %v3700 = vpop.f32.mrb[0].mxu0
        %v3701 = vadd.f32 %v3018, %v3700
        %3702 = vdwg.mxu0
        %3703 = vmatprep.subr.bf16.mxu0 %v3559
        %3704 = vmatpush1.bf16.msra.mxu0 %v3558
        %3705 = vmatprep.subr.bf16.mxu0 %v3564
        %3706 = vmatpush1.bf16.msra.mxu0 %v3563
        %3707 = vmatprep.subr.bf16.mxu0 0
        %3708 = vmatpush1.bf16.msra.mxu0 0
        %3709 = vmatprep.subr.bf16.mxu0 0
        %3710 = vmatpush1.bf16.msra.mxu0 0
        %3711 = vmatprep.subr.bf16.mxu0 0
        %3712 = vmatpush1.bf16.msra.mxu0 0
        %3713 = vmatprep.subr.bf16.mxu0 0
        %3714 = vmatpush1.bf16.msra.mxu0 0
        %3715 = vmatprep.subr.bf16.mxu0 0
        %3716 = vmatpush1.bf16.msra.mxu0 0
        %3717 = vmatprep.subr.bf16.mxu0 0
        %3718 = vmatpush1.bf16.msra.mxu0 0
        %3719 = vmatprep.subr.bf16.mxu0 0
        %3720 = vmatpush1.bf16.msra.mxu0 0
        %3721 = vmatprep.subr.bf16.mxu0 0
        %3722 = vmatpush1.bf16.msra.mxu0 0
        %3723 = vmatprep.subr.bf16.mxu0 0
        %3724 = vmatpush1.bf16.msra.mxu0 0
        %3725 = vmatprep.subr.bf16.mxu0 0
        %3726 = vmatpush1.bf16.msra.mxu0 0
        %3727 = vmatprep.subr.bf16.mxu0 0
        %3728 = vmatpush1.bf16.msra.mxu0 0
        %3729 = vmatprep.subr.bf16.mxu0 0
        %3730 = vmatpush1.bf16.msra.mxu0 0
        %3731 = vmatprep.subr.bf16.mxu0 0
        %3732 = vmatpush1.bf16.msra.mxu0 0
        %3733 = vmatprep.subr.bf16.mxu0 0
        %3734 = vmatpush1.bf16.msra.mxu0 0
        %3735 = vmatprep.mubr.bf16.mxu0 0
        %3736 = vmatmul.mubr.bf16.gmra.mrb[0].mxu0 %v3658
        %v3737 = vpop.f32.mrb[0].mxu0
        %v3738 = vadd.f32 %v3695, %v3737
        %v3739 = vpop.f32.mrb[0].mxu0
        %v3740 = vadd.f32 %v3697, %v3739
        %v3741 = vpop.f32.mrb[0].mxu0
        %v3742 = vadd.f32 %v3699, %v3741
        %v3743 = vpop.f32.mrb[0].mxu0
        %v3744 = vadd.f32 %v3701, %v3743
        %3745 = vdwg.mxu0
        %3746 = vmatprep.subr.bf16.mxu0 %v3481
        %3747 = vmatpush1.bf16.msra.mxu0 %v3480
        %3748 = vmatprep.subr.bf16.mxu0 %v3486
        %3749 = vmatpush1.bf16.msra.mxu0 %v3485
        %3750 = vmatprep.subr.bf16.mxu0 %v3491
        %3751 = vmatpush1.bf16.msra.mxu0 %v3490
        %3752 = vmatprep.subr.bf16.mxu0 %v3496
        %3753 = vmatpush1.bf16.msra.mxu0 %v3495
        %3754 = vmatprep.subr.bf16.mxu0 %v3501
        %3755 = vmatpush1.bf16.msra.mxu0 %v3500
        %3756 = vmatprep.subr.bf16.mxu0 %v3506
        %3757 = vmatpush1.bf16.msra.mxu0 %v3505
        %3758 = vmatprep.subr.bf16.mxu0 %v3511
        %3759 = vmatpush1.bf16.msra.mxu0 %v3510
        %3760 = vmatprep.subr.bf16.mxu0 %v3516
        %3761 = vmatpush1.bf16.msra.mxu0 %v3515
        %3762 = vmatprep.subr.bf16.mxu0 %v3521
        %3763 = vmatpush1.bf16.msra.mxu0 %v3520
        %3764 = vmatprep.subr.bf16.mxu0 %v3526
        %3765 = vmatpush1.bf16.msra.mxu0 %v3525
        %3766 = vmatprep.subr.bf16.mxu0 %v3531
        %3767 = vmatpush1.bf16.msra.mxu0 %v3530
        %3768 = vmatprep.subr.bf16.mxu0 %v3536
        %3769 = vmatpush1.bf16.msra.mxu0 %v3535
        %3770 = vmatprep.subr.bf16.mxu0 %v3541
        %3771 = vmatpush1.bf16.msra.mxu0 %v3540
        %3772 = vmatprep.subr.bf16.mxu0 %v3546
        %3773 = vmatpush1.bf16.msra.mxu0 %v3545
        %3774 = vmatprep.subr.bf16.mxu0 %v3551
        %3775 = vmatpush1.bf16.msra.mxu0 %v3550
        %3776 = vmatprep.subr.bf16.mxu0 %v3556
        %3777 = vmatpush1.bf16.msra.mxu0 %v3555
        %3778 = vmatprep.mubr.bf16.mxu0 %v2420
        %3779 = vmatmul.mubr.bf16.gmra.mrb[0].mxu0 %v2419
        %v3780 = vpop.f32.mrb[0].mxu0
        %v3781 = vadd.f32 %v3098, %v3780
        %v3782 = vpop.f32.mrb[0].mxu0
        %v3783 = vadd.f32 %v3100, %v3782
        %v3784 = vpop.f32.mrb[0].mxu0
        %v3785 = vadd.f32 %v3102, %v3784
        %v3786 = vpop.f32.mrb[0].mxu0
        %v3787 = vadd.f32 %v3104, %v3786
        %3788 = vdwg.mxu0
        %3789 = vmatprep.subr.bf16.mxu0 %v3561
        %3790 = vmatpush1.bf16.msra.mxu0 %v3560
        %3791 = vmatprep.subr.bf16.mxu0 %v3566
        %3792 = vmatpush1.bf16.msra.mxu0 %v3565
        %3793 = vmatprep.subr.bf16.mxu0 0
        %3794 = vmatpush1.bf16.msra.mxu0 0
        %3795 = vmatprep.subr.bf16.mxu0 0
        %3796 = vmatpush1.bf16.msra.mxu0 0
        %3797 = vmatprep.subr.bf16.mxu0 0
        %3798 = vmatpush1.bf16.msra.mxu0 0
        %3799 = vmatprep.subr.bf16.mxu0 0
        %3800 = vmatpush1.bf16.msra.mxu0 0
        %3801 = vmatprep.subr.bf16.mxu0 0
        %3802 = vmatpush1.bf16.msra.mxu0 0
        %3803 = vmatprep.subr.bf16.mxu0 0
        %3804 = vmatpush1.bf16.msra.mxu0 0
        %3805 = vmatprep.subr.bf16.mxu0 0
        %3806 = vmatpush1.bf16.msra.mxu0 0
        %3807 = vmatprep.subr.bf16.mxu0 0
        %3808 = vmatpush1.bf16.msra.mxu0 0
        %3809 = vmatprep.subr.bf16.mxu0 0
        %3810 = vmatpush1.bf16.msra.mxu0 0
        %3811 = vmatprep.subr.bf16.mxu0 0
        %3812 = vmatpush1.bf16.msra.mxu0 0
        %3813 = vmatprep.subr.bf16.mxu0 0
        %3814 = vmatpush1.bf16.msra.mxu0 0
        %3815 = vmatprep.subr.bf16.mxu0 0
        %3816 = vmatpush1.bf16.msra.mxu0 0
        %3817 = vmatprep.subr.bf16.mxu0 0
        %3818 = vmatpush1.bf16.msra.mxu0 0
        %3819 = vmatprep.subr.bf16.mxu0 0
        %3820 = vmatpush1.bf16.msra.mxu0 0
        %3821 = vmatprep.mubr.bf16.mxu0 0
        %3822 = vmatmul.mubr.bf16.gmra.mrb[0].mxu0 %v3658
        %v3823 = vpop.f32.mrb[0].mxu0
        %v3824 = vadd.f32 %v3781, %v3823
        %v3825 = vpop.f32.mrb[0].mxu0
        %v3826 = vadd.f32 %v3783, %v3825
        %v3827 = vpop.f32.mrb[0].mxu0
        %v3828 = vadd.f32 %v3785, %v3827
        %v3829 = vpop.f32.mrb[0].mxu0
        %v3830 = vadd.f32 %v3787, %v3829
        %3831 = vdwg.mxu0
        %3832 = vmatprep.subr.bf16.mxu0 0
        %3833 = vmatpush1.bf16.msra.mxu0 %v3482
        %3834 = vmatprep.subr.bf16.mxu0 0
        %3835 = vmatpush1.bf16.msra.mxu0 %v3487
        %3836 = vmatprep.subr.bf16.mxu0 0
        %3837 = vmatpush1.bf16.msra.mxu0 %v3492
        %3838 = vmatprep.subr.bf16.mxu0 0
        %3839 = vmatpush1.bf16.msra.mxu0 %v3497
        %3840 = vmatprep.subr.bf16.mxu0 0
        %3841 = vmatpush1.bf16.msra.mxu0 %v3502
        %3842 = vmatprep.subr.bf16.mxu0 0
        %3843 = vmatpush1.bf16.msra.mxu0 %v3507
        %3844 = vmatprep.subr.bf16.mxu0 0
        %3845 = vmatpush1.bf16.msra.mxu0 %v3512
        %3846 = vmatprep.subr.bf16.mxu0 0
        %3847 = vmatpush1.bf16.msra.mxu0 %v3517
        %3848 = vmatprep.subr.bf16.mxu0 0
        %3849 = vmatpush1.bf16.msra.mxu0 %v3522
        %3850 = vmatprep.subr.bf16.mxu0 0
        %3851 = vmatpush1.bf16.msra.mxu0 %v3527
        %3852 = vmatprep.subr.bf16.mxu0 0
        %3853 = vmatpush1.bf16.msra.mxu0 %v3532
        %3854 = vmatprep.subr.bf16.mxu0 0
        %3855 = vmatpush1.bf16.msra.mxu0 %v3537
        %3856 = vmatprep.subr.bf16.mxu0 0
        %3857 = vmatpush1.bf16.msra.mxu0 %v3542
        %3858 = vmatprep.subr.bf16.mxu0 0
        %3859 = vmatpush1.bf16.msra.mxu0 %v3547
        %3860 = vmatprep.subr.bf16.mxu0 0
        %3861 = vmatpush1.bf16.msra.mxu0 %v3552
        %3862 = vmatprep.subr.bf16.mxu0 0
        %3863 = vmatpush1.bf16.msra.mxu0 %v3557
        %3864 = vmatprep.mubr.bf16.mxu0 %v2420
        %3865 = vmatmul.mubr.bf16.gmra.mrb[0].mxu0 %v2419
        %v3866 = vpop.f32.mrb[0].mxu0
        %v3867 = vadd.f32 %v3182, %v3866
        %v3868 = vpop.f32.mrb[0].mxu0
        %v3869 = vpop.f32.mrb[0].mxu0
        %v3870 = vadd.f32 %v3185, %v3869
        %v3871 = vpop.f32.mrb[0].mxu0
        %3872 = vdwg.mxu0
        %3873 = vmatprep.subr.bf16.mxu0 0
        %3874 = vmatpush1.bf16.msra.mxu0 %v3562
        %3875 = vmatprep.subr.bf16.mxu0 0
        %3876 = vmatpush1.bf16.msra.mxu0 %v3567
        %3877 = vmatprep.subr.bf16.mxu0 0
        %3878 = vmatpush1.bf16.msra.mxu0 0
        %3879 = vmatprep.subr.bf16.mxu0 0
        %3880 = vmatpush1.bf16.msra.mxu0 0
        %3881 = vmatprep.subr.bf16.mxu0 0
        %3882 = vmatpush1.bf16.msra.mxu0 0
        %3883 = vmatprep.subr.bf16.mxu0 0
        %3884 = vmatpush1.bf16.msra.mxu0 0
        %3885 = vmatprep.subr.bf16.mxu0 0
        %3886 = vmatpush1.bf16.msra.mxu0 0
        %3887 = vmatprep.subr.bf16.mxu0 0
        %3888 = vmatpush1.bf16.msra.mxu0 0
        %3889 = vmatprep.subr.bf16.mxu0 0
        %3890 = vmatpush1.bf16.msra.mxu0 0
        %3891 = vmatprep.subr.bf16.mxu0 0
        %3892 = vmatpush1.bf16.msra.mxu0 0
        %3893 = vmatprep.subr.bf16.mxu0 0
        %3894 = vmatpush1.bf16.msra.mxu0 0
        %3895 = vmatprep.subr.bf16.mxu0 0
        %3896 = vmatpush1.bf16.msra.mxu0 0
        %3897 = vmatprep.subr.bf16.mxu0 0
        %3898 = vmatpush1.bf16.msra.mxu0 0
        %3899 = vmatprep.subr.bf16.mxu0 0
        %3900 = vmatpush1.bf16.msra.mxu0 0
        %3901 = vmatprep.subr.bf16.mxu0 0
        %3902 = vmatpush1.bf16.msra.mxu0 0
        %3903 = vmatprep.subr.bf16.mxu0 0
        %3904 = vmatpush1.bf16.msra.mxu0 0
        %3905 = vmatprep.mubr.bf16.mxu0 0
        %3906 = vmatmul.mubr.bf16.gmra.mrb[0].mxu0 %v3658
        %v3907 = vpop.f32.mrb[0].mxu0
        %v3908 = vadd.f32 %v3867, %v3907
        %v3909 = vpop.f32.mrb[0].mxu0
        %v3910 = vpop.f32.mrb[0].mxu0
        %v3911 = vadd.f32 %v3870, %v3910
        %v3912 = vpop.f32.mrb[0].mxu0
        %3913 = vdwg.mxu0
        %v3914 = vld [vmem:[#allocation2] sm:$0xee]
        %v3915 = vld [vmem:[#allocation2 + $0x8] sm:$0xe]
        %s3916 = scalar_lea.vmem [#allocation8], 1440
        %v3917 = vld [vmem:[%s3916] sm:$0xff]
        %v3918 = vld [vmem:[%s3916 + $0x8] sm:$0xff]
        %v3919 = vld [vmem:[%s3916 + $0x10] sm:$0xf]
        %v3920 = vld [vmem:[%s3916 + $0x14] sm:$0xff]
        %v3921 = vld [vmem:[%s3916 + $0x1c] sm:$0xff]
        %v3922 = vld [vmem:[%s3916 + $0x24] sm:$0xf]
        %v3923 = vld [vmem:[%s3916 + $0x28] sm:$0xff]
        %v3924 = vld [vmem:[%s3916 + $0x30] sm:$0xff]
        %v3925 = vld [vmem:[%s3916 + $0x38] sm:$0xf]
        %v3926 = vld [vmem:[%s3916 + $0x3c] sm:$0xff]
        %v3927 = vld [vmem:[%s3916 + $0x44] sm:$0xff]
        %v3928 = vld [vmem:[%s3916 + $0x4c] sm:$0xf]
        %v3929 = vld [vmem:[%s3916 + $0x50] sm:$0xff]
        %v3930 = vld [vmem:[%s3916 + $0x58] sm:$0xff]
        %v3931 = vld [vmem:[%s3916 + $0x60] sm:$0xf]
        %v3932 = vld [vmem:[%s3916 + $0x64] sm:$0xff]
        %v3933 = vld [vmem:[%s3916 + $0x6c] sm:$0xff]
        %v3934 = vld [vmem:[%s3916 + $0x74] sm:$0xf]
        %v3935 = vld [vmem:[%s3916 + $0x78] sm:$0xff]
        %v3936 = vld [vmem:[%s3916 + $0x80] sm:$0xff]
        %v3937 = vld [vmem:[%s3916 + $0x88] sm:$0xf]
        %v3938 = vld [vmem:[%s3916 + $0x8c] sm:$0xff]
        %v3939 = vld [vmem:[%s3916 + $0x94] sm:$0xff]
        %v3940 = vld [vmem:[%s3916 + $0x9c] sm:$0xf]
        %v3941 = vld [vmem:[%s3916 + $0xa0] sm:$0xff]
        %v3942 = vld [vmem:[%s3916 + $0xa8] sm:$0xff]
        %v3943 = vld [vmem:[%s3916 + $0xb0] sm:$0xf]
        %v3944 = vld [vmem:[%s3916 + $0xb4] sm:$0xff]
        %v3945 = vld [vmem:[%s3916 + $0xbc] sm:$0xff]
        %v3946 = vld [vmem:[%s3916 + $0xc4] sm:$0xf]
        %v3947 = vld [vmem:[%s3916 + $0xc8] sm:$0xff]
        %v3948 = vld [vmem:[%s3916 + $0xd0] sm:$0xff]
        %v3949 = vld [vmem:[%s3916 + $0xd8] sm:$0xf]
        %v3950 = vld [vmem:[%s3916 + $0xdc] sm:$0xff]
        %v3951 = vld [vmem:[%s3916 + $0xe4] sm:$0xff]
        %v3952 = vld [vmem:[%s3916 + $0xec] sm:$0xf]
        %v3953 = vld [vmem:[%s3916 + $0xf0] sm:$0xff]
        %v3954 = vld [vmem:[%s3916 + $0xf8] sm:$0xff]
        %v3955 = vld [vmem:[%s3916 + $0x100] sm:$0xf]
        %v3956 = vld [vmem:[%s3916 + $0x104] sm:$0xff]
        %v3957 = vld [vmem:[%s3916 + $0x10c] sm:$0xff]
        %v3958 = vld [vmem:[%s3916 + $0x114] sm:$0xf]
        %v3959 = vld [vmem:[%s3916 + $0x118] sm:$0xff]
        %v3960 = vld [vmem:[%s3916 + $0x120] sm:$0xff]
        %v3961 = vld [vmem:[%s3916 + $0x128] sm:$0xf]
        %v3962 = vld [vmem:[%s3916 + $0x12c] sm:$0xff]
        %v3963 = vld [vmem:[%s3916 + $0x134] sm:$0xff]
        %v3964 = vld [vmem:[%s3916 + $0x13c] sm:$0xf]
        %v3965 = vld [vmem:[%s3916 + $0x140] sm:$0xff]
        %v3966 = vld [vmem:[%s3916 + $0x148] sm:$0xff]
        %v3967 = vld [vmem:[%s3916 + $0x150] sm:$0xf]
        %v3968 = vld [vmem:[%s3916 + $0x154] sm:$0xff]
        %v3969 = vld [vmem:[%s3916 + $0x15c] sm:$0xff]
        %v3970 = vld [vmem:[%s3916 + $0x164] sm:$0xf]
        %v3971 = vld [vmem:[%s3916 + $0x168] sm:$0xff]
        %v3972 = vld [vmem:[%s3916 + $0x170] sm:$0xff]
        %v3973 = vld [vmem:[%s3916 + $0x178] sm:$0xf]
        %v3974 = vld [vmem:[%s3916 + $0x17c] sm:$0xff]
        %v3975 = vld [vmem:[%s3916 + $0x184] sm:$0xff]
        %v3976 = vld [vmem:[%s3916 + $0x18c] sm:$0xf]
        %v3977 = vld [vmem:[%s3916 + $0x190] sm:$0xff]
        %v3978 = vld [vmem:[%s3916 + $0x198] sm:$0xff]
        %v3979 = vld [vmem:[%s3916 + $0x1a0] sm:$0xf]
        %v3980 = vld [vmem:[%s3916 + $0x1a4] sm:$0xff]
        %v3981 = vld [vmem:[%s3916 + $0x1ac] sm:$0xff]
        %v3982 = vld [vmem:[%s3916 + $0x1b4] sm:$0xf]
        %v3983 = vld [vmem:[%s3916 + $0x1b8] sm:$0xff]
        %v3984 = vld [vmem:[%s3916 + $0x1c0] sm:$0xff]
        %v3985 = vld [vmem:[%s3916 + $0x1c8] sm:$0xf]
        %v3986 = vld [vmem:[%s3916 + $0x1cc] sm:$0xff]
        %v3987 = vld [vmem:[%s3916 + $0x1d4] sm:$0xff]
        %v3988 = vld [vmem:[%s3916 + $0x1dc] sm:$0xf]
        %v3989 = vld [vmem:[%s3916 + $0x1e0] sm:$0xff]
        %v3990 = vld [vmem:[%s3916 + $0x1e8] sm:$0xff]
        %v3991 = vld [vmem:[%s3916 + $0x1f0] sm:$0xf]
        %v3992 = vld [vmem:[%s3916 + $0x1f4] sm:$0xff]
        %v3993 = vld [vmem:[%s3916 + $0x1fc] sm:$0xff]
        %v3994 = vld [vmem:[%s3916 + $0x204] sm:$0xf]
        %v3995 = vld [vmem:[%s3916 + $0x208] sm:$0xff]
        %v3996 = vld [vmem:[%s3916 + $0x210] sm:$0xff]
        %v3997 = vld [vmem:[%s3916 + $0x218] sm:$0xf]
        %v3998 = vld [vmem:[%s3916 + $0x21c] sm:$0xff]
        %v3999 = vld [vmem:[%s3916 + $0x224] sm:$0xff]
        %v4000 = vld [vmem:[%s3916 + $0x22c] sm:$0xf]
        %v4001 = vld [vmem:[%s3916 + $0x230] sm:$0xff]
        %v4002 = vld [vmem:[%s3916 + $0x238] sm:$0xff]
        %v4003 = vld [vmem:[%s3916 + $0x240] sm:$0xf]
        %v4004 = vld [vmem:[%s3916 + $0x244] sm:$0xff]
        %v4005 = vld [vmem:[%s3916 + $0x24c] sm:$0xff]
        %v4006 = vld [vmem:[%s3916 + $0x254] sm:$0xf]
        %v4007 = vld [vmem:[%s3916 + $0x258] sm:$0xff]
        %v4008 = vld [vmem:[%s3916 + $0x260] sm:$0xff]
        %v4009 = vld [vmem:[%s3916 + $0x268] sm:$0xf]
        %v4010 = vld [vmem:[%s3916 + $0x26c] sm:$0xff]
        %v4011 = vld [vmem:[%s3916 + $0x274] sm:$0xff]
        %v4012 = vld [vmem:[%s3916 + $0x27c] sm:$0xf]
        %v4013 = vld [vmem:[%s3916 + $0x280] sm:$0xff]
        %v4014 = vld [vmem:[%s3916 + $0x288] sm:$0xff]
        %v4015 = vld [vmem:[%s3916 + $0x290] sm:$0xf]
        %v4016 = vld [vmem:[%s3916 + $0x294] sm:$0xff]
        %v4017 = vld [vmem:[%s3916 + $0x29c] sm:$0xff]
        %v4018 = vld [vmem:[%s3916 + $0x2a4] sm:$0xf]
        %v4019 = vld [vmem:[%s3916 + $0x2a8] sm:$0xff]
        %v4020 = vld [vmem:[%s3916 + $0x2b0] sm:$0xff]
        %v4021 = vld [vmem:[%s3916 + $0x2b8] sm:$0xf]
        %v4022 = vld [vmem:[%s3916 + $0x2bc] sm:$0xff]
        %v4023 = vld [vmem:[%s3916 + $0x2c4] sm:$0xff]
        %v4024 = vld [vmem:[%s3916 + $0x2cc] sm:$0xf]
        %v4027 = vunpack.c.l.b16 %v3914
        %v4028 = vunpack.c.h.b16 %v3914
        %v4029 = vunpack.c.l.b16 %v3915
        %v4030 = vpack.c.b16 %v2413, %v4027
        %v4031 = vpack.c.b16 %v2414, %v4028
        %v4032 = vpack.c.b16 %v2415, %v4029
        %v4033 = vrot.slane %v4030, 1
        %v4034 = vrot.slane %v2422, 1
        %v4035 = vsel %vm1574, %v4033, %v4034
        %v4036 = vrot.slane %v4031, 1
        %v4037 = vrot.slane %v2423, 1
        %v4038 = vsel %vm1574, %v4036, %v4037
        %v4039 = vrot.slane %v4032, 1
        %v4040 = vrot.slane %v2424, 1
        %v4041 = vsel %vm1574, %v4039, %v4040
        %v4152 = vunpack.c.l.b16 %v3917
        %v4153 = vunpack.c.h.b16 %v3917
        %v4154 = vunpack.c.l.b16 %v3918
        %v4155 = vunpack.c.h.b16 %v3918
        %v4156 = vunpack.c.l.b16 %v3919
        %v4157 = vunpack.c.l.b16 %v3920
        %v4158 = vunpack.c.h.b16 %v3920
        %v4159 = vunpack.c.l.b16 %v3921
        %v4160 = vunpack.c.h.b16 %v3921
        %v4161 = vunpack.c.l.b16 %v3922
        %v4162 = vunpack.c.l.b16 %v3923
        %v4163 = vunpack.c.h.b16 %v3923
        %v4164 = vunpack.c.l.b16 %v3924
        %v4165 = vunpack.c.h.b16 %v3924
        %v4166 = vunpack.c.l.b16 %v3925
        %v4167 = vunpack.c.l.b16 %v3926
        %v4168 = vunpack.c.h.b16 %v3926
        %v4169 = vunpack.c.l.b16 %v3927
        %v4170 = vunpack.c.h.b16 %v3927
        %v4171 = vunpack.c.l.b16 %v3928
        %v4172 = vunpack.c.l.b16 %v3929
        %v4173 = vunpack.c.h.b16 %v3929
        %v4174 = vunpack.c.l.b16 %v3930
        %v4175 = vunpack.c.h.b16 %v3930
        %v4176 = vunpack.c.l.b16 %v3931
        %v4177 = vunpack.c.l.b16 %v3932
        %v4178 = vunpack.c.h.b16 %v3932
        %v4179 = vunpack.c.l.b16 %v3933
        %v4180 = vunpack.c.h.b16 %v3933
        %v4181 = vunpack.c.l.b16 %v3934
        %v4182 = vunpack.c.l.b16 %v3935
        %v4183 = vunpack.c.h.b16 %v3935
        %v4184 = vunpack.c.l.b16 %v3936
        %v4185 = vunpack.c.h.b16 %v3936
        %v4186 = vunpack.c.l.b16 %v3937
        %v4187 = vunpack.c.l.b16 %v3938
        %v4188 = vunpack.c.h.b16 %v3938
        %v4189 = vunpack.c.l.b16 %v3939
        %v4190 = vunpack.c.h.b16 %v3939
        %v4191 = vunpack.c.l.b16 %v3940
        %v4192 = vunpack.c.l.b16 %v3941
        %v4193 = vunpack.c.h.b16 %v3941
        %v4194 = vunpack.c.l.b16 %v3942
        %v4195 = vunpack.c.h.b16 %v3942
        %v4196 = vunpack.c.l.b16 %v3943
        %v4197 = vunpack.c.l.b16 %v3944
        %v4198 = vunpack.c.h.b16 %v3944
        %v4199 = vunpack.c.l.b16 %v3945
        %v4200 = vunpack.c.h.b16 %v3945
        %v4201 = vunpack.c.l.b16 %v3946
        %v4202 = vunpack.c.l.b16 %v3947
        %v4203 = vunpack.c.h.b16 %v3947
        %v4204 = vunpack.c.l.b16 %v3948
        %v4205 = vunpack.c.h.b16 %v3948
        %v4206 = vunpack.c.l.b16 %v3949
        %v4207 = vunpack.c.l.b16 %v3950
        %v4208 = vunpack.c.h.b16 %v3950
        %v4209 = vunpack.c.l.b16 %v3951
        %v4210 = vunpack.c.h.b16 %v3951
        %v4211 = vunpack.c.l.b16 %v3952
        %v4212 = vunpack.c.l.b16 %v3953
        %v4213 = vunpack.c.h.b16 %v3953
        %v4214 = vunpack.c.l.b16 %v3954
        %v4215 = vunpack.c.h.b16 %v3954
        %v4216 = vunpack.c.l.b16 %v3955
        %v4217 = vunpack.c.l.b16 %v3956
        %v4218 = vunpack.c.h.b16 %v3956
        %v4219 = vunpack.c.l.b16 %v3957
        %v4220 = vunpack.c.h.b16 %v3957
        %v4221 = vunpack.c.l.b16 %v3958
        %v4222 = vunpack.c.l.b16 %v3959
        %v4223 = vunpack.c.h.b16 %v3959
        %v4224 = vunpack.c.l.b16 %v3960
        %v4225 = vunpack.c.h.b16 %v3960
        %v4226 = vunpack.c.l.b16 %v3961
        %v4227 = vunpack.c.l.b16 %v3962
        %v4228 = vunpack.c.h.b16 %v3962
        %v4229 = vunpack.c.l.b16 %v3963
        %v4230 = vunpack.c.h.b16 %v3963
        %v4231 = vunpack.c.l.b16 %v3964
        %v4232 = vunpack.c.l.b16 %v3965
        %v4233 = vunpack.c.h.b16 %v3965
        %v4234 = vunpack.c.l.b16 %v3966
        %v4235 = vunpack.c.h.b16 %v3966
        %v4236 = vunpack.c.l.b16 %v3967
        %v4237 = vunpack.c.l.b16 %v3968
        %v4238 = vunpack.c.h.b16 %v3968
        %v4239 = vunpack.c.l.b16 %v3969
        %v4240 = vunpack.c.h.b16 %v3969
        %v4241 = vunpack.c.l.b16 %v3970
        %v4242 = vunpack.c.l.b16 %v3971
        %v4243 = vunpack.c.h.b16 %v3971
        %v4244 = vunpack.c.l.b16 %v3972
        %v4245 = vunpack.c.h.b16 %v3972
        %v4246 = vunpack.c.l.b16 %v3973
        %v4247 = vunpack.c.l.b16 %v3974
        %v4248 = vunpack.c.h.b16 %v3974
        %v4249 = vunpack.c.l.b16 %v3975
        %v4250 = vunpack.c.h.b16 %v3975
        %v4251 = vunpack.c.l.b16 %v3976
        %v4252 = vunpack.c.l.b16 %v3977
        %v4253 = vunpack.c.h.b16 %v3977
        %v4254 = vunpack.c.l.b16 %v3978
        %v4255 = vunpack.c.h.b16 %v3978
        %v4256 = vunpack.c.l.b16 %v3979
        %v4257 = vunpack.c.l.b16 %v3980
        %v4258 = vunpack.c.h.b16 %v3980
        %v4259 = vunpack.c.l.b16 %v3981
        %v4260 = vunpack.c.h.b16 %v3981
        %v4261 = vunpack.c.l.b16 %v3982
        %v4262 = vunpack.c.l.b16 %v3983
        %v4263 = vunpack.c.h.b16 %v3983
        %v4264 = vunpack.c.l.b16 %v3984
        %v4265 = vunpack.c.h.b16 %v3984
        %v4266 = vunpack.c.l.b16 %v3985
        %v4267 = vunpack.c.l.b16 %v3986
        %v4268 = vunpack.c.h.b16 %v3986
        %v4269 = vunpack.c.l.b16 %v3987
        %v4270 = vunpack.c.h.b16 %v3987
        %v4271 = vunpack.c.l.b16 %v3988
        %v4272 = vunpack.c.l.b16 %v3989
        %v4273 = vunpack.c.h.b16 %v3989
        %v4274 = vunpack.c.l.b16 %v3990
        %v4275 = vunpack.c.h.b16 %v3990
        %v4276 = vunpack.c.l.b16 %v3991
        %v4277 = vunpack.c.l.b16 %v3992
        %v4278 = vunpack.c.h.b16 %v3992
        %v4279 = vunpack.c.l.b16 %v3993
        %v4280 = vunpack.c.h.b16 %v3993
        %v4281 = vunpack.c.l.b16 %v3994
        %v4282 = vunpack.c.l.b16 %v3995
        %v4283 = vunpack.c.h.b16 %v3995
        %v4284 = vunpack.c.l.b16 %v3996
        %v4285 = vunpack.c.h.b16 %v3996
        %v4286 = vunpack.c.l.b16 %v3997
        %v4287 = vunpack.c.l.b16 %v3998
        %v4288 = vunpack.c.h.b16 %v3998
        %v4289 = vunpack.c.l.b16 %v3999
        %v4290 = vunpack.c.h.b16 %v3999
        %v4291 = vunpack.c.l.b16 %v4000
        %v4292 = vunpack.c.l.b16 %v4001
        %v4293 = vunpack.c.h.b16 %v4001
        %v4294 = vunpack.c.l.b16 %v4002
        %v4295 = vunpack.c.h.b16 %v4002
        %v4296 = vunpack.c.l.b16 %v4003
        %v4297 = vunpack.c.l.b16 %v4004
        %v4298 = vunpack.c.h.b16 %v4004
        %v4299 = vunpack.c.l.b16 %v4005
        %v4300 = vunpack.c.h.b16 %v4005
        %v4301 = vunpack.c.l.b16 %v4006
        %v4302 = vunpack.c.l.b16 %v4007
        %v4303 = vunpack.c.h.b16 %v4007
        %v4304 = vunpack.c.l.b16 %v4008
        %v4305 = vunpack.c.h.b16 %v4008
        %v4306 = vunpack.c.l.b16 %v4009
        %v4307 = vunpack.c.l.b16 %v4010
        %v4308 = vunpack.c.h.b16 %v4010
        %v4309 = vunpack.c.l.b16 %v4011
        %v4310 = vunpack.c.h.b16 %v4011
        %v4311 = vunpack.c.l.b16 %v4012
        %v4312 = vunpack.c.l.b16 %v4013
        %v4313 = vunpack.c.h.b16 %v4013
        %v4314 = vunpack.c.l.b16 %v4014
        %v4315 = vunpack.c.h.b16 %v4014
        %v4316 = vunpack.c.l.b16 %v4015
        %v4317 = vunpack.c.l.b16 %v4016
        %v4318 = vunpack.c.h.b16 %v4016
        %v4319 = vunpack.c.l.b16 %v4017
        %v4320 = vunpack.c.h.b16 %v4017
        %v4321 = vunpack.c.l.b16 %v4018
        %v4322 = vunpack.c.l.b16 %v4019
        %v4323 = vunpack.c.h.b16 %v4019
        %v4324 = vunpack.c.l.b16 %v4020
        %v4325 = vunpack.c.h.b16 %v4020
        %v4326 = vunpack.c.l.b16 %v4021
        %v4327 = vunpack.c.l.b16 %v4022
        %v4328 = vunpack.c.h.b16 %v4022
        %v4329 = vunpack.c.l.b16 %v4023
        %v4330 = vunpack.c.h.b16 %v4023
        %v4331 = vunpack.c.l.b16 %v4024
        %v4332 = vpack.c.b16 %v4157, %v4152
        %v4333 = vpack.c.b16 %v4158, %v4153
        %v4334 = vpack.c.b16 %v4159, %v4154
        %v4335 = vpack.c.b16 %v4160, %v4155
        %v4336 = vpack.c.b16 %v4161, %v4156
        %v4337 = vpack.c.b16 %v4167, %v4162
        %v4338 = vpack.c.b16 %v4168, %v4163
        %v4339 = vpack.c.b16 %v4169, %v4164
        %v4340 = vpack.c.b16 %v4170, %v4165
        %v4341 = vpack.c.b16 %v4171, %v4166
        %v4342 = vpack.c.b16 %v4177, %v4172
        %v4343 = vpack.c.b16 %v4178, %v4173
        %v4344 = vpack.c.b16 %v4179, %v4174
        %v4345 = vpack.c.b16 %v4180, %v4175
        %v4346 = vpack.c.b16 %v4181, %v4176
        %v4347 = vpack.c.b16 %v4187, %v4182
        %v4348 = vpack.c.b16 %v4188, %v4183
        %v4349 = vpack.c.b16 %v4189, %v4184
        %v4350 = vpack.c.b16 %v4190, %v4185
        %v4351 = vpack.c.b16 %v4191, %v4186
        %v4352 = vpack.c.b16 %v4197, %v4192
        %v4353 = vpack.c.b16 %v4198, %v4193
        %v4354 = vpack.c.b16 %v4199, %v4194
        %v4355 = vpack.c.b16 %v4200, %v4195
        %v4356 = vpack.c.b16 %v4201, %v4196
        %v4357 = vpack.c.b16 %v4207, %v4202
        %v4358 = vpack.c.b16 %v4208, %v4203
        %v4359 = vpack.c.b16 %v4209, %v4204
        %v4360 = vpack.c.b16 %v4210, %v4205
        %v4361 = vpack.c.b16 %v4211, %v4206
        %v4362 = vpack.c.b16 %v4217, %v4212
        %v4363 = vpack.c.b16 %v4218, %v4213
        %v4364 = vpack.c.b16 %v4219, %v4214
        %v4365 = vpack.c.b16 %v4220, %v4215
        %v4366 = vpack.c.b16 %v4221, %v4216
        %v4367 = vpack.c.b16 %v4227, %v4222
        %v4368 = vpack.c.b16 %v4228, %v4223
        %v4369 = vpack.c.b16 %v4229, %v4224
        %v4370 = vpack.c.b16 %v4230, %v4225
        %v4371 = vpack.c.b16 %v4231, %v4226
        %v4372 = vpack.c.b16 %v4237, %v4232
        %v4373 = vpack.c.b16 %v4238, %v4233
        %v4374 = vpack.c.b16 %v4239, %v4234
        %v4375 = vpack.c.b16 %v4240, %v4235
        %v4376 = vpack.c.b16 %v4241, %v4236
        %v4377 = vpack.c.b16 %v4247, %v4242
        %v4378 = vpack.c.b16 %v4248, %v4243
        %v4379 = vpack.c.b16 %v4249, %v4244
        %v4380 = vpack.c.b16 %v4250, %v4245
        %v4381 = vpack.c.b16 %v4251, %v4246
        %v4382 = vpack.c.b16 %v4257, %v4252
        %v4383 = vpack.c.b16 %v4258, %v4253
        %v4384 = vpack.c.b16 %v4259, %v4254
        %v4385 = vpack.c.b16 %v4260, %v4255
        %v4386 = vpack.c.b16 %v4261, %v4256
        %v4387 = vpack.c.b16 %v4267, %v4262
        %v4388 = vpack.c.b16 %v4268, %v4263
        %v4389 = vpack.c.b16 %v4269, %v4264
        %v4390 = vpack.c.b16 %v4270, %v4265
        %v4391 = vpack.c.b16 %v4271, %v4266
        %v4392 = vpack.c.b16 %v4277, %v4272
        %v4393 = vpack.c.b16 %v4278, %v4273
        %v4394 = vpack.c.b16 %v4279, %v4274
        %v4395 = vpack.c.b16 %v4280, %v4275
        %v4396 = vpack.c.b16 %v4281, %v4276
        %v4397 = vpack.c.b16 %v4287, %v4282
        %v4398 = vpack.c.b16 %v4288, %v4283
        %v4399 = vpack.c.b16 %v4289, %v4284
        %v4400 = vpack.c.b16 %v4290, %v4285
        %v4401 = vpack.c.b16 %v4291, %v4286
        %v4402 = vpack.c.b16 %v4297, %v4292
        %v4403 = vpack.c.b16 %v4298, %v4293
        %v4404 = vpack.c.b16 %v4299, %v4294
        %v4405 = vpack.c.b16 %v4300, %v4295
        %v4406 = vpack.c.b16 %v4301, %v4296
        %v4407 = vpack.c.b16 %v4307, %v4302
        %v4408 = vpack.c.b16 %v4308, %v4303
        %v4409 = vpack.c.b16 %v4309, %v4304
        %v4410 = vpack.c.b16 %v4310, %v4305
        %v4411 = vpack.c.b16 %v4311, %v4306
        %v4412 = vpack.c.b16 %v4317, %v4312
        %v4413 = vpack.c.b16 %v4318, %v4313
        %v4414 = vpack.c.b16 %v4319, %v4314
        %v4415 = vpack.c.b16 %v4320, %v4315
        %v4416 = vpack.c.b16 %v4321, %v4316
        %v4417 = vpack.c.b16 %v4327, %v4322
        %v4418 = vpack.c.b16 %v4328, %v4323
        %v4419 = vpack.c.b16 %v4329, %v4324
        %v4420 = vpack.c.b16 %v4330, %v4325
        %v4421 = vpack.c.b16 %v4331, %v4326
        %v4513 = vsel %vm859, %v4041, 0
        %4515 = vmatprep.subr.bf16.mxu0 %v4333
        %4516 = vmatpush1.bf16.msra.mxu0 %v4332
        %4517 = vmatprep.subr.bf16.mxu0 %v4338
        %4518 = vmatpush1.bf16.msra.mxu0 %v4337
        %4519 = vmatprep.subr.bf16.mxu0 %v4343
        %4520 = vmatpush1.bf16.msra.mxu0 %v4342
        %4521 = vmatprep.subr.bf16.mxu0 %v4348
        %4522 = vmatpush1.bf16.msra.mxu0 %v4347
        %4523 = vmatprep.subr.bf16.mxu0 %v4353
        %4524 = vmatpush1.bf16.msra.mxu0 %v4352
        %4525 = vmatprep.subr.bf16.mxu0 %v4358
        %4526 = vmatpush1.bf16.msra.mxu0 %v4357
        %4527 = vmatprep.subr.bf16.mxu0 %v4363
        %4528 = vmatpush1.bf16.msra.mxu0 %v4362
        %4529 = vmatprep.subr.bf16.mxu0 %v4368
        %4530 = vmatpush1.bf16.msra.mxu0 %v4367
        %4531 = vmatprep.subr.bf16.mxu0 %v4373
        %4532 = vmatpush1.bf16.msra.mxu0 %v4372
        %4533 = vmatprep.subr.bf16.mxu0 %v4378
        %4534 = vmatpush1.bf16.msra.mxu0 %v4377
        %4535 = vmatprep.subr.bf16.mxu0 %v4383
        %4536 = vmatpush1.bf16.msra.mxu0 %v4382
        %4537 = vmatprep.subr.bf16.mxu0 %v4388
        %4538 = vmatpush1.bf16.msra.mxu0 %v4387
        %4539 = vmatprep.subr.bf16.mxu0 %v4393
        %4540 = vmatpush1.bf16.msra.mxu0 %v4392
        %4541 = vmatprep.subr.bf16.mxu0 %v4398
        %4542 = vmatpush1.bf16.msra.mxu0 %v4397
        %4543 = vmatprep.subr.bf16.mxu0 %v4403
        %4544 = vmatpush1.bf16.msra.mxu0 %v4402
        %4545 = vmatprep.subr.bf16.mxu0 %v4408
        %4546 = vmatpush1.bf16.msra.mxu0 %v4407
        %4547 = vmatprep.mubr.bf16.mxu0 %v4038
        %4548 = vmatmul.mubr.bf16.gmra.mrb[0].mxu0 %v4035
        %v4549 = vpop.f32.mrb[0].mxu0
        %v4550 = vadd.f32 0.0, %v4549
        %v4551 = vpop.f32.mrb[0].mxu0
        %v4552 = vadd.f32 0.0, %v4551
        %v4553 = vpop.f32.mrb[0].mxu0
        %v4554 = vadd.f32 0.0, %v4553
        %v4555 = vpop.f32.mrb[0].mxu0
        %v4556 = vadd.f32 0.0, %v4555
        %4557 = vdwg.mxu0
        %4558 = vmatprep.subr.bf16.mxu0 %v4413
        %4559 = vmatpush1.bf16.msra.mxu0 %v4412
        %4560 = vmatprep.subr.bf16.mxu0 %v4418
        %4561 = vmatpush1.bf16.msra.mxu0 %v4417
        %4562 = vmatprep.subr.bf16.mxu0 0
        %4563 = vmatpush1.bf16.msra.mxu0 0
        %4564 = vmatprep.subr.bf16.mxu0 0
        %4565 = vmatpush1.bf16.msra.mxu0 0
        %4566 = vmatprep.subr.bf16.mxu0 0
        %4567 = vmatpush1.bf16.msra.mxu0 0
        %4568 = vmatprep.subr.bf16.mxu0 0
        %4569 = vmatpush1.bf16.msra.mxu0 0
        %4570 = vmatprep.subr.bf16.mxu0 0
        %4571 = vmatpush1.bf16.msra.mxu0 0
        %4572 = vmatprep.subr.bf16.mxu0 0
        %4573 = vmatpush1.bf16.msra.mxu0 0
        %4574 = vmatprep.subr.bf16.mxu0 0
        %4575 = vmatpush1.bf16.msra.mxu0 0
        %4576 = vmatprep.subr.bf16.mxu0 0
        %4577 = vmatpush1.bf16.msra.mxu0 0
        %4578 = vmatprep.subr.bf16.mxu0 0
        %4579 = vmatpush1.bf16.msra.mxu0 0
        %4580 = vmatprep.subr.bf16.mxu0 0
        %4581 = vmatpush1.bf16.msra.mxu0 0
        %4582 = vmatprep.subr.bf16.mxu0 0
        %4583 = vmatpush1.bf16.msra.mxu0 0
        %4584 = vmatprep.subr.bf16.mxu0 0
        %4585 = vmatpush1.bf16.msra.mxu0 0
        %4586 = vmatprep.subr.bf16.mxu0 0
        %4587 = vmatpush1.bf16.msra.mxu0 0
        %4588 = vmatprep.subr.bf16.mxu0 0
        %4589 = vmatpush1.bf16.msra.mxu0 0
        %4590 = vmatprep.mubr.bf16.mxu0 0
        %4591 = vmatmul.mubr.bf16.gmra.mrb[0].mxu0 %v4513
        %v4592 = vpop.f32.mrb[0].mxu0
        %v4593 = vadd.f32 %v4550, %v4592
        %v4594 = vpop.f32.mrb[0].mxu0
        %v4595 = vadd.f32 %v4552, %v4594
        %v4596 = vpop.f32.mrb[0].mxu0
        %v4597 = vadd.f32 %v4554, %v4596
        %v4598 = vpop.f32.mrb[0].mxu0
        %v4599 = vadd.f32 %v4556, %v4598
        %4600 = vdwg.mxu0
        %4601 = vmatprep.subr.bf16.mxu0 %v4335
        %4602 = vmatpush1.bf16.msra.mxu0 %v4334
        %4603 = vmatprep.subr.bf16.mxu0 %v4340
        %4604 = vmatpush1.bf16.msra.mxu0 %v4339
        %4605 = vmatprep.subr.bf16.mxu0 %v4345
        %4606 = vmatpush1.bf16.msra.mxu0 %v4344
        %4607 = vmatprep.subr.bf16.mxu0 %v4350
        %4608 = vmatpush1.bf16.msra.mxu0 %v4349
        %4609 = vmatprep.subr.bf16.mxu0 %v4355
        %4610 = vmatpush1.bf16.msra.mxu0 %v4354
        %4611 = vmatprep.subr.bf16.mxu0 %v4360
        %4612 = vmatpush1.bf16.msra.mxu0 %v4359
        %4613 = vmatprep.subr.bf16.mxu0 %v4365
        %4614 = vmatpush1.bf16.msra.mxu0 %v4364
        %4615 = vmatprep.subr.bf16.mxu0 %v4370
        %4616 = vmatpush1.bf16.msra.mxu0 %v4369
        %4617 = vmatprep.subr.bf16.mxu0 %v4375
        %4618 = vmatpush1.bf16.msra.mxu0 %v4374
        %4619 = vmatprep.subr.bf16.mxu0 %v4380
        %4620 = vmatpush1.bf16.msra.mxu0 %v4379
        %4621 = vmatprep.subr.bf16.mxu0 %v4385
        %4622 = vmatpush1.bf16.msra.mxu0 %v4384
        %4623 = vmatprep.subr.bf16.mxu0 %v4390
        %4624 = vmatpush1.bf16.msra.mxu0 %v4389
        %4625 = vmatprep.subr.bf16.mxu0 %v4395
        %4626 = vmatpush1.bf16.msra.mxu0 %v4394
        %4627 = vmatprep.subr.bf16.mxu0 %v4400
        %4628 = vmatpush1.bf16.msra.mxu0 %v4399
        %4629 = vmatprep.subr.bf16.mxu0 %v4405
        %4630 = vmatpush1.bf16.msra.mxu0 %v4404
        %4631 = vmatprep.subr.bf16.mxu0 %v4410
        %4632 = vmatpush1.bf16.msra.mxu0 %v4409
        %4633 = vmatprep.mubr.bf16.mxu0 %v4038
        %4634 = vmatmul.mubr.bf16.gmra.mrb[0].mxu0 %v4035
        %v4635 = vpop.f32.mrb[0].mxu0
        %v4636 = vadd.f32 0.0, %v4635
        %v4637 = vpop.f32.mrb[0].mxu0
        %v4638 = vadd.f32 0.0, %v4637
        %v4639 = vpop.f32.mrb[0].mxu0
        %v4640 = vadd.f32 0.0, %v4639
        %v4641 = vpop.f32.mrb[0].mxu0
        %v4642 = vadd.f32 0.0, %v4641
        %4643 = vdwg.mxu0
        %4644 = vmatprep.subr.bf16.mxu0 %v4415
        %4645 = vmatpush1.bf16.msra.mxu0 %v4414
        %4646 = vmatprep.subr.bf16.mxu0 %v4420
        %4647 = vmatpush1.bf16.msra.mxu0 %v4419
        %4648 = vmatprep.subr.bf16.mxu0 0
        %4649 = vmatpush1.bf16.msra.mxu0 0
        %4650 = vmatprep.subr.bf16.mxu0 0
        %4651 = vmatpush1.bf16.msra.mxu0 0
        %4652 = vmatprep.subr.bf16.mxu0 0
        %4653 = vmatpush1.bf16.msra.mxu0 0
        %4654 = vmatprep.subr.bf16.mxu0 0
        %4655 = vmatpush1.bf16.msra.mxu0 0
        %4656 = vmatprep.subr.bf16.mxu0 0
        %4657 = vmatpush1.bf16.msra.mxu0 0
        %4658 = vmatprep.subr.bf16.mxu0 0
        %4659 = vmatpush1.bf16.msra.mxu0 0
        %4660 = vmatprep.subr.bf16.mxu0 0
        %4661 = vmatpush1.bf16.msra.mxu0 0
        %4662 = vmatprep.subr.bf16.mxu0 0
        %4663 = vmatpush1.bf16.msra.mxu0 0
        %4664 = vmatprep.subr.bf16.mxu0 0
        %4665 = vmatpush1.bf16.msra.mxu0 0
        %4666 = vmatprep.subr.bf16.mxu0 0
        %4667 = vmatpush1.bf16.msra.mxu0 0
        %4668 = vmatprep.subr.bf16.mxu0 0
        %4669 = vmatpush1.bf16.msra.mxu0 0
        %4670 = vmatprep.subr.bf16.mxu0 0
        %4671 = vmatpush1.bf16.msra.mxu0 0
        %4672 = vmatprep.subr.bf16.mxu0 0
        %4673 = vmatpush1.bf16.msra.mxu0 0
        %4674 = vmatprep.subr.bf16.mxu0 0
        %4675 = vmatpush1.bf16.msra.mxu0 0
        %4676 = vmatprep.mubr.bf16.mxu0 0
        %4677 = vmatmul.mubr.bf16.gmra.mrb[0].mxu0 %v4513
        %v4678 = vpop.f32.mrb[0].mxu0
        %v4679 = vadd.f32 %v4636, %v4678
        %v4680 = vpop.f32.mrb[0].mxu0
        %v4681 = vadd.f32 %v4638, %v4680
        %v4682 = vpop.f32.mrb[0].mxu0
        %v4683 = vadd.f32 %v4640, %v4682
        %v4684 = vpop.f32.mrb[0].mxu0
        %v4685 = vadd.f32 %v4642, %v4684
        %4686 = vdwg.mxu0
        %4687 = vmatprep.subr.bf16.mxu0 0
        %4688 = vmatpush1.bf16.msra.mxu0 %v4336
        %4689 = vmatprep.subr.bf16.mxu0 0
        %4690 = vmatpush1.bf16.msra.mxu0 %v4341
        %4691 = vmatprep.subr.bf16.mxu0 0
        %4692 = vmatpush1.bf16.msra.mxu0 %v4346
        %4693 = vmatprep.subr.bf16.mxu0 0
        %4694 = vmatpush1.bf16.msra.mxu0 %v4351
        %4695 = vmatprep.subr.bf16.mxu0 0
        %4696 = vmatpush1.bf16.msra.mxu0 %v4356
        %4697 = vmatprep.subr.bf16.mxu0 0
        %4698 = vmatpush1.bf16.msra.mxu0 %v4361
        %4699 = vmatprep.subr.bf16.mxu0 0
        %4700 = vmatpush1.bf16.msra.mxu0 %v4366
        %4701 = vmatprep.subr.bf16.mxu0 0
        %4702 = vmatpush1.bf16.msra.mxu0 %v4371
        %4703 = vmatprep.subr.bf16.mxu0 0
        %4704 = vmatpush1.bf16.msra.mxu0 %v4376
        %4705 = vmatprep.subr.bf16.mxu0 0
        %4706 = vmatpush1.bf16.msra.mxu0 %v4381
        %4707 = vmatprep.subr.bf16.mxu0 0
        %4708 = vmatpush1.bf16.msra.mxu0 %v4386
        %4709 = vmatprep.subr.bf16.mxu0 0
        %4710 = vmatpush1.bf16.msra.mxu0 %v4391
        %4711 = vmatprep.subr.bf16.mxu0 0
        %4712 = vmatpush1.bf16.msra.mxu0 %v4396
        %4713 = vmatprep.subr.bf16.mxu0 0
        %4714 = vmatpush1.bf16.msra.mxu0 %v4401
        %4715 = vmatprep.subr.bf16.mxu0 0
        %4716 = vmatpush1.bf16.msra.mxu0 %v4406
        %4717 = vmatprep.subr.bf16.mxu0 0
        %4718 = vmatpush1.bf16.msra.mxu0 %v4411
        %4719 = vmatprep.mubr.bf16.mxu0 %v4038
        %4720 = vmatmul.mubr.bf16.gmra.mrb[0].mxu0 %v4035
        %v4721 = vpop.f32.mrb[0].mxu0
        %v4722 = vadd.f32 0.0, %v4721
        %v4723 = vpop.f32.mrb[0].mxu0
        %v4724 = vpop.f32.mrb[0].mxu0
        %v4725 = vadd.f32 0.0, %v4724
        %v4726 = vpop.f32.mrb[0].mxu0
        %4727 = vdwg.mxu0
        %4728 = vmatprep.subr.bf16.mxu0 0
        %4729 = vmatpush1.bf16.msra.mxu0 %v4416
        %4730 = vmatprep.subr.bf16.mxu0 0
        %4731 = vmatpush1.bf16.msra.mxu0 %v4421
        %4732 = vmatprep.subr.bf16.mxu0 0
        %4733 = vmatpush1.bf16.msra.mxu0 0
        %4734 = vmatprep.subr.bf16.mxu0 0
        %4735 = vmatpush1.bf16.msra.mxu0 0
        %4736 = vmatprep.subr.bf16.mxu0 0
        %4737 = vmatpush1.bf16.msra.mxu0 0
        %4738 = vmatprep.subr.bf16.mxu0 0
        %4739 = vmatpush1.bf16.msra.mxu0 0
        %4740 = vmatprep.subr.bf16.mxu0 0
        %4741 = vmatpush1.bf16.msra.mxu0 0
        %4742 = vmatprep.subr.bf16.mxu0 0
        %4743 = vmatpush1.bf16.msra.mxu0 0
        %4744 = vmatprep.subr.bf16.mxu0 0
        %4745 = vmatpush1.bf16.msra.mxu0 0
        %4746 = vmatprep.subr.bf16.mxu0 0
        %4747 = vmatpush1.bf16.msra.mxu0 0
        %4748 = vmatprep.subr.bf16.mxu0 0
        %4749 = vmatpush1.bf16.msra.mxu0 0
        %4750 = vmatprep.subr.bf16.mxu0 0
        %4751 = vmatpush1.bf16.msra.mxu0 0
        %4752 = vmatprep.subr.bf16.mxu0 0
        %4753 = vmatpush1.bf16.msra.mxu0 0
        %4754 = vmatprep.subr.bf16.mxu0 0
        %4755 = vmatpush1.bf16.msra.mxu0 0
        %4756 = vmatprep.subr.bf16.mxu0 0
        %4757 = vmatpush1.bf16.msra.mxu0 0
        %4758 = vmatprep.subr.bf16.mxu0 0
        %4759 = vmatpush1.bf16.msra.mxu0 0
        %4760 = vmatprep.mubr.bf16.mxu0 0
        %4761 = vmatmul.mubr.bf16.gmra.mrb[0].mxu0 %v4513
        %v4762 = vpop.f32.mrb[0].mxu0
        %v4763 = vadd.f32 %v4722, %v4762
        %v4764 = vpop.f32.mrb[0].mxu0
        %v4765 = vpop.f32.mrb[0].mxu0
        %v4766 = vadd.f32 %v4725, %v4765
        %v4767 = vpop.f32.mrb[0].mxu0
        %4768 = vdwg.mxu0
        %v4769 = vadd.f32 %v3738, %v4593
        %v4770 = vadd.f32 %v3740, %v4595
        %v4771 = vadd.f32 %v3824, %v4679
        %v4772 = vadd.f32 %v3826, %v4681
        %v4773 = vadd.f32 %v3908, %v4763
        %v4774 = vadd.f32 %v3742, %v4597
        %v4775 = vadd.f32 %v3744, %v4599
        %v4776 = vadd.f32 %v3828, %v4683
        %v4777 = vadd.f32 %v3830, %v4685
        %v4778 = vadd.f32 %v3911, %v4766
        %v4779 = vld [vmem:[#allocation9] sm:$0x1f]
        %v4781 = vlaneseq
        %v4782 = vshrl.u32 %v4781, 7
        %v4783 = vsub.s32 0, %v4782
        %v4784 = vrot.slane %v4779, %v4783
        %v4785 = vlaneseq
        %v4786 = vshrl.u32 %v4785, 7
        %v4787 = vsub.s32 1, %v4786
        %v4788 = vrot.slane %v4779, %v4787
        %v4789 = vlaneseq
        %v4790 = vshrl.u32 %v4789, 7
        %v4791 = vsub.s32 2, %v4790
        %v4792 = vrot.slane %v4779, %v4791
        %v4793 = vlaneseq
        %v4794 = vshrl.u32 %v4793, 7
        %v4795 = vsub.s32 3, %v4794
        %v4796 = vrot.slane %v4779, %v4795
        %v4797 = vlaneseq
        %v4798 = vshrl.u32 %v4797, 7
        %v4799 = vsub.s32 4, %v4798
        %v4800 = vrot.slane %v4779, %v4799
        %v4806 = vadd.f32 %v4769, %v4784
        %v4807 = vadd.f32 %v4770, %v4788
        %v4808 = vadd.f32 %v4771, %v4792
        %v4809 = vadd.f32 %v4772, %v4796
        %v4810 = vadd.f32 %v4773, %v4800
        %v4811 = vadd.f32 %v4774, %v4784
        %v4812 = vadd.f32 %v4775, %v4788
        %v4813 = vadd.f32 %v4776, %v4792
        %v4814 = vadd.f32 %v4777, %v4796
        %v4815 = vadd.f32 %v4778, %v4800
        %v4816 = vmax.f32 %v4808, 0.0
        %v4817 = vmax.f32 %v4809, 0.0
        %v4818 = vmax.f32 %v4810, 0.0
        %v4819 = vmax.f32 %v4813, 0.0
        %v4820 = vmax.f32 %v4814, 0.0
        %v4821 = vmax.f32 %v4815, 0.0
        %4822 = vst [vmem:[%s353] sm:$0xff] %v4806
        %4823 = vst [vmem:[%s353 + $0x8] sm:$0xff] %v4807
        %4824 = vst [vmem:[%s353 + $0x10] sm:$0xff] %v4811
        %4825 = vst [vmem:[%s353 + $0x18] sm:$0xff] %v4812
        %v4826 = vpack.c.bf16 %v4819, %v4816
        %v4827 = vpack.c.bf16 %v4820, %v4817
        %v4828 = vpack.c.bf16 %v4821, %v4818
        %v4832 = vunpack.c.l.b16 %v4826
        %v4833 = vunpack.c.l.b16 %v4827
        %v4834 = vunpack.c.l.b16 %v4828
        %v4835 = vunpack.c.h.b16 %v4826
        %v4836 = vunpack.c.h.b16 %v4827
        %v4837 = vunpack.c.h.b16 %v4828
        %v4838 = vpack.c.b16 %v4833, %v4832
        %v4839 = vpack.c.b16 %v4834, %v4834
        %v4840 = vpack.c.b16 %v4836, %v4835
        %v4841 = vpack.c.b16 %v4837, %v4837
        %v4843 = vshrl.u32 %v4838, 16
        %v4845 = vrot.slane %v4843, 7
        %v4846 = vshll.u32 %v4838, 16
        %v4848 = vor.u32 %v4845, %v4846
        %v4850 = vshrl.u32 %v4839, 16
        %v4852 = vrot.slane %v4850, 7
        %v4853 = vshll.u32 %v4839, 16
        %v4855 = vor.u32 %v4852, %v4853
        %v4856 = vrot.slane %v4845, 4
        %v4858 = vshrl.u32 %v4840, 16
        %v4860 = vrot.slane %v4858, 7
        %v4861 = vshll.u32 %v4840, 16
        %v4863 = vor.u32 %v4860, %v4861
        %v4864 = vsel %vm2118, %v4856, %v4863
        %v4865 = vrot.slane %v4852, 4
        %v4867 = vshrl.u32 %v4841, 16
        %v4869 = vrot.slane %v4867, 7
        %v4870 = vshll.u32 %v4841, 16
        %v4872 = vor.u32 %v4869, %v4870
        %v4873 = vsel %vm2118, %v4865, %v4872
        %v4874 = vrot.slane %v4860, 4
        %v4875 = vrot.slane %v4869, 4
        %v4882 = vld [vmem:[#allocation2] sm:$0xff]
        %v4883 = vsel %vm2163, %v4848, %v4882
        %4884 = vst [vmem:[#allocation2] sm:$0xff] %v4883
        %v4885 = vld [vmem:[#allocation2 + $0x8] sm:$0xf]
        %v4886 = vsel %vm2168, %v4855, %v4885
        %4887 = vst [vmem:[#allocation2 + $0x8] sm:$0xf] %v4886
        %4888 = vst [vmem:[#allocation2 + $0xc] sm:$0xff] %v4864
        %4889 = vst.msk [vmem:[#allocation2 + $0x14] sm:$0xf] %vm2173, %v4873
        %v4890 = vld [vmem:[#allocation2 + $0x18] sm:$0x11]
        %v4891 = vsel %vm2080, %v4874, %v4890
        %4892 = vst [vmem:[#allocation2 + $0x18] sm:$0x11] %v4891
        %v4893 = vld [vmem:[#allocation2 + $0x20] sm:$0x1]
        %v4894 = vsel %vm2085, %v4875, %v4893
        %4895 = vst [vmem:[#allocation2 + $0x20] sm:$0x1] %v4894
        %v4896 = vld [vmem:[#allocation2] sm:$0xff]
        %v4897 = vld [vmem:[#allocation2 + $0x8] sm:$0xf]
        %v4898 = vld [vmem:[#allocation2 + $0xc] sm:$0xff]
        %v4899 = vld [vmem:[#allocation2 + $0x14] sm:$0xf]
        %v4900 = vld [vmem:[#allocation11] sm:$0xff]
        %v4901 = vld [vmem:[#allocation11 + $0x8] sm:$0xff]
        %v4902 = vld [vmem:[#allocation11 + $0x10] sm:$0xff]
        %v4903 = vld [vmem:[#allocation11 + $0x18] sm:$0xff]
        %v4904 = vld [vmem:[#allocation11 + $0x20] sm:$0xff]
        %v4905 = vld [vmem:[#allocation11 + $0x28] sm:$0xff]
        %v4906 = vld [vmem:[#allocation11 + $0x30] sm:$0xff]
        %v4907 = vld [vmem:[#allocation11 + $0x38] sm:$0xff]
        %v4908 = vld [vmem:[#allocation11 + $0x40] sm:$0xff]
        %v4909 = vld [vmem:[#allocation11 + $0x48] sm:$0xff]
        %v4910 = vld [vmem:[#allocation11 + $0x50] sm:$0xff]
        %v4911 = vld [vmem:[#allocation11 + $0x58] sm:$0xff]
        %v4912 = vld [vmem:[#allocation11 + $0x60] sm:$0xff]
        %v4913 = vld [vmem:[#allocation11 + $0x68] sm:$0xff]
        %v4914 = vld [vmem:[#allocation11 + $0x70] sm:$0xff]
        %v4915 = vld [vmem:[#allocation11 + $0x78] sm:$0xff]
        %v4916 = vld [vmem:[#allocation11 + $0x80] sm:$0xff]
        %v4917 = vld [vmem:[#allocation11 + $0x88] sm:$0xff]
        %v4918 = vld [vmem:[#allocation11 + $0x90] sm:$0xff]
        %v4919 = vld [vmem:[#allocation11 + $0x98] sm:$0xff]
        %v4920 = vld [vmem:[#allocation11 + $0xa0] sm:$0xff]
        %v4921 = vld [vmem:[#allocation11 + $0xa8] sm:$0xff]
        %v4922 = vld [vmem:[#allocation11 + $0xb0] sm:$0xff]
        %v4923 = vld [vmem:[#allocation11 + $0xb8] sm:$0xff]
        %v4924 = vld [vmem:[#allocation11 + $0xc0] sm:$0xff]
        %v4925 = vld [vmem:[#allocation11 + $0xc8] sm:$0xff]
        %v4926 = vld [vmem:[#allocation11 + $0xd0] sm:$0xff]
        %v4927 = vld [vmem:[#allocation11 + $0xd8] sm:$0xff]
        %v4928 = vld [vmem:[#allocation11 + $0xe0] sm:$0xff]
        %v4929 = vld [vmem:[#allocation11 + $0xe8] sm:$0xff]
        %v4930 = vld [vmem:[#allocation11 + $0xf0] sm:$0xff]
        %v4931 = vld [vmem:[#allocation11 + $0xf8] sm:$0xff]
        %v4932 = vld [vmem:[#allocation11 + $0x100] sm:$0xff]
        %v4933 = vld [vmem:[#allocation11 + $0x108] sm:$0xff]
        %v4934 = vld [vmem:[#allocation11 + $0x110] sm:$0xff]
        %v4935 = vld [vmem:[#allocation11 + $0x118] sm:$0xff]
        %v4936 = vld [vmem:[#allocation2 + $0x18] sm:$0x11]
        %v4937 = vld [vmem:[#allocation2 + $0x20] sm:$0x1]
        %s4938 = scalar_lea.vmem [#allocation11], 288
        %v4939 = vld [vmem:[%s4938] sm:$0xff]
        %v4940 = vld [vmem:[%s4938 + $0x8] sm:$0xff]
        %v4941 = vld [vmem:[%s4938 + $0x10] sm:$0xff]
        %v4942 = vld [vmem:[%s4938 + $0x18] sm:$0xff]
        %v4943 = vld [vmem:[%s4938 + $0x20] sm:$0xff]
        %v4944 = vld [vmem:[%s4938 + $0x28] sm:$0xff]
        %v4945 = vld [vmem:[%s4938 + $0x30] sm:$0xff]
        %v4946 = vld [vmem:[%s4938 + $0x38] sm:$0xff]
        %v4947 = vld [vmem:[%s4938 + $0x40] sm:$0xff]
        %v4948 = vld [vmem:[%s4938 + $0x48] sm:$0xff]
        %v4949 = vld [vmem:[%s4938 + $0x50] sm:$0xff]
        %v4950 = vld [vmem:[%s4938 + $0x58] sm:$0xff]
        %v4951 = vld [vmem:[%s4938 + $0x60] sm:$0xff]
        %v4952 = vld [vmem:[%s4938 + $0x68] sm:$0xff]
        %v4953 = vld [vmem:[%s4938 + $0x70] sm:$0xff]
        %v4954 = vld [vmem:[%s4938 + $0x78] sm:$0xff]
        %v4955 = vld [vmem:[%s4938 + $0x80] sm:$0xff]
        %v4956 = vld [vmem:[%s4938 + $0x88] sm:$0xff]
        %v4957 = vld [vmem:[%s4938 + $0x90] sm:$0xff]
        %v4958 = vld [vmem:[%s4938 + $0x98] sm:$0xff]
        %v4959 = vld [vmem:[%s4938 + $0xa0] sm:$0xff]
        %v4960 = vld [vmem:[%s4938 + $0xa8] sm:$0xff]
        %v4961 = vld [vmem:[%s4938 + $0xb0] sm:$0xff]
        %v4962 = vld [vmem:[%s4938 + $0xb8] sm:$0xff]
        %v4963 = vld [vmem:[%s4938 + $0xc0] sm:$0xff]
        %v4964 = vld [vmem:[%s4938 + $0xc8] sm:$0xff]
        %v4965 = vld [vmem:[%s4938 + $0xd0] sm:$0xff]
        %v4966 = vld [vmem:[%s4938 + $0xd8] sm:$0xff]
        %v4967 = vld [vmem:[%s4938 + $0xe0] sm:$0xff]
        %v4968 = vld [vmem:[%s4938 + $0xe8] sm:$0xff]
        %v4969 = vld [vmem:[%s4938 + $0xf0] sm:$0xff]
        %v4970 = vld [vmem:[%s4938 + $0xf8] sm:$0xff]
        %v4971 = vld [vmem:[%s4938 + $0x100] sm:$0xff]
        %v4972 = vld [vmem:[%s4938 + $0x108] sm:$0xff]
        %v4973 = vld [vmem:[%s4938 + $0x110] sm:$0xff]
        %v4974 = vld [vmem:[%s4938 + $0x118] sm:$0xff]
        %v4981 = vunpack.c.l.b16 %v4896
        %v4982 = vunpack.c.h.b16 %v4896
        %v4983 = vunpack.c.l.b16 %v4897
        %v4984 = vunpack.c.l.b16 %v4898
        %v4985 = vunpack.c.h.b16 %v4898
        %v4986 = vunpack.c.l.b16 %v4899
        %v4987 = vunpack.c.l.b16 %v4936
        %v4988 = vunpack.c.h.b16 %v4936
        %v4989 = vunpack.c.l.b16 %v4937
        %v4990 = vpack.c.b16 %v4984, %v4981
        %v4991 = vpack.c.b16 %v4985, %v4982
        %v4992 = vpack.c.b16 %v4986, %v4983
        %v4993 = vpack.c.b16 %v4987, %v4987
        %v4994 = vpack.c.b16 %v4988, %v4988
        %v4995 = vpack.c.b16 %v4989, %v4989
        %v4997 = vshrl.u32 %v4990, 16
        %v4999 = vshll.u32 %v4990, 16
        %v5001 = vrot.slane %v4999, 1
        %v5002 = vor.u32 %v4997, %v5001
        %v5004 = vshll.u32 %v4993, 16
        %v5006 = vrot.slane %v5004, 1
        %v5007 = vsel %vm532, %v5002, %v5006
        %v5009 = vshrl.u32 %v4991, 16
        %v5011 = vshll.u32 %v4991, 16
        %v5013 = vrot.slane %v5011, 1
        %v5014 = vor.u32 %v5009, %v5013
        %v5016 = vshll.u32 %v4994, 16
        %v5018 = vrot.slane %v5016, 1
        %v5019 = vsel %vm532, %v5014, %v5018
        %v5021 = vshrl.u32 %v4992, 16
        %v5023 = vshll.u32 %v4992, 16
        %v5025 = vrot.slane %v5023, 1
        %v5026 = vor.u32 %v5021, %v5025
        %v5028 = vshll.u32 %v4995, 16
        %v5030 = vrot.slane %v5028, 1
        %v5031 = vsel %vm532, %v5026, %v5030
        %v5070 = vunpack.c.l.b16 %v4939
        %v5071 = vunpack.c.h.b16 %v4939
        %v5072 = vunpack.c.l.b16 %v4940
        %v5073 = vunpack.c.h.b16 %v4940
        %v5074 = vunpack.c.l.b16 %v4941
        %v5075 = vunpack.c.h.b16 %v4941
        %v5076 = vunpack.c.l.b16 %v4942
        %v5077 = vunpack.c.h.b16 %v4942
        %v5078 = vunpack.c.l.b16 %v4943
        %v5079 = vunpack.c.h.b16 %v4943
        %v5080 = vunpack.c.l.b16 %v4944
        %v5081 = vunpack.c.h.b16 %v4944
        %v5082 = vunpack.c.l.b16 %v4945
        %v5083 = vunpack.c.h.b16 %v4945
        %v5084 = vunpack.c.l.b16 %v4946
        %v5085 = vunpack.c.h.b16 %v4946
        %v5086 = vunpack.c.l.b16 %v4947
        %v5087 = vunpack.c.h.b16 %v4947
        %v5088 = vunpack.c.l.b16 %v4948
        %v5089 = vunpack.c.h.b16 %v4948
        %v5090 = vunpack.c.l.b16 %v4949
        %v5091 = vunpack.c.h.b16 %v4949
        %v5092 = vunpack.c.l.b16 %v4950
        %v5093 = vunpack.c.h.b16 %v4950
        %v5094 = vunpack.c.l.b16 %v4951
        %v5095 = vunpack.c.h.b16 %v4951
        %v5096 = vunpack.c.l.b16 %v4952
        %v5097 = vunpack.c.h.b16 %v4952
        %v5098 = vunpack.c.l.b16 %v4953
        %v5099 = vunpack.c.h.b16 %v4953
        %v5100 = vunpack.c.l.b16 %v4954
        %v5101 = vunpack.c.h.b16 %v4954
        %v5102 = vunpack.c.l.b16 %v4955
        %v5103 = vunpack.c.h.b16 %v4955
        %v5104 = vunpack.c.l.b16 %v4956
        %v5105 = vunpack.c.h.b16 %v4956
        %v5106 = vunpack.c.l.b16 %v4957
        %v5107 = vunpack.c.h.b16 %v4957
        %v5108 = vunpack.c.l.b16 %v4958
        %v5109 = vunpack.c.h.b16 %v4958
        %v5110 = vunpack.c.l.b16 %v4959
        %v5111 = vunpack.c.h.b16 %v4959
        %v5112 = vunpack.c.l.b16 %v4960
        %v5113 = vunpack.c.h.b16 %v4960
        %v5114 = vunpack.c.l.b16 %v4961
        %v5115 = vunpack.c.h.b16 %v4961
        %v5116 = vunpack.c.l.b16 %v4962
        %v5117 = vunpack.c.h.b16 %v4962
        %v5118 = vunpack.c.l.b16 %v4963
        %v5119 = vunpack.c.h.b16 %v4963
        %v5120 = vunpack.c.l.b16 %v4964
        %v5121 = vunpack.c.h.b16 %v4964
        %v5122 = vunpack.c.l.b16 %v4965
        %v5123 = vunpack.c.h.b16 %v4965
        %v5124 = vunpack.c.l.b16 %v4966
        %v5125 = vunpack.c.h.b16 %v4966
        %v5126 = vunpack.c.l.b16 %v4967
        %v5127 = vunpack.c.h.b16 %v4967
        %v5128 = vunpack.c.l.b16 %v4968
        %v5129 = vunpack.c.h.b16 %v4968
        %v5130 = vunpack.c.l.b16 %v4969
        %v5131 = vunpack.c.h.b16 %v4969
        %v5132 = vunpack.c.l.b16 %v4970
        %v5133 = vunpack.c.h.b16 %v4970
        %v5134 = vunpack.c.l.b16 %v4971
        %v5135 = vunpack.c.h.b16 %v4971
        %v5136 = vunpack.c.l.b16 %v4972
        %v5137 = vunpack.c.h.b16 %v4972
        %v5138 = vunpack.c.l.b16 %v4973
        %v5139 = vunpack.c.h.b16 %v4973
        %v5140 = vunpack.c.l.b16 %v4974
        %v5141 = vunpack.c.h.b16 %v4974
        %v5142 = vpack.c.b16 %v5072, %v5070
        %v5143 = vpack.c.b16 %v5073, %v5071
        %v5144 = vpack.c.b16 %v5076, %v5074
        %v5145 = vpack.c.b16 %v5077, %v5075
        %v5146 = vpack.c.b16 %v5080, %v5078
        %v5147 = vpack.c.b16 %v5081, %v5079
        %v5148 = vpack.c.b16 %v5084, %v5082
        %v5149 = vpack.c.b16 %v5085, %v5083
        %v5150 = vpack.c.b16 %v5088, %v5086
        %v5151 = vpack.c.b16 %v5089, %v5087
        %v5152 = vpack.c.b16 %v5092, %v5090
        %v5153 = vpack.c.b16 %v5093, %v5091
        %v5154 = vpack.c.b16 %v5096, %v5094
        %v5155 = vpack.c.b16 %v5097, %v5095
        %v5156 = vpack.c.b16 %v5100, %v5098
        %v5157 = vpack.c.b16 %v5101, %v5099
        %v5158 = vpack.c.b16 %v5104, %v5102
        %v5159 = vpack.c.b16 %v5105, %v5103
        %v5160 = vpack.c.b16 %v5108, %v5106
        %v5161 = vpack.c.b16 %v5109, %v5107
        %v5162 = vpack.c.b16 %v5112, %v5110
        %v5163 = vpack.c.b16 %v5113, %v5111
        %v5164 = vpack.c.b16 %v5116, %v5114
        %v5165 = vpack.c.b16 %v5117, %v5115
        %v5166 = vpack.c.b16 %v5120, %v5118
        %v5167 = vpack.c.b16 %v5121, %v5119
        %v5168 = vpack.c.b16 %v5124, %v5122
        %v5169 = vpack.c.b16 %v5125, %v5123
        %v5170 = vpack.c.b16 %v5128, %v5126
        %v5171 = vpack.c.b16 %v5129, %v5127
        %v5172 = vpack.c.b16 %v5132, %v5130
        %v5173 = vpack.c.b16 %v5133, %v5131
        %v5174 = vpack.c.b16 %v5136, %v5134
        %v5175 = vpack.c.b16 %v5137, %v5135
        %v5176 = vpack.c.b16 %v5140, %v5138
        %v5177 = vpack.c.b16 %v5141, %v5139
        %v5215 = vsel %vm859, %v5031, 0
        %5217 = vmatprep.subr.bf16.mxu0 %v5143
        %5218 = vmatpush1.bf16.msra.mxu0 %v5142
        %5219 = vmatprep.subr.bf16.mxu0 %v5145
        %5220 = vmatpush1.bf16.msra.mxu0 %v5144
        %5221 = vmatprep.subr.bf16.mxu0 %v5147
        %5222 = vmatpush1.bf16.msra.mxu0 %v5146
        %5223 = vmatprep.subr.bf16.mxu0 %v5149
        %5224 = vmatpush1.bf16.msra.mxu0 %v5148
        %5225 = vmatprep.subr.bf16.mxu0 %v5151
        %5226 = vmatpush1.bf16.msra.mxu0 %v5150
        %5227 = vmatprep.subr.bf16.mxu0 %v5153
        %5228 = vmatpush1.bf16.msra.mxu0 %v5152
        %5229 = vmatprep.subr.bf16.mxu0 %v5155
        %5230 = vmatpush1.bf16.msra.mxu0 %v5154
        %5231 = vmatprep.subr.bf16.mxu0 %v5157
        %5232 = vmatpush1.bf16.msra.mxu0 %v5156
        %5233 = vmatprep.subr.bf16.mxu0 %v5159
        %5234 = vmatpush1.bf16.msra.mxu0 %v5158
        %5235 = vmatprep.subr.bf16.mxu0 %v5161
        %5236 = vmatpush1.bf16.msra.mxu0 %v5160
        %5237 = vmatprep.subr.bf16.mxu0 %v5163
        %5238 = vmatpush1.bf16.msra.mxu0 %v5162
        %5239 = vmatprep.subr.bf16.mxu0 %v5165
        %5240 = vmatpush1.bf16.msra.mxu0 %v5164
        %5241 = vmatprep.subr.bf16.mxu0 %v5167
        %5242 = vmatpush1.bf16.msra.mxu0 %v5166
        %5243 = vmatprep.subr.bf16.mxu0 %v5169
        %5244 = vmatpush1.bf16.msra.mxu0 %v5168
        %5245 = vmatprep.subr.bf16.mxu0 %v5171
        %5246 = vmatpush1.bf16.msra.mxu0 %v5170
        %5247 = vmatprep.subr.bf16.mxu0 %v5173
        %5248 = vmatpush1.bf16.msra.mxu0 %v5172
        %5249 = vmatprep.mubr.bf16.mxu0 %v5019
        %5250 = vmatmul.mubr.bf16.gmra.mrb[0].mxu0 %v5007
        %v5251 = vpop.f32.mrb[0].mxu0
        %v5252 = vadd.f32 0.0, %v5251
        %v5253 = vpop.f32.mrb[0].mxu0
        %v5254 = vadd.f32 0.0, %v5253
        %v5255 = vpop.f32.mrb[0].mxu0
        %v5256 = vadd.f32 0.0, %v5255
        %v5257 = vpop.f32.mrb[0].mxu0
        %v5258 = vadd.f32 0.0, %v5257
        %5259 = vdwg.mxu0
        %5260 = vmatprep.subr.bf16.mxu0 %v5175
        %5261 = vmatpush1.bf16.msra.mxu0 %v5174
        %5262 = vmatprep.subr.bf16.mxu0 %v5177
        %5263 = vmatpush1.bf16.msra.mxu0 %v5176
        %5264 = vmatprep.subr.bf16.mxu0 0
        %5265 = vmatpush1.bf16.msra.mxu0 0
        %5266 = vmatprep.subr.bf16.mxu0 0
        %5267 = vmatpush1.bf16.msra.mxu0 0
        %5268 = vmatprep.subr.bf16.mxu0 0
        %5269 = vmatpush1.bf16.msra.mxu0 0
        %5270 = vmatprep.subr.bf16.mxu0 0
        %5271 = vmatpush1.bf16.msra.mxu0 0
        %5272 = vmatprep.subr.bf16.mxu0 0
        %5273 = vmatpush1.bf16.msra.mxu0 0
        %5274 = vmatprep.subr.bf16.mxu0 0
        %5275 = vmatpush1.bf16.msra.mxu0 0
        %5276 = vmatprep.subr.bf16.mxu0 0
        %5277 = vmatpush1.bf16.msra.mxu0 0
        %5278 = vmatprep.subr.bf16.mxu0 0
        %5279 = vmatpush1.bf16.msra.mxu0 0
        %5280 = vmatprep.subr.bf16.mxu0 0
        %5281 = vmatpush1.bf16.msra.mxu0 0
        %5282 = vmatprep.subr.bf16.mxu0 0
        %5283 = vmatpush1.bf16.msra.mxu0 0
        %5284 = vmatprep.subr.bf16.mxu0 0
        %5285 = vmatpush1.bf16.msra.mxu0 0
        %5286 = vmatprep.subr.bf16.mxu0 0
        %5287 = vmatpush1.bf16.msra.mxu0 0
        %5288 = vmatprep.subr.bf16.mxu0 0
        %5289 = vmatpush1.bf16.msra.mxu0 0
        %5290 = vmatprep.subr.bf16.mxu0 0
        %5291 = vmatpush1.bf16.msra.mxu0 0
        %5292 = vmatprep.mubr.bf16.mxu0 0
        %5293 = vmatmul.mubr.bf16.gmra.mrb[0].mxu0 %v5215
        %v5294 = vpop.f32.mrb[0].mxu0
        %v5295 = vadd.f32 %v5252, %v5294
        %v5296 = vpop.f32.mrb[0].mxu0
        %v5297 = vadd.f32 %v5254, %v5296
        %v5298 = vpop.f32.mrb[0].mxu0
        %v5299 = vadd.f32 %v5256, %v5298
        %v5300 = vpop.f32.mrb[0].mxu0
        %v5301 = vadd.f32 %v5258, %v5300
        %5302 = vdwg.mxu0
        %v5341 = vunpack.c.l.b16 %v4900
        %v5342 = vunpack.c.h.b16 %v4900
        %v5343 = vunpack.c.l.b16 %v4901
        %v5344 = vunpack.c.h.b16 %v4901
        %v5345 = vunpack.c.l.b16 %v4902
        %v5346 = vunpack.c.h.b16 %v4902
        %v5347 = vunpack.c.l.b16 %v4903
        %v5348 = vunpack.c.h.b16 %v4903
        %v5349 = vunpack.c.l.b16 %v4904
        %v5350 = vunpack.c.h.b16 %v4904
        %v5351 = vunpack.c.l.b16 %v4905
        %v5352 = vunpack.c.h.b16 %v4905
        %v5353 = vunpack.c.l.b16 %v4906
        %v5354 = vunpack.c.h.b16 %v4906
        %v5355 = vunpack.c.l.b16 %v4907
        %v5356 = vunpack.c.h.b16 %v4907
        %v5357 = vunpack.c.l.b16 %v4908
        %v5358 = vunpack.c.h.b16 %v4908
        %v5359 = vunpack.c.l.b16 %v4909
        %v5360 = vunpack.c.h.b16 %v4909
        %v5361 = vunpack.c.l.b16 %v4910
        %v5362 = vunpack.c.h.b16 %v4910
        %v5363 = vunpack.c.l.b16 %v4911
        %v5364 = vunpack.c.h.b16 %v4911
        %v5365 = vunpack.c.l.b16 %v4912
        %v5366 = vunpack.c.h.b16 %v4912
        %v5367 = vunpack.c.l.b16 %v4913
        %v5368 = vunpack.c.h.b16 %v4913
        %v5369 = vunpack.c.l.b16 %v4914
        %v5370 = vunpack.c.h.b16 %v4914
        %v5371 = vunpack.c.l.b16 %v4915
        %v5372 = vunpack.c.h.b16 %v4915
        %v5373 = vunpack.c.l.b16 %v4916
        %v5374 = vunpack.c.h.b16 %v4916
        %v5375 = vunpack.c.l.b16 %v4917
        %v5376 = vunpack.c.h.b16 %v4917
        %v5377 = vunpack.c.l.b16 %v4918
        %v5378 = vunpack.c.h.b16 %v4918
        %v5379 = vunpack.c.l.b16 %v4919
        %v5380 = vunpack.c.h.b16 %v4919
        %v5381 = vunpack.c.l.b16 %v4920
        %v5382 = vunpack.c.h.b16 %v4920
        %v5383 = vunpack.c.l.b16 %v4921
        %v5384 = vunpack.c.h.b16 %v4921
        %v5385 = vunpack.c.l.b16 %v4922
        %v5386 = vunpack.c.h.b16 %v4922
        %v5387 = vunpack.c.l.b16 %v4923
        %v5388 = vunpack.c.h.b16 %v4923
        %v5389 = vunpack.c.l.b16 %v4924
        %v5390 = vunpack.c.h.b16 %v4924
        %v5391 = vunpack.c.l.b16 %v4925
        %v5392 = vunpack.c.h.b16 %v4925
        %v5393 = vunpack.c.l.b16 %v4926
        %v5394 = vunpack.c.h.b16 %v4926
        %v5395 = vunpack.c.l.b16 %v4927
        %v5396 = vunpack.c.h.b16 %v4927
        %v5397 = vunpack.c.l.b16 %v4928
        %v5398 = vunpack.c.h.b16 %v4928
        %v5399 = vunpack.c.l.b16 %v4929
        %v5400 = vunpack.c.h.b16 %v4929
        %v5401 = vunpack.c.l.b16 %v4930
        %v5402 = vunpack.c.h.b16 %v4930
        %v5403 = vunpack.c.l.b16 %v4931
        %v5404 = vunpack.c.h.b16 %v4931
        %v5405 = vunpack.c.l.b16 %v4932
        %v5406 = vunpack.c.h.b16 %v4932
        %v5407 = vunpack.c.l.b16 %v4933
        %v5408 = vunpack.c.h.b16 %v4933
        %v5409 = vunpack.c.l.b16 %v4934
        %v5410 = vunpack.c.h.b16 %v4934
        %v5411 = vunpack.c.l.b16 %v4935
        %v5412 = vunpack.c.h.b16 %v4935
        %v5413 = vpack.c.b16 %v5343, %v5341
        %v5414 = vpack.c.b16 %v5344, %v5342
        %v5415 = vpack.c.b16 %v5347, %v5345
        %v5416 = vpack.c.b16 %v5348, %v5346
        %v5417 = vpack.c.b16 %v5351, %v5349
        %v5418 = vpack.c.b16 %v5352, %v5350
        %v5419 = vpack.c.b16 %v5355, %v5353
        %v5420 = vpack.c.b16 %v5356, %v5354
        %v5421 = vpack.c.b16 %v5359, %v5357
        %v5422 = vpack.c.b16 %v5360, %v5358
        %v5423 = vpack.c.b16 %v5363, %v5361
        %v5424 = vpack.c.b16 %v5364, %v5362
        %v5425 = vpack.c.b16 %v5367, %v5365
        %v5426 = vpack.c.b16 %v5368, %v5366
        %v5427 = vpack.c.b16 %v5371, %v5369
        %v5428 = vpack.c.b16 %v5372, %v5370
        %v5429 = vpack.c.b16 %v5375, %v5373
        %v5430 = vpack.c.b16 %v5376, %v5374
        %v5431 = vpack.c.b16 %v5379, %v5377
        %v5432 = vpack.c.b16 %v5380, %v5378
        %v5433 = vpack.c.b16 %v5383, %v5381
        %v5434 = vpack.c.b16 %v5384, %v5382
        %v5435 = vpack.c.b16 %v5387, %v5385
        %v5436 = vpack.c.b16 %v5388, %v5386
        %v5437 = vpack.c.b16 %v5391, %v5389
        %v5438 = vpack.c.b16 %v5392, %v5390
        %v5439 = vpack.c.b16 %v5395, %v5393
        %v5440 = vpack.c.b16 %v5396, %v5394
        %v5441 = vpack.c.b16 %v5399, %v5397
        %v5442 = vpack.c.b16 %v5400, %v5398
        %v5443 = vpack.c.b16 %v5403, %v5401
        %v5444 = vpack.c.b16 %v5404, %v5402
        %v5445 = vpack.c.b16 %v5407, %v5405
        %v5446 = vpack.c.b16 %v5408, %v5406
        %v5447 = vpack.c.b16 %v5411, %v5409
        %v5448 = vpack.c.b16 %v5412, %v5410
        %v5485 = vsel %vm859, %v4992, 0
        %5487 = vmatprep.subr.bf16.mxu0 %v5414
        %5488 = vmatpush1.bf16.msra.mxu0 %v5413
        %5489 = vmatprep.subr.bf16.mxu0 %v5416
        %5490 = vmatpush1.bf16.msra.mxu0 %v5415
        %5491 = vmatprep.subr.bf16.mxu0 %v5418
        %5492 = vmatpush1.bf16.msra.mxu0 %v5417
        %5493 = vmatprep.subr.bf16.mxu0 %v5420
        %5494 = vmatpush1.bf16.msra.mxu0 %v5419
        %5495 = vmatprep.subr.bf16.mxu0 %v5422
        %5496 = vmatpush1.bf16.msra.mxu0 %v5421
        %5497 = vmatprep.subr.bf16.mxu0 %v5424
        %5498 = vmatpush1.bf16.msra.mxu0 %v5423
        %5499 = vmatprep.subr.bf16.mxu0 %v5426
        %5500 = vmatpush1.bf16.msra.mxu0 %v5425
        %5501 = vmatprep.subr.bf16.mxu0 %v5428
        %5502 = vmatpush1.bf16.msra.mxu0 %v5427
        %5503 = vmatprep.subr.bf16.mxu0 %v5430
        %5504 = vmatpush1.bf16.msra.mxu0 %v5429
        %5505 = vmatprep.subr.bf16.mxu0 %v5432
        %5506 = vmatpush1.bf16.msra.mxu0 %v5431
        %5507 = vmatprep.subr.bf16.mxu0 %v5434
        %5508 = vmatpush1.bf16.msra.mxu0 %v5433
        %5509 = vmatprep.subr.bf16.mxu0 %v5436
        %5510 = vmatpush1.bf16.msra.mxu0 %v5435
        %5511 = vmatprep.subr.bf16.mxu0 %v5438
        %5512 = vmatpush1.bf16.msra.mxu0 %v5437
        %5513 = vmatprep.subr.bf16.mxu0 %v5440
        %5514 = vmatpush1.bf16.msra.mxu0 %v5439
        %5515 = vmatprep.subr.bf16.mxu0 %v5442
        %5516 = vmatpush1.bf16.msra.mxu0 %v5441
        %5517 = vmatprep.subr.bf16.mxu0 %v5444
        %5518 = vmatpush1.bf16.msra.mxu0 %v5443
        %5519 = vmatprep.mubr.bf16.mxu0 %v4991
        %5520 = vmatmul.mubr.bf16.gmra.mrb[0].mxu0 %v4990
        %v5521 = vpop.f32.mrb[0].mxu0
        %v5522 = vadd.f32 %v5295, %v5521
        %v5523 = vpop.f32.mrb[0].mxu0
        %v5524 = vadd.f32 %v5297, %v5523
        %v5525 = vpop.f32.mrb[0].mxu0
        %v5526 = vadd.f32 %v5299, %v5525
        %v5527 = vpop.f32.mrb[0].mxu0
        %v5528 = vadd.f32 %v5301, %v5527
        %5529 = vdwg.mxu0
        %5530 = vmatprep.subr.bf16.mxu0 %v5446
        %5531 = vmatpush1.bf16.msra.mxu0 %v5445
        %5532 = vmatprep.subr.bf16.mxu0 %v5448
        %5533 = vmatpush1.bf16.msra.mxu0 %v5447
        %5534 = vmatprep.subr.bf16.mxu0 0
        %5535 = vmatpush1.bf16.msra.mxu0 0
        %5536 = vmatprep.subr.bf16.mxu0 0
        %5537 = vmatpush1.bf16.msra.mxu0 0
        %5538 = vmatprep.subr.bf16.mxu0 0
        %5539 = vmatpush1.bf16.msra.mxu0 0
        %5540 = vmatprep.subr.bf16.mxu0 0
        %5541 = vmatpush1.bf16.msra.mxu0 0
        %5542 = vmatprep.subr.bf16.mxu0 0
        %5543 = vmatpush1.bf16.msra.mxu0 0
        %5544 = vmatprep.subr.bf16.mxu0 0
        %5545 = vmatpush1.bf16.msra.mxu0 0
        %5546 = vmatprep.subr.bf16.mxu0 0
        %5547 = vmatpush1.bf16.msra.mxu0 0
        %5548 = vmatprep.subr.bf16.mxu0 0
        %5549 = vmatpush1.bf16.msra.mxu0 0
        %5550 = vmatprep.subr.bf16.mxu0 0
        %5551 = vmatpush1.bf16.msra.mxu0 0
        %5552 = vmatprep.subr.bf16.mxu0 0
        %5553 = vmatpush1.bf16.msra.mxu0 0
        %5554 = vmatprep.subr.bf16.mxu0 0
        %5555 = vmatpush1.bf16.msra.mxu0 0
        %5556 = vmatprep.subr.bf16.mxu0 0
        %5557 = vmatpush1.bf16.msra.mxu0 0
        %5558 = vmatprep.subr.bf16.mxu0 0
        %5559 = vmatpush1.bf16.msra.mxu0 0
        %5560 = vmatprep.subr.bf16.mxu0 0
        %5561 = vmatpush1.bf16.msra.mxu0 0
        %5562 = vmatprep.mubr.bf16.mxu0 0
        %5563 = vmatmul.mubr.bf16.gmra.mrb[0].mxu0 %v5485
        %v5564 = vpop.f32.mrb[0].mxu0
        %v5565 = vadd.f32 %v5522, %v5564
        %v5566 = vpop.f32.mrb[0].mxu0
        %v5567 = vadd.f32 %v5524, %v5566
        %v5568 = vpop.f32.mrb[0].mxu0
        %v5569 = vadd.f32 %v5526, %v5568
        %v5570 = vpop.f32.mrb[0].mxu0
        %v5571 = vadd.f32 %v5528, %v5570
        %5572 = vdwg.mxu0
        %v5573 = vld [vmem:[#allocation2] sm:$0xee]
        %v5574 = vld [vmem:[#allocation2 + $0x8] sm:$0xe]
        %s5575 = scalar_lea.vmem [#allocation11], 576
        %v5576 = vld [vmem:[%s5575] sm:$0xff]
        %v5577 = vld [vmem:[%s5575 + $0x8] sm:$0xff]
        %v5578 = vld [vmem:[%s5575 + $0x10] sm:$0xff]
        %v5579 = vld [vmem:[%s5575 + $0x18] sm:$0xff]
        %v5580 = vld [vmem:[%s5575 + $0x20] sm:$0xff]
        %v5581 = vld [vmem:[%s5575 + $0x28] sm:$0xff]
        %v5582 = vld [vmem:[%s5575 + $0x30] sm:$0xff]
        %v5583 = vld [vmem:[%s5575 + $0x38] sm:$0xff]
        %v5584 = vld [vmem:[%s5575 + $0x40] sm:$0xff]
        %v5585 = vld [vmem:[%s5575 + $0x48] sm:$0xff]
        %v5586 = vld [vmem:[%s5575 + $0x50] sm:$0xff]
        %v5587 = vld [vmem:[%s5575 + $0x58] sm:$0xff]
        %v5588 = vld [vmem:[%s5575 + $0x60] sm:$0xff]
        %v5589 = vld [vmem:[%s5575 + $0x68] sm:$0xff]
        %v5590 = vld [vmem:[%s5575 + $0x70] sm:$0xff]
        %v5591 = vld [vmem:[%s5575 + $0x78] sm:$0xff]
        %v5592 = vld [vmem:[%s5575 + $0x80] sm:$0xff]
        %v5593 = vld [vmem:[%s5575 + $0x88] sm:$0xff]
        %v5594 = vld [vmem:[%s5575 + $0x90] sm:$0xff]
        %v5595 = vld [vmem:[%s5575 + $0x98] sm:$0xff]
        %v5596 = vld [vmem:[%s5575 + $0xa0] sm:$0xff]
        %v5597 = vld [vmem:[%s5575 + $0xa8] sm:$0xff]
        %v5598 = vld [vmem:[%s5575 + $0xb0] sm:$0xff]
        %v5599 = vld [vmem:[%s5575 + $0xb8] sm:$0xff]
        %v5600 = vld [vmem:[%s5575 + $0xc0] sm:$0xff]
        %v5601 = vld [vmem:[%s5575 + $0xc8] sm:$0xff]
        %v5602 = vld [vmem:[%s5575 + $0xd0] sm:$0xff]
        %v5603 = vld [vmem:[%s5575 + $0xd8] sm:$0xff]
        %v5604 = vld [vmem:[%s5575 + $0xe0] sm:$0xff]
        %v5605 = vld [vmem:[%s5575 + $0xe8] sm:$0xff]
        %v5606 = vld [vmem:[%s5575 + $0xf0] sm:$0xff]
        %v5607 = vld [vmem:[%s5575 + $0xf8] sm:$0xff]
        %v5608 = vld [vmem:[%s5575 + $0x100] sm:$0xff]
        %v5609 = vld [vmem:[%s5575 + $0x108] sm:$0xff]
        %v5610 = vld [vmem:[%s5575 + $0x110] sm:$0xff]
        %v5611 = vld [vmem:[%s5575 + $0x118] sm:$0xff]
        %v5614 = vunpack.c.l.b16 %v5573
        %v5615 = vunpack.c.h.b16 %v5573
        %v5616 = vunpack.c.l.b16 %v5574
        %v5617 = vpack.c.b16 %v4984, %v5614
        %v5618 = vpack.c.b16 %v4985, %v5615
        %v5619 = vpack.c.b16 %v4986, %v5616
        %v5620 = vrot.slane %v5617, 1
        %v5621 = vrot.slane %v4993, 1
        %v5622 = vsel %vm1574, %v5620, %v5621
        %v5623 = vrot.slane %v5618, 1
        %v5624 = vrot.slane %v4994, 1
        %v5625 = vsel %vm1574, %v5623, %v5624
        %v5626 = vrot.slane %v5619, 1
        %v5627 = vrot.slane %v4995, 1
        %v5628 = vsel %vm1574, %v5626, %v5627
        %v5667 = vunpack.c.l.b16 %v5576
        %v5668 = vunpack.c.h.b16 %v5576
        %v5669 = vunpack.c.l.b16 %v5577
        %v5670 = vunpack.c.h.b16 %v5577
        %v5671 = vunpack.c.l.b16 %v5578
        %v5672 = vunpack.c.h.b16 %v5578
        %v5673 = vunpack.c.l.b16 %v5579
        %v5674 = vunpack.c.h.b16 %v5579
        %v5675 = vunpack.c.l.b16 %v5580
        %v5676 = vunpack.c.h.b16 %v5580
        %v5677 = vunpack.c.l.b16 %v5581
        %v5678 = vunpack.c.h.b16 %v5581
        %v5679 = vunpack.c.l.b16 %v5582
        %v5680 = vunpack.c.h.b16 %v5582
        %v5681 = vunpack.c.l.b16 %v5583
        %v5682 = vunpack.c.h.b16 %v5583
        %v5683 = vunpack.c.l.b16 %v5584
        %v5684 = vunpack.c.h.b16 %v5584
        %v5685 = vunpack.c.l.b16 %v5585
        %v5686 = vunpack.c.h.b16 %v5585
        %v5687 = vunpack.c.l.b16 %v5586
        %v5688 = vunpack.c.h.b16 %v5586
        %v5689 = vunpack.c.l.b16 %v5587
        %v5690 = vunpack.c.h.b16 %v5587
        %v5691 = vunpack.c.l.b16 %v5588
        %v5692 = vunpack.c.h.b16 %v5588
        %v5693 = vunpack.c.l.b16 %v5589
        %v5694 = vunpack.c.h.b16 %v5589
        %v5695 = vunpack.c.l.b16 %v5590
        %v5696 = vunpack.c.h.b16 %v5590
        %v5697 = vunpack.c.l.b16 %v5591
        %v5698 = vunpack.c.h.b16 %v5591
        %v5699 = vunpack.c.l.b16 %v5592
        %v5700 = vunpack.c.h.b16 %v5592
        %v5701 = vunpack.c.l.b16 %v5593
        %v5702 = vunpack.c.h.b16 %v5593
        %v5703 = vunpack.c.l.b16 %v5594
        %v5704 = vunpack.c.h.b16 %v5594
        %v5705 = vunpack.c.l.b16 %v5595
        %v5706 = vunpack.c.h.b16 %v5595
        %v5707 = vunpack.c.l.b16 %v5596
        %v5708 = vunpack.c.h.b16 %v5596
        %v5709 = vunpack.c.l.b16 %v5597
        %v5710 = vunpack.c.h.b16 %v5597
        %v5711 = vunpack.c.l.b16 %v5598
        %v5712 = vunpack.c.h.b16 %v5598
        %v5713 = vunpack.c.l.b16 %v5599
        %v5714 = vunpack.c.h.b16 %v5599
        %v5715 = vunpack.c.l.b16 %v5600
        %v5716 = vunpack.c.h.b16 %v5600
        %v5717 = vunpack.c.l.b16 %v5601
        %v5718 = vunpack.c.h.b16 %v5601
        %v5719 = vunpack.c.l.b16 %v5602
        %v5720 = vunpack.c.h.b16 %v5602
        %v5721 = vunpack.c.l.b16 %v5603
        %v5722 = vunpack.c.h.b16 %v5603
        %v5723 = vunpack.c.l.b16 %v5604
        %v5724 = vunpack.c.h.b16 %v5604
        %v5725 = vunpack.c.l.b16 %v5605
        %v5726 = vunpack.c.h.b16 %v5605
        %v5727 = vunpack.c.l.b16 %v5606
        %v5728 = vunpack.c.h.b16 %v5606
        %v5729 = vunpack.c.l.b16 %v5607
        %v5730 = vunpack.c.h.b16 %v5607
        %v5731 = vunpack.c.l.b16 %v5608
        %v5732 = vunpack.c.h.b16 %v5608
        %v5733 = vunpack.c.l.b16 %v5609
        %v5734 = vunpack.c.h.b16 %v5609
        %v5735 = vunpack.c.l.b16 %v5610
        %v5736 = vunpack.c.h.b16 %v5610
        %v5737 = vunpack.c.l.b16 %v5611
        %v5738 = vunpack.c.h.b16 %v5611
        %v5739 = vpack.c.b16 %v5669, %v5667
        %v5740 = vpack.c.b16 %v5670, %v5668
        %v5741 = vpack.c.b16 %v5673, %v5671
        %v5742 = vpack.c.b16 %v5674, %v5672
        %v5743 = vpack.c.b16 %v5677, %v5675
        %v5744 = vpack.c.b16 %v5678, %v5676
        %v5745 = vpack.c.b16 %v5681, %v5679
        %v5746 = vpack.c.b16 %v5682, %v5680
        %v5747 = vpack.c.b16 %v5685, %v5683
        %v5748 = vpack.c.b16 %v5686, %v5684
        %v5749 = vpack.c.b16 %v5689, %v5687
        %v5750 = vpack.c.b16 %v5690, %v5688
        %v5751 = vpack.c.b16 %v5693, %v5691
        %v5752 = vpack.c.b16 %v5694, %v5692
        %v5753 = vpack.c.b16 %v5697, %v5695
        %v5754 = vpack.c.b16 %v5698, %v5696
        %v5755 = vpack.c.b16 %v5701, %v5699
        %v5756 = vpack.c.b16 %v5702, %v5700
        %v5757 = vpack.c.b16 %v5705, %v5703
        %v5758 = vpack.c.b16 %v5706, %v5704
        %v5759 = vpack.c.b16 %v5709, %v5707
        %v5760 = vpack.c.b16 %v5710, %v5708
        %v5761 = vpack.c.b16 %v5713, %v5711
        %v5762 = vpack.c.b16 %v5714, %v5712
        %v5763 = vpack.c.b16 %v5717, %v5715
        %v5764 = vpack.c.b16 %v5718, %v5716
        %v5765 = vpack.c.b16 %v5721, %v5719
        %v5766 = vpack.c.b16 %v5722, %v5720
        %v5767 = vpack.c.b16 %v5725, %v5723
        %v5768 = vpack.c.b16 %v5726, %v5724
        %v5769 = vpack.c.b16 %v5729, %v5727
        %v5770 = vpack.c.b16 %v5730, %v5728
        %v5771 = vpack.c.b16 %v5733, %v5731
        %v5772 = vpack.c.b16 %v5734, %v5732
        %v5773 = vpack.c.b16 %v5737, %v5735
        %v5774 = vpack.c.b16 %v5738, %v5736
        %v5812 = vsel %vm859, %v5628, 0
        %5814 = vmatprep.subr.bf16.mxu0 %v5740
        %5815 = vmatpush1.bf16.msra.mxu0 %v5739
        %5816 = vmatprep.subr.bf16.mxu0 %v5742
        %5817 = vmatpush1.bf16.msra.mxu0 %v5741
        %5818 = vmatprep.subr.bf16.mxu0 %v5744
        %5819 = vmatpush1.bf16.msra.mxu0 %v5743
        %5820 = vmatprep.subr.bf16.mxu0 %v5746
        %5821 = vmatpush1.bf16.msra.mxu0 %v5745
        %5822 = vmatprep.subr.bf16.mxu0 %v5748
        %5823 = vmatpush1.bf16.msra.mxu0 %v5747
        %5824 = vmatprep.subr.bf16.mxu0 %v5750
        %5825 = vmatpush1.bf16.msra.mxu0 %v5749
        %5826 = vmatprep.subr.bf16.mxu0 %v5752
        %5827 = vmatpush1.bf16.msra.mxu0 %v5751
        %5828 = vmatprep.subr.bf16.mxu0 %v5754
        %5829 = vmatpush1.bf16.msra.mxu0 %v5753
        %5830 = vmatprep.subr.bf16.mxu0 %v5756
        %5831 = vmatpush1.bf16.msra.mxu0 %v5755
        %5832 = vmatprep.subr.bf16.mxu0 %v5758
        %5833 = vmatpush1.bf16.msra.mxu0 %v5757
        %5834 = vmatprep.subr.bf16.mxu0 %v5760
        %5835 = vmatpush1.bf16.msra.mxu0 %v5759
        %5836 = vmatprep.subr.bf16.mxu0 %v5762
        %5837 = vmatpush1.bf16.msra.mxu0 %v5761
        %5838 = vmatprep.subr.bf16.mxu0 %v5764
        %5839 = vmatpush1.bf16.msra.mxu0 %v5763
        %5840 = vmatprep.subr.bf16.mxu0 %v5766
        %5841 = vmatpush1.bf16.msra.mxu0 %v5765
        %5842 = vmatprep.subr.bf16.mxu0 %v5768
        %5843 = vmatpush1.bf16.msra.mxu0 %v5767
        %5844 = vmatprep.subr.bf16.mxu0 %v5770
        %5845 = vmatpush1.bf16.msra.mxu0 %v5769
        %5846 = vmatprep.mubr.bf16.mxu0 %v5625
        %5847 = vmatmul.mubr.bf16.gmra.mrb[0].mxu0 %v5622
        %v5848 = vpop.f32.mrb[0].mxu0
        %v5849 = vadd.f32 0.0, %v5848
        %v5850 = vpop.f32.mrb[0].mxu0
        %v5851 = vadd.f32 0.0, %v5850
        %v5852 = vpop.f32.mrb[0].mxu0
        %v5853 = vadd.f32 0.0, %v5852
        %v5854 = vpop.f32.mrb[0].mxu0
        %v5855 = vadd.f32 0.0, %v5854
        %5856 = vdwg.mxu0
        %5857 = vmatprep.subr.bf16.mxu0 %v5772
        %5858 = vmatpush1.bf16.msra.mxu0 %v5771
        %5859 = vmatprep.subr.bf16.mxu0 %v5774
        %5860 = vmatpush1.bf16.msra.mxu0 %v5773
        %5861 = vmatprep.subr.bf16.mxu0 0
        %5862 = vmatpush1.bf16.msra.mxu0 0
        %5863 = vmatprep.subr.bf16.mxu0 0
        %5864 = vmatpush1.bf16.msra.mxu0 0
        %5865 = vmatprep.subr.bf16.mxu0 0
        %5866 = vmatpush1.bf16.msra.mxu0 0
        %5867 = vmatprep.subr.bf16.mxu0 0
        %5868 = vmatpush1.bf16.msra.mxu0 0
        %5869 = vmatprep.subr.bf16.mxu0 0
        %5870 = vmatpush1.bf16.msra.mxu0 0
        %5871 = vmatprep.subr.bf16.mxu0 0
        %5872 = vmatpush1.bf16.msra.mxu0 0
        %5873 = vmatprep.subr.bf16.mxu0 0
        %5874 = vmatpush1.bf16.msra.mxu0 0
        %5875 = vmatprep.subr.bf16.mxu0 0
        %5876 = vmatpush1.bf16.msra.mxu0 0
        %5877 = vmatprep.subr.bf16.mxu0 0
        %5878 = vmatpush1.bf16.msra.mxu0 0
        %5879 = vmatprep.subr.bf16.mxu0 0
        %5880 = vmatpush1.bf16.msra.mxu0 0
        %5881 = vmatprep.subr.bf16.mxu0 0
        %5882 = vmatpush1.bf16.msra.mxu0 0
        %5883 = vmatprep.subr.bf16.mxu0 0
        %5884 = vmatpush1.bf16.msra.mxu0 0
        %5885 = vmatprep.subr.bf16.mxu0 0
        %5886 = vmatpush1.bf16.msra.mxu0 0
        %5887 = vmatprep.subr.bf16.mxu0 0
        %5888 = vmatpush1.bf16.msra.mxu0 0
        %5889 = vmatprep.mubr.bf16.mxu0 0
        %5890 = vmatmul.mubr.bf16.gmra.mrb[0].mxu0 %v5812
        %v5891 = vpop.f32.mrb[0].mxu0
        %v5892 = vadd.f32 %v5849, %v5891
        %v5893 = vpop.f32.mrb[0].mxu0
        %v5894 = vadd.f32 %v5851, %v5893
        %v5895 = vpop.f32.mrb[0].mxu0
        %v5896 = vadd.f32 %v5853, %v5895
        %v5897 = vpop.f32.mrb[0].mxu0
        %v5898 = vadd.f32 %v5855, %v5897
        %5899 = vdwg.mxu0
        %v5900 = vadd.f32 %v5565, %v5892
        %v5901 = vadd.f32 %v5567, %v5894
        %v5902 = vadd.f32 %v5569, %v5896
        %v5903 = vadd.f32 %v5571, %v5898
        %v5904 = vld [vmem:[#allocation12] sm:$0x3]
        %v5906 = vlaneseq
        %v5907 = vshrl.u32 %v5906, 7
        %v5908 = vsub.s32 0, %v5907
        %v5909 = vrot.slane %v5904, %v5908
        %v5910 = vlaneseq
        %v5911 = vshrl.u32 %v5910, 7
        %v5912 = vsub.s32 1, %v5911
        %v5913 = vrot.slane %v5904, %v5912
        %v5916 = vadd.f32 %v5900, %v5909
        %v5917 = vadd.f32 %v5901, %v5913
        %v5918 = vadd.f32 %v5902, %v5909
        %v5919 = vadd.f32 %v5903, %v5913
        %v5920 = vld [vmem:[%s353] sm:$0xff]
        %v5921 = vld [vmem:[%s353 + $0x8] sm:$0xff]
        %v5922 = vld [vmem:[%s353 + $0x10] sm:$0xff]
        %v5923 = vld [vmem:[%s353 + $0x18] sm:$0xff]
        %v5924 = vadd.f32 %v5920, %v5916
        %v5925 = vadd.f32 %v5921, %v5917
        %v5926 = vadd.f32 %v5922, %v5918
        %v5927 = vadd.f32 %v5923, %v5919
        %5928 = vst [vmem:[%s353] sm:$0xff] %v5924
        %5929 = vst [vmem:[%s353 + $0x8] sm:$0xff] %v5925
        %5930 = vst [vmem:[%s353 + $0x10] sm:$0xff] %v5926
        %5931 = vst [vmem:[%s353 + $0x18] sm:$0xff] %v5927
        %s5932 = sand.u32 %s185, 1
        %s5933 = scalar_lea.sflag [#allocation5], %s5932
        %s5934 = sand.u32 %s185, 1
        %s5935 = smul.addr %s5934, 32
        %s5936 = scalar_lea.vmem [#allocation14], %s5935
        // Predicated region
        $region73: #{tpu_custom_call.1} parent=47 // pred_check
          %p5937 = pneg %p195
        $region74: #{tpu_custom_call.1} parent=47 // pred_check_branch
          %5939 = sbr.rel (%p5937) target = $region76
        $region75: #{tpu_custom_call.1} parent=47 // pred_region
          %s5941 = ssub.s32 512, 512
          %5942 = vsyncadd %s5933, %s5941
          %s5943 = smul.addr %s25, 4
          %s5944 = smul.addr %s5943, 128
          %s5945 = scalar_lea.hbm %s7, %s5944
          %s5946 = sshll.u32 %s5936, 4
          %s5947 = int_to_ptr.vmem [resolvable:$true] %s5946
          %5952 = dma.vmem_to_hbm [thread:$0]  %s5947, 512, %s5945, %s5933, 256, 256, 16
        $region76: #{tpu_custom_call.1} parent=47 // pred_fallthru
          _
      $region48: #{tpu_custom_call.1} parent=5 // pred_fallthru
        _
      %p5953 = scmp.le.s32.totalorder 2, %s20
      // Predicated region
      $region77: #{tpu_custom_call.1} parent=5 // pred_check
        %p5954 = pneg %p5953
      $region78: #{tpu_custom_call.1} parent=5 // pred_check_branch
        %5956 = sbr.rel (%p5954) target = $region80
      $region79: #{tpu_custom_call.1} parent=5 // pred_region
        %s5957 = ssub.s32 %s20, 2
        // Predicated region
        $region81: #{tpu_custom_call.1} parent=79 // pred_check
          %p5958 = pneg %p201
        $region82: #{tpu_custom_call.1} parent=79 // pred_check_branch
          %5960 = sbr.rel (%p5958) target = $region84
        $region83: #{tpu_custom_call.1} parent=79 // pred_region
          %s5961 = sand.u32 %s186, 1
          %s5962 = scalar_lea.sflag [#allocation5], %s5961
          %s5963 = sand.u32 %s186, 1
          %s5964 = smul.addr %s5963, 32
          %s5965 = scalar_lea.vmem [#allocation14], %s5964
          %5966 = dma.done %s5962, 512
        $region84: #{tpu_custom_call.1} parent=79 // pred_fallthru
          _
      $region80: #{tpu_custom_call.1} parent=5 // pred_fallthru
        _
    $region6: #{tpu_custom_call.1} parent=1 // loop_footer
      %s24 = sadd.s32 1, %s20
    $region7: #{tpu_custom_call.1} parent=1 // loop_footer_branch
      %19 = sbr.rel target = $region3
    $region8: #{tpu_custom_call.1} parent=1 // loop_exit
      _
    %5967 = vsyncpa [#allocation4], 1
    %s5968 = scalar_lea.sflag [#allocation4], 1
    %5969 = vsyncpa %s5968, 1
    %5970 = vsyncpa [#allocation7], 1
    %5971 = vsyncpa [#allocation10], 1
    %5972 = vsyncpa [#allocation13], 1
    %5973 = vsyncpa [#allocation5], 1
    %s5974 = scalar_lea.sflag [#allocation5], 1
    %5975 = vsyncpa %s5974, 1

</llo_original>
